<compile_context>
chip_gen: v6e
topology: v6e:2x2x1
jax: 0.10.0
libtpu: 0.0.40
codegen_flags: <defaults>
</compile_context>

<pallas_src>
import functools

import jax
import jax.numpy as jnp
from jax.experimental import pallas as pl
from jax.experimental.pallas import tpu as pltpu


# --------------------------------------------------------------------------- #
# Feature-map-size helper (2-layer valid conv along time).
# --------------------------------------------------------------------------- #
def compute_feature_map_size_tcnn(padding, sensor_channels, window_length,
                                  filter_size, num_conv_layers=2):
    W = sensor_channels
    H = window_length
    for _ in range(num_conv_layers):
        H = H + 2 * padding - (filter_size - 1)
    return W, H


# --------------------------------------------------------------------------- #
# Fused forward kernel.
#
# Internal layout: activation = f32 (channels, width) with width = T * N * S,
# column index = t*ns + (n*S + s), ns = N*S.  Shifting columns by k*ns is a
# time shift by k, so a K-tap conv is   sum_k  W_k @ shift(x, k*ns).
# Shifts are realized as exact 0/1 matmul operators built from iota (zero fill,
# no wrap-around), keeping every op a plain 2-D jnp.dot / elementwise op.
# --------------------------------------------------------------------------- #
def _fused_tcnn_ae_kernel(x_ref, w1_ref, b1_ref, w2_ref, b2_ref,
                          w3_ref, b3_ref, w4_ref, b4_ref,
                          feat_ref, rec_ref, *, ns):
    f32 = jnp.float32
    K = w1_ref.shape[0]            # filter taps
    cin = w1_ref.shape[2]          # input channels (1)
    width = x_ref.shape[1]         # T * N * S  (full lane width, 256 here)
    l_feat = feat_ref.shape[1]     # valid width of the encoder output
    l_dec = l_feat + (K - 1) * ns  # valid width of the first deconv output

    # Column-shift operators (built in-kernel; exact 0/1 values).
    #   (X @ shift_l[k-1])[:, c] == X[:, c + k*ns]   (shift left,  zero fill)
    #   (X @ shift_r[k-1])[:, c] == X[:, c - k*ns]   (shift right, zero fill)
    row = jax.lax.broadcasted_iota(jnp.int32, (width, width), 0)
    col = jax.lax.broadcasted_iota(jnp.int32, (width, width), 1)
    lane = jax.lax.broadcasted_iota(jnp.int32, (1, width), 1)

    shift_l = [jnp.where(row == col + k * ns, 1.0, 0.0).astype(f32)
               for k in range(1, K)]

    def sh_l(v, k):  # shift columns left by k time steps
        return v if k == 0 else jnp.dot(v, shift_l[k - 1],
                                        preferred_element_type=f32)

    # ---------------- encoder conv 1 (+ReLU) ----------------
    # Cin*K is tiny (5): use VPU broadcast-MAC instead of the MXU.
    x = x_ref[...]                                   # (Cin, width)

    def tap1(k):
        xk = sh_l(x, k)
        wk = w1_ref[k]                               # (F, Cin)
        if cin == 1:
            return wk * xk                           # (F,1)*(1,W) outer product
        return jnp.dot(wk, xk, preferred_element_type=f32)

    acc = tap1(0)
    for k in range(1, K):
        acc = acc + tap1(k)
    h1 = jnp.maximum(acc + b1_ref[...], 0.0)         # valid cols [0, l1)

    # ---------------- encoder conv 2 (+ReLU) ----------------
    acc = jnp.dot(w2_ref[0], h1, preferred_element_type=f32)
    for k in range(1, K):
        acc = acc + jnp.dot(w2_ref[k], sh_l(h1, k), preferred_element_type=f32)
    h2 = jnp.maximum(acc + b2_ref[...], 0.0)         # valid cols [0, l_feat)

    # Lane-dense store of the latent representation (first kernel output).
    feat_ref[...] = h2[:, :l_feat]

    # Transposed convs must see zeros outside the real data window.
    h2z = jnp.where(lane < l_feat, h2, 0.0)

    shift_r = [jnp.where(row + k * ns == col, 1.0, 0.0).astype(f32)
               for k in range(1, K)]

    def sh_r(v, k):  # shift columns right by k time steps
        return v if k == 0 else jnp.dot(v, shift_r[k - 1],
                                        preferred_element_type=f32)

    # ---------------- decoder deconv 1 (+ReLU) ----------------
    # ConvTranspose (stride 1, no padding):  out[t] = sum_k W_k^T @ x[t-k]
    acc = jnp.dot(w3_ref[0], h2z, preferred_element_type=f32)
    for k in range(1, K):
        acc = acc + jnp.dot(w3_ref[k], sh_r(h2z, k), preferred_element_type=f32)
    h3 = jnp.maximum(acc + b3_ref[...], 0.0)         # valid cols [0, l_dec)
    h3z = jnp.where(lane < l_dec, h3, 0.0)

    # ---------------- decoder deconv 2 (no ReLU) ----------------
    acc = jnp.dot(w4_ref[0], h3z, preferred_element_type=f32)
    for k in range(1, K):
        acc = acc + jnp.dot(w4_ref[k], sh_r(h3z, k), preferred_element_type=f32)
    rec_ref[...] = acc + b4_ref[...]                 # (Cin, width), lane-dense


# --------------------------------------------------------------------------- #
# One-time weight packing (hoisted out of the forward path).
#   Conv2d weight  (Cout, Cin, K) -> (K, Cout, Cin)
#   ConvT  weight  (Cin, Cout, K) -> (K, Cout, Cin)   (per-tap transpose)
#   bias (C,) -> (C, 1) so it lane-broadcasts inside the kernel.
# --------------------------------------------------------------------------- #
def prepare_params(params):
    return {
        "w1": jnp.transpose(params["enc_w1"], (2, 0, 1)),
        "b1": params["enc_b1"].reshape(-1, 1),
        "w2": jnp.transpose(params["enc_w2"], (2, 0, 1)),
        "b2": params["enc_b2"].reshape(-1, 1),
        "w3": jnp.transpose(params["dec_w1"], (2, 1, 0)),
        "b3": params["dec_b1"].reshape(-1, 1),
        "w4": jnp.transpose(params["dec_w2"], (2, 1, 0)),
        "b4": params["dec_b2"].reshape(-1, 1),
    }


# --------------------------------------------------------------------------- #
# Full TCNN_Autoencoder forward:  x -> (feat_rep, pred, reconst)
# Single fused pallas_call; only input/output NCHW<->(C, T*N*S) reshapes are
# done at the XLA level.
# --------------------------------------------------------------------------- #
def tcnn_autoencoder_forward(packed, x):
    N, Cin, T, S = x.shape
    K, F, _ = packed["w1"].shape
    ns = N * S
    width = T * ns
    T_feat = T - 2 * (K - 1)
    l_feat = T_feat * ns

    # NCHW -> (Cin, T*N*S), column order (t, n, s): lane-dense kernel input.
    x2d = jnp.transpose(x, (1, 2, 0, 3)).reshape(Cin, width)

    kernel = functools.partial(_fused_tcnn_ae_kernel, ns=ns)
    feat2d, rec2d = pl.pallas_call(
        kernel,
        out_shape=(jax.ShapeDtypeStruct((F, l_feat), jnp.float32),
                   jax.ShapeDtypeStruct((Cin, width), jnp.float32)),
        in_specs=[pl.BlockSpec(memory_space=pltpu.MemorySpace.VMEM)] * 9,
        out_specs=(pl.BlockSpec(memory_space=pltpu.MemorySpace.VMEM),
                   pl.BlockSpec(memory_space=pltpu.MemorySpace.VMEM)),
    )(x2d, packed["w1"], packed["b1"], packed["w2"], packed["b2"],
      packed["w3"], packed["b3"], packed["w4"], packed["b4"])

    # Back to PyTorch NCHW semantics.
    feat_rep = feat2d.reshape(F, T_feat, N, S).transpose(2, 0, 1, 3)
    reconst = rec2d.reshape(Cin, T, N, S).transpose(2, 0, 1, 3)
    pred = 0
    return feat_rep, pred, reconst


# --------------------------------------------------------------------------- #
# Parameter init (deterministic synthetic weights, PyTorch layouts).
# --------------------------------------------------------------------------- #
def init_params(key, in_channels, num_filters, filter_size):
    ks = jax.random.split(key, 8)
    s = 0.1
    return {
        # encoder (Conv2d weights: (Cout, Cin, K))
        "enc_w1": jax.random.normal(ks[0], (num_filters, in_channels, filter_size), jnp.float32) * s,
        "enc_b1": jax.random.normal(ks[1], (num_filters,), jnp.float32) * s,
        "enc_w2": jax.random.normal(ks[2], (num_filters, num_filters, filter_size), jnp.float32) * s,
        "enc_b2": jax.random.normal(ks[3], (num_filters,), jnp.float32) * s,
        # decoder (ConvTranspose2d weights: (Cin, Cout, K))
        "dec_w1": jax.random.normal(ks[4], (num_filters, num_filters, filter_size), jnp.float32) * s,
        "dec_b1": jax.random.normal(ks[5], (num_filters,), jnp.float32) * s,
        "dec_w2": jax.random.normal(ks[6], (num_filters, in_channels, filter_size), jnp.float32) * s,
        "dec_b2": jax.random.normal(ks[7], (in_channels,), jnp.float32) * s,
    }


# --------------------------------------------------------------------------- #
# Pure-JAX reference (no Pallas) for correctness checking.
# --------------------------------------------------------------------------- #
def _ref_conv(x, w, b, apply_relu):
    K = w.shape[2]
    T_out = x.shape[2] - K + 1
    out = sum(
        jnp.einsum("oi,nits->nots", w[:, :, k], x[:, :, k:k + T_out, :])
        for k in range(K)
    )
    out = out + b[None, :, None, None]
    return jnp.maximum(out, 0.0) if apply_relu else out


def _ref_convT(x, wt, b, apply_relu):
    K = wt.shape[2]
    w_eq = jnp.flip(jnp.transpose(wt, (1, 0, 2)), axis=2)
    x_pad = jnp.pad(x, ((0, 0), (0, 0), (K - 1, K - 1), (0, 0)))
    return _ref_conv(x_pad, w_eq, b, apply_relu)


def ref_forward(params, x):
    h = _ref_conv(x, params["enc_w1"], params["enc_b1"], True)
    h = _ref_conv(h, params["enc_w2"], params["enc_b2"], True)
    d = _ref_convT(h, params["dec_w1"], params["dec_b1"], True)
    r = _ref_convT(d, params["dec_w2"], params["dec_b2"], False)
    return h, 0, r


# --------------------------------------------------------------------------- #
if __name__ == "__main__":
    # Module hyperparameters (small, consistent with the forward).
    in_channels = 1
    window_length = 16
    sensor_channels = 8
    filter_size = 5
    num_filters = 32
    num_classes = 6  # unused by forward (pred = 0)

    W, H = compute_feature_map_size_tcnn(0, sensor_channels, window_length, filter_size)
    assert (W, H) == (sensor_channels, window_length - 2 * (filter_size - 1))

    key = jax.random.PRNGKey(0)
    pkey, xkey = jax.random.split(key)
    params = init_params(pkey, in_channels, num_filters, filter_size)
    packed = prepare_params(params)   # one-time packing, not on the hot path

    batch = 2
    x = jax.random.normal(xkey, (batch, in_channels, window_length, sensor_channels),
                          jnp.float32)

    fwd = jax.jit(tcnn_autoencoder_forward)
    feat_rep, pred, reconst = jax.block_until_ready(fwd(packed, x))

    # Shape checks (PyTorch NCHW semantics).
    assert feat_rep.shape == (batch, num_filters, H, W), feat_rep.shape
    assert reconst.shape == x.shape, reconst.shape
    assert pred == 0

    # Numerical check against a pure-JAX reference.
    feat_ref_, _, reconst_ref_ = ref_forward(params, x)
    assert jnp.allclose(feat_rep, feat_ref_, atol=1e-4, rtol=1e-4)
    assert jnp.allclose(reconst, reconst_ref_, atol=1e-4, rtol=1e-4)

    print("KERNEL_OK")
</pallas_src>

<mosaic_0001>
module attributes {stable_mosaic.version = 11 : i64} {
  func.func @_fused_tcnn_ae_kernel(%arg0: memref<1x256xf32, #tpu.memory_space<vmem>>, %arg1: memref<5x32x1xf32, #tpu.memory_space<vmem>>, %arg2: memref<32x1xf32, #tpu.memory_space<vmem>>, %arg3: memref<5x32x32xf32, #tpu.memory_space<vmem>>, %arg4: memref<32x1xf32, #tpu.memory_space<vmem>>, %arg5: memref<5x32x32xf32, #tpu.memory_space<vmem>>, %arg6: memref<32x1xf32, #tpu.memory_space<vmem>>, %arg7: memref<5x1x32xf32, #tpu.memory_space<vmem>>, %arg8: memref<1x1xf32, #tpu.memory_space<vmem>>, %arg9: memref<32x128xf32, #tpu.memory_space<vmem>>, %arg10: memref<1x256xf32, #tpu.memory_space<vmem>>) attributes {dimension_semantics = [], scalar_prefetch = 0 : i64, scratch_operands = 0 : i64, tpu.core_type = #tpu.core_type<tc>} {
    %0 = tpu.iota {dimensions = array<i32: 0>} : vector<256x256xi32>
    %1 = tpu.iota {dimensions = array<i32: 1>} : vector<256x256xi32>
    %2 = tpu.iota {dimensions = array<i32: 1>} : vector<1x256xi32>
    %c16_i32 = arith.constant 16 : i32
    %3 = vector.broadcast %c16_i32 : i32 to vector<256x256xi32>
    %4 = arith.addi %1, %3 : vector<256x256xi32>
    %5 = arith.cmpi eq, %0, %4 : vector<256x256xi32>
    %cst = arith.constant 1.000000e+00 : f32
    %cst_0 = arith.constant 0.000000e+00 : f32
    %6 = vector.broadcast %cst : f32 to vector<256x256xf32>
    %7 = vector.broadcast %cst_0 : f32 to vector<256x256xf32>
    %8 = arith.select %5, %6, %7 : vector<256x256xi1>, vector<256x256xf32>
    %c32_i32 = arith.constant 32 : i32
    %9 = vector.broadcast %c32_i32 : i32 to vector<256x256xi32>
    %10 = arith.addi %1, %9 : vector<256x256xi32>
    %11 = arith.cmpi eq, %0, %10 : vector<256x256xi32>
    %cst_1 = arith.constant 1.000000e+00 : f32
    %cst_2 = arith.constant 0.000000e+00 : f32
    %12 = vector.broadcast %cst_1 : f32 to vector<256x256xf32>
    %13 = vector.broadcast %cst_2 : f32 to vector<256x256xf32>
    %14 = arith.select %11, %12, %13 : vector<256x256xi1>, vector<256x256xf32>
    %c48_i32 = arith.constant 48 : i32
    %15 = vector.broadcast %c48_i32 : i32 to vector<256x256xi32>
    %16 = arith.addi %1, %15 : vector<256x256xi32>
    %17 = arith.cmpi eq, %0, %16 : vector<256x256xi32>
    %cst_3 = arith.constant 1.000000e+00 : f32
    %cst_4 = arith.constant 0.000000e+00 : f32
    %18 = vector.broadcast %cst_3 : f32 to vector<256x256xf32>
    %19 = vector.broadcast %cst_4 : f32 to vector<256x256xf32>
    %20 = arith.select %17, %18, %19 : vector<256x256xi1>, vector<256x256xf32>
    %c64_i32 = arith.constant 64 : i32
    %21 = vector.broadcast %c64_i32 : i32 to vector<256x256xi32>
    %22 = arith.addi %1, %21 : vector<256x256xi32>
    %23 = arith.cmpi eq, %0, %22 : vector<256x256xi32>
    %cst_5 = arith.constant 1.000000e+00 : f32
    %cst_6 = arith.constant 0.000000e+00 : f32
    %24 = vector.broadcast %cst_5 : f32 to vector<256x256xf32>
    %25 = vector.broadcast %cst_6 : f32 to vector<256x256xf32>
    %26 = arith.select %23, %24, %25 : vector<256x256xi1>, vector<256x256xf32>
    %c0 = arith.constant 0 : index
    %c0_7 = arith.constant 0 : index
    %27 = vector.load %arg0[%c0, %c0_7] : memref<1x256xf32, #tpu.memory_space<vmem>>, vector<1x256xf32>
    %c0_8 = arith.constant 0 : index
    %c0_9 = arith.constant 0 : index
    %c0_10 = arith.constant 0 : index
    %28 = vector.load %arg1[%c0_8, %c0_9, %c0_10] : memref<5x32x1xf32, #tpu.memory_space<vmem>>, vector<1x32x1xf32>
    %29 = vector.shape_cast %28 : vector<1x32x1xf32> to vector<32x1xf32>
    %30 = vector.broadcast %29 : vector<32x1xf32> to vector<32x256xf32>
    %31 = vector.broadcast %27 : vector<1x256xf32> to vector<32x256xf32>
    %32 = arith.mulf %30, %31 : vector<32x256xf32>
    %cst_11 = arith.constant dense<0.000000e+00> : vector<1x256xf32>
    %33 = tpu.matmul %27, %8, %cst_11 {dimension_numbers = #tpu.dot_dimension_numbers<[1], [0], [0], [1], [0, 0, 1, 1], [], []>} : vector<1x256xf32>, vector<256x256xf32>, vector<1x256xf32> -> vector<1x256xf32>
    %c1 = arith.constant 1 : index
    %c0_12 = arith.constant 0 : index
    %c0_13 = arith.constant 0 : index
    %34 = vector.load %arg1[%c1, %c0_12, %c0_13] : memref<5x32x1xf32, #tpu.memory_space<vmem>>, vector<1x32x1xf32>
    %35 = vector.shape_cast %34 : vector<1x32x1xf32> to vector<32x1xf32>
    %36 = vector.broadcast %35 : vector<32x1xf32> to vector<32x256xf32>
    %37 = vector.broadcast %33 : vector<1x256xf32> to vector<32x256xf32>
    %38 = arith.mulf %36, %37 : vector<32x256xf32>
    %39 = arith.addf %32, %38 : vector<32x256xf32>
    %cst_14 = arith.constant dense<0.000000e+00> : vector<1x256xf32>
    %40 = tpu.matmul %27, %14, %cst_14 {dimension_numbers = #tpu.dot_dimension_numbers<[1], [0], [0], [1], [0, 0, 1, 1], [], []>} : vector<1x256xf32>, vector<256x256xf32>, vector<1x256xf32> -> vector<1x256xf32>
    %c2 = arith.constant 2 : index
    %c0_15 = arith.constant 0 : index
    %c0_16 = arith.constant 0 : index
    %41 = vector.load %arg1[%c2, %c0_15, %c0_16] : memref<5x32x1xf32, #tpu.memory_space<vmem>>, vector<1x32x1xf32>
    %42 = vector.shape_cast %41 : vector<1x32x1xf32> to vector<32x1xf32>
    %43 = vector.broadcast %42 : vector<32x1xf32> to vector<32x256xf32>
    %44 = vector.broadcast %40 : vector<1x256xf32> to vector<32x256xf32>
    %45 = arith.mulf %43, %44 : vector<32x256xf32>
    %46 = arith.addf %39, %45 : vector<32x256xf32>
    %cst_17 = arith.constant dense<0.000000e+00> : vector<1x256xf32>
    %47 = tpu.matmul %27, %20, %cst_17 {dimension_numbers = #tpu.dot_dimension_numbers<[1], [0], [0], [1], [0, 0, 1, 1], [], []>} : vector<1x256xf32>, vector<256x256xf32>, vector<1x256xf32> -> vector<1x256xf32>
    %c3 = arith.constant 3 : index
    %c0_18 = arith.constant 0 : index
    %c0_19 = arith.constant 0 : index
    %48 = vector.load %arg1[%c3, %c0_18, %c0_19] : memref<5x32x1xf32, #tpu.memory_space<vmem>>, vector<1x32x1xf32>
    %49 = vector.shape_cast %48 : vector<1x32x1xf32> to vector<32x1xf32>
    %50 = vector.broadcast %49 : vector<32x1xf32> to vector<32x256xf32>
    %51 = vector.broadcast %47 : vector<1x256xf32> to vector<32x256xf32>
    %52 = arith.mulf %50, %51 : vector<32x256xf32>
    %53 = arith.addf %46, %52 : vector<32x256xf32>
    %cst_20 = arith.constant dense<0.000000e+00> : vector<1x256xf32>
    %54 = tpu.matmul %27, %26, %cst_20 {dimension_numbers = #tpu.dot_dimension_numbers<[1], [0], [0], [1], [0, 0, 1, 1], [], []>} : vector<1x256xf32>, vector<256x256xf32>, vector<1x256xf32> -> vector<1x256xf32>
    %c4 = arith.constant 4 : index
    %c0_21 = arith.constant 0 : index
    %c0_22 = arith.constant 0 : index
    %55 = vector.load %arg1[%c4, %c0_21, %c0_22] : memref<5x32x1xf32, #tpu.memory_space<vmem>>, vector<1x32x1xf32>
    %56 = vector.shape_cast %55 : vector<1x32x1xf32> to vector<32x1xf32>
    %57 = vector.broadcast %56 : vector<32x1xf32> to vector<32x256xf32>
    %58 = vector.broadcast %54 : vector<1x256xf32> to vector<32x256xf32>
    %59 = arith.mulf %57, %58 : vector<32x256xf32>
    %60 = arith.addf %53, %59 : vector<32x256xf32>
    %c0_23 = arith.constant 0 : index
    %c0_24 = arith.constant 0 : index
    %61 = vector.load %arg2[%c0_23, %c0_24] : memref<32x1xf32, #tpu.memory_space<vmem>>, vector<32x1xf32>
    %62 = vector.broadcast %61 : vector<32x1xf32> to vector<32x256xf32>
    %63 = arith.addf %60, %62 : vector<32x256xf32>
    %cst_25 = arith.constant 0.000000e+00 : f32
    %64 = vector.broadcast %cst_25 : f32 to vector<32x256xf32>
    %65 = arith.maximumf %63, %64 : vector<32x256xf32>
    %c0_26 = arith.constant 0 : index
    %c0_27 = arith.constant 0 : index
    %c0_28 = arith.constant 0 : index
    %66 = vector.load %arg3[%c0_26, %c0_27, %c0_28] : memref<5x32x32xf32, #tpu.memory_space<vmem>>, vector<1x32x32xf32>
    %67 = vector.shape_cast %66 : vector<1x32x32xf32> to vector<32x32xf32>
    %cst_29 = arith.constant dense<0.000000e+00> : vector<32x256xf32>
    %68 = tpu.matmul %67, %65, %cst_29 {dimension_numbers = #tpu.dot_dimension_numbers<[1], [0], [0], [1], [0, 0, 1, 1], [], []>} : vector<32x32xf32>, vector<32x256xf32>, vector<32x256xf32> -> vector<32x256xf32>
    %c1_30 = arith.constant 1 : index
    %c0_31 = arith.constant 0 : index
    %c0_32 = arith.constant 0 : index
    %69 = vector.load %arg3[%c1_30, %c0_31, %c0_32] : memref<5x32x32xf32, #tpu.memory_space<vmem>>, vector<1x32x32xf32>
    %70 = vector.shape_cast %69 : vector<1x32x32xf32> to vector<32x32xf32>
    %cst_33 = arith.constant dense<0.000000e+00> : vector<32x256xf32>
    %71 = tpu.matmul %65, %8, %cst_33 {dimension_numbers = #tpu.dot_dimension_numbers<[1], [0], [0], [1], [0, 0, 1, 1], [], []>} : vector<32x256xf32>, vector<256x256xf32>, vector<32x256xf32> -> vector<32x256xf32>
    %cst_34 = arith.constant dense<0.000000e+00> : vector<32x256xf32>
    %72 = tpu.matmul %70, %71, %cst_34 {dimension_numbers = #tpu.dot_dimension_numbers<[1], [0], [0], [1], [0, 0, 1, 1], [], []>} : vector<32x32xf32>, vector<32x256xf32>, vector<32x256xf32> -> vector<32x256xf32>
    %73 = arith.addf %68, %72 : vector<32x256xf32>
    %c2_35 = arith.constant 2 : index
    %c0_36 = arith.constant 0 : index
    %c0_37 = arith.constant 0 : index
    %74 = vector.load %arg3[%c2_35, %c0_36, %c0_37] : memref<5x32x32xf32, #tpu.memory_space<vmem>>, vector<1x32x32xf32>
    %75 = vector.shape_cast %74 : vector<1x32x32xf32> to vector<32x32xf32>
    %cst_38 = arith.constant dense<0.000000e+00> : vector<32x256xf32>
    %76 = tpu.matmul %65, %14, %cst_38 {dimension_numbers = #tpu.dot_dimension_numbers<[1], [0], [0], [1], [0, 0, 1, 1], [], []>} : vector<32x256xf32>, vector<256x256xf32>, vector<32x256xf32> -> vector<32x256xf32>
    %cst_39 = arith.constant dense<0.000000e+00> : vector<32x256xf32>
    %77 = tpu.matmul %75, %76, %cst_39 {dimension_numbers = #tpu.dot_dimension_numbers<[1], [0], [0], [1], [0, 0, 1, 1], [], []>} : vector<32x32xf32>, vector<32x256xf32>, vector<32x256xf32> -> vector<32x256xf32>
    %78 = arith.addf %73, %77 : vector<32x256xf32>
    %c3_40 = arith.constant 3 : index
    %c0_41 = arith.constant 0 : index
    %c0_42 = arith.constant 0 : index
    %79 = vector.load %arg3[%c3_40, %c0_41, %c0_42] : memref<5x32x32xf32, #tpu.memory_space<vmem>>, vector<1x32x32xf32>
    %80 = vector.shape_cast %79 : vector<1x32x32xf32> to vector<32x32xf32>
    %cst_43 = arith.constant dense<0.000000e+00> : vector<32x256xf32>
    %81 = tpu.matmul %65, %20, %cst_43 {dimension_numbers = #tpu.dot_dimension_numbers<[1], [0], [0], [1], [0, 0, 1, 1], [], []>} : vector<32x256xf32>, vector<256x256xf32>, vector<32x256xf32> -> vector<32x256xf32>
    %cst_44 = arith.constant dense<0.000000e+00> : vector<32x256xf32>
    %82 = tpu.matmul %80, %81, %cst_44 {dimension_numbers = #tpu.dot_dimension_numbers<[1], [0], [0], [1], [0, 0, 1, 1], [], []>} : vector<32x32xf32>, vector<32x256xf32>, vector<32x256xf32> -> vector<32x256xf32>
    %83 = arith.addf %78, %82 : vector<32x256xf32>
    %c4_45 = arith.constant 4 : index
    %c0_46 = arith.constant 0 : index
    %c0_47 = arith.constant 0 : index
    %84 = vector.load %arg3[%c4_45, %c0_46, %c0_47] : memref<5x32x32xf32, #tpu.memory_space<vmem>>, vector<1x32x32xf32>
    %85 = vector.shape_cast %84 : vector<1x32x32xf32> to vector<32x32xf32>
    %cst_48 = arith.constant dense<0.000000e+00> : vector<32x256xf32>
    %86 = tpu.matmul %65, %26, %cst_48 {dimension_numbers = #tpu.dot_dimension_numbers<[1], [0], [0], [1], [0, 0, 1, 1], [], []>} : vector<32x256xf32>, vector<256x256xf32>, vector<32x256xf32> -> vector<32x256xf32>
    %cst_49 = arith.constant dense<0.000000e+00> : vector<32x256xf32>
    %87 = tpu.matmul %85, %86, %cst_49 {dimension_numbers = #tpu.dot_dimension_numbers<[1], [0], [0], [1], [0, 0, 1, 1], [], []>} : vector<32x32xf32>, vector<32x256xf32>, vector<32x256xf32> -> vector<32x256xf32>
    %88 = arith.addf %83, %87 : vector<32x256xf32>
    %c0_50 = arith.constant 0 : index
    %c0_51 = arith.constant 0 : index
    %89 = vector.load %arg4[%c0_50, %c0_51] : memref<32x1xf32, #tpu.memory_space<vmem>>, vector<32x1xf32>
    %90 = vector.broadcast %89 : vector<32x1xf32> to vector<32x256xf32>
    %91 = arith.addf %88, %90 : vector<32x256xf32>
    %cst_52 = arith.constant 0.000000e+00 : f32
    %92 = vector.broadcast %cst_52 : f32 to vector<32x256xf32>
    %93 = arith.maximumf %91, %92 : vector<32x256xf32>
    %94 = vector.extract_strided_slice %93 {offsets = [0, 0], sizes = [32, 128], strides = [1, 1]} : vector<32x256xf32> to vector<32x128xf32>
    %c0_53 = arith.constant 0 : index
    %c0_54 = arith.constant 0 : index
    %95 = vector.load %arg9[%c0_53, %c0_54] : memref<32x128xf32, #tpu.memory_space<vmem>>, vector<32x128xf32>
    tpu.vector_store %arg9[%c0_53, %c0_54], %94 {strides = array<i32>} : memref<32x128xf32, #tpu.memory_space<vmem>>, vector<32x128xf32>,
    %c128_i32 = arith.constant 128 : i32
    %96 = vector.broadcast %c128_i32 : i32 to vector<1x256xi32>
    %97 = arith.cmpi slt, %2, %96 : vector<1x256xi32>
    %cst_55 = arith.constant 0.000000e+00 : f32
    %98 = vector.shape_cast %97 : vector<1x256xi1> to vector<1x256xi1>
    %99 = vector.broadcast %98 : vector<1x256xi1> to vector<32x256xi1>
    %100 = vector.broadcast %cst_55 : f32 to vector<32x256xf32>
    %101 = arith.select %99, %93, %100 : vector<32x256xi1>, vector<32x256xf32>
    %c16_i32_56 = arith.constant 16 : i32
    %102 = vector.broadcast %c16_i32_56 : i32 to vector<256x256xi32>
    %103 = arith.addi %0, %102 : vector<256x256xi32>
    %104 = arith.cmpi eq, %103, %1 : vector<256x256xi32>
    %cst_57 = arith.constant 1.000000e+00 : f32
    %cst_58 = arith.constant 0.000000e+00 : f32
    %105 = vector.broadcast %cst_57 : f32 to vector<256x256xf32>
    %106 = vector.broadcast %cst_58 : f32 to vector<256x256xf32>
    %107 = arith.select %104, %105, %106 : vector<256x256xi1>, vector<256x256xf32>
    %c32_i32_59 = arith.constant 32 : i32
    %108 = vector.broadcast %c32_i32_59 : i32 to vector<256x256xi32>
    %109 = arith.addi %0, %108 : vector<256x256xi32>
    %110 = arith.cmpi eq, %109, %1 : vector<256x256xi32>
    %cst_60 = arith.constant 1.000000e+00 : f32
    %cst_61 = arith.constant 0.000000e+00 : f32
    %111 = vector.broadcast %cst_60 : f32 to vector<256x256xf32>
    %112 = vector.broadcast %cst_61 : f32 to vector<256x256xf32>
    %113 = arith.select %110, %111, %112 : vector<256x256xi1>, vector<256x256xf32>
    %c48_i32_62 = arith.constant 48 : i32
    %114 = vector.broadcast %c48_i32_62 : i32 to vector<256x256xi32>
    %115 = arith.addi %0, %114 : vector<256x256xi32>
    %116 = arith.cmpi eq, %115, %1 : vector<256x256xi32>
    %cst_63 = arith.constant 1.000000e+00 : f32
    %cst_64 = arith.constant 0.000000e+00 : f32
    %117 = vector.broadcast %cst_63 : f32 to vector<256x256xf32>
    %118 = vector.broadcast %cst_64 : f32 to vector<256x256xf32>
    %119 = arith.select %116, %117, %118 : vector<256x256xi1>, vector<256x256xf32>
    %c64_i32_65 = arith.constant 64 : i32
    %120 = vector.broadcast %c64_i32_65 : i32 to vector<256x256xi32>
    %121 = arith.addi %0, %120 : vector<256x256xi32>
    %122 = arith.cmpi eq, %121, %1 : vector<256x256xi32>
    %cst_66 = arith.constant 1.000000e+00 : f32
    %cst_67 = arith.constant 0.000000e+00 : f32
    %123 = vector.broadcast %cst_66 : f32 to vector<256x256xf32>
    %124 = vector.broadcast %cst_67 : f32 to vector<256x256xf32>
    %125 = arith.select %122, %123, %124 : vector<256x256xi1>, vector<256x256xf32>
    %c0_68 = arith.constant 0 : index
    %c0_69 = arith.constant 0 : index
    %c0_70 = arith.constant 0 : index
    %126 = vector.load %arg5[%c0_68, %c0_69, %c0_70] : memref<5x32x32xf32, #tpu.memory_space<vmem>>, vector<1x32x32xf32>
    %127 = vector.shape_cast %126 : vector<1x32x32xf32> to vector<32x32xf32>
    %cst_71 = arith.constant dense<0.000000e+00> : vector<32x256xf32>
    %128 = tpu.matmul %127, %101, %cst_71 {dimension_numbers = #tpu.dot_dimension_numbers<[1], [0], [0], [1], [0, 0, 1, 1], [], []>} : vector<32x32xf32>, vector<32x256xf32>, vector<32x256xf32> -> vector<32x256xf32>
    %c1_72 = arith.constant 1 : index
    %c0_73 = arith.constant 0 : index
    %c0_74 = arith.constant 0 : index
    %129 = vector.load %arg5[%c1_72, %c0_73, %c0_74] : memref<5x32x32xf32, #tpu.memory_space<vmem>>, vector<1x32x32xf32>
    %130 = vector.shape_cast %129 : vector<1x32x32xf32> to vector<32x32xf32>
    %cst_75 = arith.constant dense<0.000000e+00> : vector<32x256xf32>
    %131 = tpu.matmul %101, %107, %cst_75 {dimension_numbers = #tpu.dot_dimension_numbers<[1], [0], [0], [1], [0, 0, 1, 1], [], []>} : vector<32x256xf32>, vector<256x256xf32>, vector<32x256xf32> -> vector<32x256xf32>
    %cst_76 = arith.constant dense<0.000000e+00> : vector<32x256xf32>
    %132 = tpu.matmul %130, %131, %cst_76 {dimension_numbers = #tpu.dot_dimension_numbers<[1], [0], [0], [1], [0, 0, 1, 1], [], []>} : vector<32x32xf32>, vector<32x256xf32>, vector<32x256xf32> -> vector<32x256xf32>
    %133 = arith.addf %128, %132 : vector<32x256xf32>
    %c2_77 = arith.constant 2 : index
    %c0_78 = arith.constant 0 : index
    %c0_79 = arith.constant 0 : index
    %134 = vector.load %arg5[%c2_77, %c0_78, %c0_79] : memref<5x32x32xf32, #tpu.memory_space<vmem>>, vector<1x32x32xf32>
    %135 = vector.shape_cast %134 : vector<1x32x32xf32> to vector<32x32xf32>
    %cst_80 = arith.constant dense<0.000000e+00> : vector<32x256xf32>
    %136 = tpu.matmul %101, %113, %cst_80 {dimension_numbers = #tpu.dot_dimension_numbers<[1], [0], [0], [1], [0, 0, 1, 1], [], []>} : vector<32x256xf32>, vector<256x256xf32>, vector<32x256xf32> -> vector<32x256xf32>
    %cst_81 = arith.constant dense<0.000000e+00> : vector<32x256xf32>
    %137 = tpu.matmul %135, %136, %cst_81 {dimension_numbers = #tpu.dot_dimension_numbers<[1], [0], [0], [1], [0, 0, 1, 1], [], []>} : vector<32x32xf32>, vector<32x256xf32>, vector<32x256xf32> -> vector<32x256xf32>
    %138 = arith.addf %133, %137 : vector<32x256xf32>
    %c3_82 = arith.constant 3 : index
    %c0_83 = arith.constant 0 : index
    %c0_84 = arith.constant 0 : index
    %139 = vector.load %arg5[%c3_82, %c0_83, %c0_84] : memref<5x32x32xf32, #tpu.memory_space<vmem>>, vector<1x32x32xf32>
    %140 = vector.shape_cast %139 : vector<1x32x32xf32> to vector<32x32xf32>
    %cst_85 = arith.constant dense<0.000000e+00> : vector<32x256xf32>
    %141 = tpu.matmul %101, %119, %cst_85 {dimension_numbers = #tpu.dot_dimension_numbers<[1], [0], [0], [1], [0, 0, 1, 1], [], []>} : vector<32x256xf32>, vector<256x256xf32>, vector<32x256xf32> -> vector<32x256xf32>
    %cst_86 = arith.constant dense<0.000000e+00> : vector<32x256xf32>
    %142 = tpu.matmul %140, %141, %cst_86 {dimension_numbers = #tpu.dot_dimension_numbers<[1], [0], [0], [1], [0, 0, 1, 1], [], []>} : vector<32x32xf32>, vector<32x256xf32>, vector<32x256xf32> -> vector<32x256xf32>
    %143 = arith.addf %138, %142 : vector<32x256xf32>
    %c4_87 = arith.constant 4 : index
    %c0_88 = arith.constant 0 : index
    %c0_89 = arith.constant 0 : index
    %144 = vector.load %arg5[%c4_87, %c0_88, %c0_89] : memref<5x32x32xf32, #tpu.memory_space<vmem>>, vector<1x32x32xf32>
    %145 = vector.shape_cast %144 : vector<1x32x32xf32> to vector<32x32xf32>
    %cst_90 = arith.constant dense<0.000000e+00> : vector<32x256xf32>
    %146 = tpu.matmul %101, %125, %cst_90 {dimension_numbers = #tpu.dot_dimension_numbers<[1], [0], [0], [1], [0, 0, 1, 1], [], []>} : vector<32x256xf32>, vector<256x256xf32>, vector<32x256xf32> -> vector<32x256xf32>
    %cst_91 = arith.constant dense<0.000000e+00> : vector<32x256xf32>
    %147 = tpu.matmul %145, %146, %cst_91 {dimension_numbers = #tpu.dot_dimension_numbers<[1], [0], [0], [1], [0, 0, 1, 1], [], []>} : vector<32x32xf32>, vector<32x256xf32>, vector<32x256xf32> -> vector<32x256xf32>
    %148 = arith.addf %143, %147 : vector<32x256xf32>
    %c0_92 = arith.constant 0 : index
    %c0_93 = arith.constant 0 : index
    %149 = vector.load %arg6[%c0_92, %c0_93] : memref<32x1xf32, #tpu.memory_space<vmem>>, vector<32x1xf32>
    %150 = vector.broadcast %149 : vector<32x1xf32> to vector<32x256xf32>
    %151 = arith.addf %148, %150 : vector<32x256xf32>
    %cst_94 = arith.constant 0.000000e+00 : f32
    %152 = vector.broadcast %cst_94 : f32 to vector<32x256xf32>
    %153 = arith.maximumf %151, %152 : vector<32x256xf32>
    %c192_i32 = arith.constant 192 : i32
    %154 = vector.broadcast %c192_i32 : i32 to vector<1x256xi32>
    %155 = arith.cmpi slt, %2, %154 : vector<1x256xi32>
    %cst_95 = arith.constant 0.000000e+00 : f32
    %156 = vector.shape_cast %155 : vector<1x256xi1> to vector<1x256xi1>
    %157 = vector.broadcast %156 : vector<1x256xi1> to vector<32x256xi1>
    %158 = vector.broadcast %cst_95 : f32 to vector<32x256xf32>
    %159 = arith.select %157, %153, %158 : vector<32x256xi1>, vector<32x256xf32>
    %c0_96 = arith.constant 0 : index
    %c0_97 = arith.constant 0 : index
    %c0_98 = arith.constant 0 : index
    %160 = vector.load %arg7[%c0_96, %c0_97, %c0_98] : memref<5x1x32xf32, #tpu.memory_space<vmem>>, vector<1x1x32xf32>
    %161 = vector.shape_cast %160 : vector<1x1x32xf32> to vector<1x32xf32>
    %cst_99 = arith.constant dense<0.000000e+00> : vector<1x256xf32>
    %162 = tpu.matmul %161, %159, %cst_99 {dimension_numbers = #tpu.dot_dimension_numbers<[1], [0], [0], [1], [0, 0, 1, 1], [], []>} : vector<1x32xf32>, vector<32x256xf32>, vector<1x256xf32> -> vector<1x256xf32>
    %c1_100 = arith.constant 1 : index
    %c0_101 = arith.constant 0 : index
    %c0_102 = arith.constant 0 : index
    %163 = vector.load %arg7[%c1_100, %c0_101, %c0_102] : memref<5x1x32xf32, #tpu.memory_space<vmem>>, vector<1x1x32xf32>
    %164 = vector.shape_cast %163 : vector<1x1x32xf32> to vector<1x32xf32>
    %cst_103 = arith.constant dense<0.000000e+00> : vector<32x256xf32>
    %165 = tpu.matmul %159, %107, %cst_103 {dimension_numbers = #tpu.dot_dimension_numbers<[1], [0], [0], [1], [0, 0, 1, 1], [], []>} : vector<32x256xf32>, vector<256x256xf32>, vector<32x256xf32> -> vector<32x256xf32>
    %cst_104 = arith.constant dense<0.000000e+00> : vector<1x256xf32>
    %166 = tpu.matmul %164, %165, %cst_104 {dimension_numbers = #tpu.dot_dimension_numbers<[1], [0], [0], [1], [0, 0, 1, 1], [], []>} : vector<1x32xf32>, vector<32x256xf32>, vector<1x256xf32> -> vector<1x256xf32>
    %167 = arith.addf %162, %166 : vector<1x256xf32>
    %c2_105 = arith.constant 2 : index
    %c0_106 = arith.constant 0 : index
    %c0_107 = arith.constant 0 : index
    %168 = vector.load %arg7[%c2_105, %c0_106, %c0_107] : memref<5x1x32xf32, #tpu.memory_space<vmem>>, vector<1x1x32xf32>
    %169 = vector.shape_cast %168 : vector<1x1x32xf32> to vector<1x32xf32>
    %cst_108 = arith.constant dense<0.000000e+00> : vector<32x256xf32>
    %170 = tpu.matmul %159, %113, %cst_108 {dimension_numbers = #tpu.dot_dimension_numbers<[1], [0], [0], [1], [0, 0, 1, 1], [], []>} : vector<32x256xf32>, vector<256x256xf32>, vector<32x256xf32> -> vector<32x256xf32>
    %cst_109 = arith.constant dense<0.000000e+00> : vector<1x256xf32>
    %171 = tpu.matmul %169, %170, %cst_109 {dimension_numbers = #tpu.dot_dimension_numbers<[1], [0], [0], [1], [0, 0, 1, 1], [], []>} : vector<1x32xf32>, vector<32x256xf32>, vector<1x256xf32> -> vector<1x256xf32>
    %172 = arith.addf %167, %171 : vector<1x256xf32>
    %c3_110 = arith.constant 3 : index
    %c0_111 = arith.constant 0 : index
    %c0_112 = arith.constant 0 : index
    %173 = vector.load %arg7[%c3_110, %c0_111, %c0_112] : memref<5x1x32xf32, #tpu.memory_space<vmem>>, vector<1x1x32xf32>
    %174 = vector.shape_cast %173 : vector<1x1x32xf32> to vector<1x32xf32>
    %cst_113 = arith.constant dense<0.000000e+00> : vector<32x256xf32>
    %175 = tpu.matmul %159, %119, %cst_113 {dimension_numbers = #tpu.dot_dimension_numbers<[1], [0], [0], [1], [0, 0, 1, 1], [], []>} : vector<32x256xf32>, vector<256x256xf32>, vector<32x256xf32> -> vector<32x256xf32>
    %cst_114 = arith.constant dense<0.000000e+00> : vector<1x256xf32>
    %176 = tpu.matmul %174, %175, %cst_114 {dimension_numbers = #tpu.dot_dimension_numbers<[1], [0], [0], [1], [0, 0, 1, 1], [], []>} : vector<1x32xf32>, vector<32x256xf32>, vector<1x256xf32> -> vector<1x256xf32>
    %177 = arith.addf %172, %176 : vector<1x256xf32>
    %c4_115 = arith.constant 4 : index
    %c0_116 = arith.constant 0 : index
    %c0_117 = arith.constant 0 : index
    %178 = vector.load %arg7[%c4_115, %c0_116, %c0_117] : memref<5x1x32xf32, #tpu.memory_space<vmem>>, vector<1x1x32xf32>
    %179 = vector.shape_cast %178 : vector<1x1x32xf32> to vector<1x32xf32>
    %cst_118 = arith.constant dense<0.000000e+00> : vector<32x256xf32>
    %180 = tpu.matmul %159, %125, %cst_118 {dimension_numbers = #tpu.dot_dimension_numbers<[1], [0], [0], [1], [0, 0, 1, 1], [], []>} : vector<32x256xf32>, vector<256x256xf32>, vector<32x256xf32> -> vector<32x256xf32>
    %cst_119 = arith.constant dense<0.000000e+00> : vector<1x256xf32>
    %181 = tpu.matmul %179, %180, %cst_119 {dimension_numbers = #tpu.dot_dimension_numbers<[1], [0], [0], [1], [0, 0, 1, 1], [], []>} : vector<1x32xf32>, vector<32x256xf32>, vector<1x256xf32> -> vector<1x256xf32>
    %182 = arith.addf %177, %181 : vector<1x256xf32>
    %c0_120 = arith.constant 0 : index
    %c0_121 = arith.constant 0 : index
    %183 = vector.load %arg8[%c0_120, %c0_121] : memref<1x1xf32, #tpu.memory_space<vmem>>, vector<1x1xf32>
    %184 = vector.broadcast %183 : vector<1x1xf32> to vector<1x256xf32>
    %185 = arith.addf %182, %184 : vector<1x256xf32>
    %c0_122 = arith.constant 0 : index
    %c0_123 = arith.constant 0 : index
    %186 = vector.load %arg10[%c0_122, %c0_123] : memref<1x256xf32, #tpu.memory_space<vmem>>, vector<1x256xf32>
    tpu.vector_store %arg10[%c0_122, %c0_123], %185 {strides = array<i32>} : memref<1x256xf32, #tpu.memory_space<vmem>>, vector<1x256xf32>,
    return
  }
}

</mosaic_0001>

<llo_original>
// kernel: tcnn_autoencoder_forward.1
$region0: #{tcnn_autoencoder_forward.1}
  #allocation0 [shape = 'u32[]', space=smem, size = 0x4, offset = 0x4, fixed_abs, tag = 'smem constant byte address 0x4 - core index']
  #allocation1 [shape = 'u32[144,128]{1,0:T(1,128)}', space=vmem, size = 0x12000, scoped, tag = 'internal scratch']
  #allocation2 [shape = 'f32[1,1]{1,0:T(1,128)S(1)}', space=vmem, size = 0x200, scoped, tag = 'scoped memory for tcnn_autoencoder_forward.1']
  %s0 = inlined_call_operand.vmem [shape: f32[1,256], index: 0, kind: input, shape index: {}]
  %s1 = inlined_call_operand.vmem [shape: f32[5,32,1], index: 1, kind: input, shape index: {}]
  %s2 = inlined_call_operand.vmem [shape: f32[32,1], index: 2, kind: input, shape index: {}]
  %s3 = inlined_call_operand.vmem [shape: f32[5,32,32], index: 3, kind: input, shape index: {}]
  %s4 = inlined_call_operand.vmem [shape: f32[32,1], index: 4, kind: input, shape index: {}]
  %s5 = inlined_call_operand.vmem [shape: f32[5,32,32], index: 5, kind: input, shape index: {}]
  %s6 = inlined_call_operand.vmem [shape: f32[32,1], index: 6, kind: input, shape index: {}]
  %s7 = inlined_call_operand.vmem [shape: f32[5,1,32], index: 7, kind: input, shape index: {}]
  %s8 = inlined_call_operand.<no memory space> [shape: f32[1,1], index: 8, kind: input, shape index: {}]
  %s9 = inlined_call_operand.vmem [shape: f32[32,128], index: 9, kind: output, shape index: {0}]
  %s10 = inlined_call_operand.vmem [shape: f32[1,256], index: 10, kind: output, shape index: {1}]
  %11 = xla_tuple %s9, %s10
  %s12 = sld [smem:[#allocation0]]
  $region54: #{tcnn_autoencoder_forward.1} parent=0
    _
  %s14 = ssub.s32 1, %s12
  %s15 = scalar_select 0, %s14, %s12
  %v16 = vstv %s8
  %17 = vst [vmem:[#allocation2] sm:$0x1] %v16
  // Predicated region
  $region2: #{tcnn_autoencoder_forward.1} parent=0 // pred_check
    _
  $region3: #{tcnn_autoencoder_forward.1} parent=0 // pred_check_branch
    %19 = sbr.rel (0) target = $region5
  $region4: #{tcnn_autoencoder_forward.1} parent=0 // pred_region
    _
  $region5: #{tcnn_autoencoder_forward.1} parent=0 // pred_fallthru
    _
  // Predicated region
  $region6: #{tcnn_autoencoder_forward.1} parent=0 // pred_check
    _
  $region7: #{tcnn_autoencoder_forward.1} parent=0 // pred_check_branch
    %21 = sbr.rel (0) target = $region9
  $region8: #{tcnn_autoencoder_forward.1} parent=0 // pred_region
    _
  $region9: #{tcnn_autoencoder_forward.1} parent=0 // pred_fallthru
    _
  // Predicated region
  $region10: #{tcnn_autoencoder_forward.1} parent=0 // pred_check
    _
  $region11: #{tcnn_autoencoder_forward.1} parent=0 // pred_check_branch
    %23 = sbr.rel (0) target = $region13
  $region12: #{tcnn_autoencoder_forward.1} parent=0 // pred_region
    _
  $region13: #{tcnn_autoencoder_forward.1} parent=0 // pred_fallthru
    _
  // Predicated region
  $region14: #{tcnn_autoencoder_forward.1} parent=0 // pred_check
    _
  $region15: #{tcnn_autoencoder_forward.1} parent=0 // pred_check_branch
    %25 = sbr.rel (0) target = $region17
  $region16: #{tcnn_autoencoder_forward.1} parent=0 // pred_region
    _
  $region17: #{tcnn_autoencoder_forward.1} parent=0 // pred_fallthru
    _
  // Predicated region
  $region18: #{tcnn_autoencoder_forward.1} parent=0 // pred_check
    _
  $region19: #{tcnn_autoencoder_forward.1} parent=0 // pred_check_branch
    %27 = sbr.rel (0) target = $region21
  $region20: #{tcnn_autoencoder_forward.1} parent=0 // pred_region
    _
  $region21: #{tcnn_autoencoder_forward.1} parent=0 // pred_fallthru
    _
  // Predicated region
  $region22: #{tcnn_autoencoder_forward.1} parent=0 // pred_check
    _
  $region23: #{tcnn_autoencoder_forward.1} parent=0 // pred_check_branch
    %29 = sbr.rel (0) target = $region25
  $region24: #{tcnn_autoencoder_forward.1} parent=0 // pred_region
    _
  $region25: #{tcnn_autoencoder_forward.1} parent=0 // pred_fallthru
    _
  // Predicated region
  $region26: #{tcnn_autoencoder_forward.1} parent=0 // pred_check
    _
  $region27: #{tcnn_autoencoder_forward.1} parent=0 // pred_check_branch
    %31 = sbr.rel (0) target = $region29
  $region28: #{tcnn_autoencoder_forward.1} parent=0 // pred_region
    _
  $region29: #{tcnn_autoencoder_forward.1} parent=0 // pred_fallthru
    _
  // Predicated region
  $region30: #{tcnn_autoencoder_forward.1} parent=0 // pred_check
    _
  $region31: #{tcnn_autoencoder_forward.1} parent=0 // pred_check_branch
    %33 = sbr.rel (0) target = $region33
  $region32: #{tcnn_autoencoder_forward.1} parent=0 // pred_region
    _
  $region33: #{tcnn_autoencoder_forward.1} parent=0 // pred_fallthru
    _
  // Predicated region
  $region34: #{tcnn_autoencoder_forward.1} parent=0 // pred_check
    _
  $region35: #{tcnn_autoencoder_forward.1} parent=0 // pred_check_branch
    %35 = sbr.rel (0) target = $region37
  $region36: #{tcnn_autoencoder_forward.1} parent=0 // pred_region
    _
  $region37: #{tcnn_autoencoder_forward.1} parent=0 // pred_fallthru
    _
  %v36 = vlaneseq
  %v37 = vshrl.u32 %v36, 7
  %v38 = vadd.s32 %v37, 8
  %v39 = vadd.s32 %v37, 16
  %v40 = vadd.s32 %v37, 24
  %v41 = vadd.s32 %v37, 32
  %v42 = vadd.s32 %v37, 40
  %v43 = vadd.s32 %v37, 48
  %v44 = vadd.s32 %v37, 56
  %v45 = vadd.s32 %v37, 64
  %v46 = vadd.s32 %v37, 72
  %v47 = vadd.s32 %v37, 80
  %v48 = vadd.s32 %v37, 88
  %v49 = vadd.s32 %v37, 96
  %v50 = vadd.s32 %v37, 104
  %v51 = vadd.s32 %v37, 112
  %v52 = vadd.s32 %v37, 120
  %v53 = vadd.s32 %v37, 128
  %v54 = vadd.s32 %v37, 136
  %v55 = vadd.s32 %v37, 144
  %v56 = vadd.s32 %v37, 152
  %v57 = vadd.s32 %v37, 160
  %v58 = vadd.s32 %v37, 168
  %v59 = vadd.s32 %v37, 176
  %v60 = vadd.s32 %v37, 184
  %v61 = vadd.s32 %v37, 192
  %v62 = vadd.s32 %v37, 200
  %v63 = vadd.s32 %v37, 208
  %v64 = vadd.s32 %v37, 216
  %v65 = vadd.s32 %v37, 224
  %v66 = vadd.s32 %v37, 232
  %v67 = vadd.s32 %v37, 240
  %v68 = vadd.s32 %v37, 248
  %v69 = vlaneseq
  %v70 = vand.u32 %v69, 127
  %v71 = vadd.s32 %v70, 128
  %v72 = vadd.s32 %v70, 16
  %v73 = vadd.s32 %v71, 16
  %vm74 = vcmp.eq.s32.totalorder %v37, %v72
  %vm75 = vcmp.eq.s32.totalorder %v37, %v73
  %vm76 = vcmp.eq.s32.totalorder %v38, %v72
  %vm77 = vcmp.eq.s32.totalorder %v38, %v73
  %vm78 = vcmp.eq.s32.totalorder %v39, %v72
  %vm79 = vcmp.eq.s32.totalorder %v39, %v73
  %vm80 = vcmp.eq.s32.totalorder %v40, %v72
  %vm81 = vcmp.eq.s32.totalorder %v40, %v73
  %vm82 = vcmp.eq.s32.totalorder %v41, %v72
  %vm83 = vcmp.eq.s32.totalorder %v41, %v73
  %vm84 = vcmp.eq.s32.totalorder %v42, %v72
  %vm85 = vcmp.eq.s32.totalorder %v42, %v73
  %vm86 = vcmp.eq.s32.totalorder %v43, %v72
  %vm87 = vcmp.eq.s32.totalorder %v43, %v73
  %vm88 = vcmp.eq.s32.totalorder %v44, %v72
  %vm89 = vcmp.eq.s32.totalorder %v44, %v73
  %vm90 = vcmp.eq.s32.totalorder %v45, %v72
  %vm91 = vcmp.eq.s32.totalorder %v45, %v73
  %vm92 = vcmp.eq.s32.totalorder %v46, %v72
  %vm93 = vcmp.eq.s32.totalorder %v46, %v73
  %vm94 = vcmp.eq.s32.totalorder %v47, %v72
  %vm95 = vcmp.eq.s32.totalorder %v47, %v73
  %vm96 = vcmp.eq.s32.totalorder %v48, %v72
  %vm97 = vcmp.eq.s32.totalorder %v48, %v73
  %vm98 = vcmp.eq.s32.totalorder %v49, %v72
  %vm99 = vcmp.eq.s32.totalorder %v49, %v73
  %vm100 = vcmp.eq.s32.totalorder %v50, %v72
  %vm101 = vcmp.eq.s32.totalorder %v50, %v73
  %vm102 = vcmp.eq.s32.totalorder %v51, %v72
  %vm103 = vcmp.eq.s32.totalorder %v51, %v73
  %vm104 = vcmp.eq.s32.totalorder %v52, %v72
  %vm105 = vcmp.eq.s32.totalorder %v52, %v73
  %vm106 = vcmp.eq.s32.totalorder %v53, %v72
  %vm107 = vcmp.eq.s32.totalorder %v53, %v73
  %vm108 = vcmp.eq.s32.totalorder %v54, %v72
  %vm109 = vcmp.eq.s32.totalorder %v54, %v73
  %vm110 = vcmp.eq.s32.totalorder %v55, %v72
  %vm111 = vcmp.eq.s32.totalorder %v55, %v73
  %vm112 = vcmp.eq.s32.totalorder %v56, %v72
  %vm113 = vcmp.eq.s32.totalorder %v56, %v73
  %vm114 = vcmp.eq.s32.totalorder %v57, %v72
  %vm115 = vcmp.eq.s32.totalorder %v57, %v73
  %vm116 = vcmp.eq.s32.totalorder %v58, %v72
  %vm117 = vcmp.eq.s32.totalorder %v58, %v73
  %vm118 = vcmp.eq.s32.totalorder %v59, %v72
  %vm119 = vcmp.eq.s32.totalorder %v59, %v73
  %vm120 = vcmp.eq.s32.totalorder %v60, %v72
  %vm121 = vcmp.eq.s32.totalorder %v60, %v73
  %vm122 = vcmp.eq.s32.totalorder %v61, %v72
  %vm123 = vcmp.eq.s32.totalorder %v61, %v73
  %vm124 = vcmp.eq.s32.totalorder %v62, %v72
  %vm125 = vcmp.eq.s32.totalorder %v62, %v73
  %vm126 = vcmp.eq.s32.totalorder %v63, %v72
  %vm127 = vcmp.eq.s32.totalorder %v63, %v73
  %vm128 = vcmp.eq.s32.totalorder %v64, %v72
  %vm129 = vcmp.eq.s32.totalorder %v64, %v73
  %vm130 = vcmp.eq.s32.totalorder %v65, %v72
  %vm131 = vcmp.eq.s32.totalorder %v65, %v73
  %vm132 = vcmp.eq.s32.totalorder %v66, %v72
  %vm133 = vcmp.eq.s32.totalorder %v66, %v73
  %vm134 = vcmp.eq.s32.totalorder %v67, %v72
  %vm135 = vcmp.eq.s32.totalorder %v67, %v73
  %vm136 = vcmp.eq.s32.totalorder %v68, %v72
  %vm137 = vcmp.eq.s32.totalorder %v68, %v73
  %v138 = vsel %vm74, 1.0, 0.0
  %v139 = vsel %vm75, 1.0, 0.0
  %v140 = vsel %vm76, 1.0, 0.0
  %v141 = vsel %vm77, 1.0, 0.0
  %v142 = vsel %vm78, 1.0, 0.0
  %v143 = vsel %vm79, 1.0, 0.0
  %v144 = vsel %vm80, 1.0, 0.0
  %v145 = vsel %vm81, 1.0, 0.0
  %v146 = vsel %vm82, 1.0, 0.0
  %v147 = vsel %vm83, 1.0, 0.0
  %v148 = vsel %vm84, 1.0, 0.0
  %v149 = vsel %vm85, 1.0, 0.0
  %v150 = vsel %vm86, 1.0, 0.0
  %v151 = vsel %vm87, 1.0, 0.0
  %v152 = vsel %vm88, 1.0, 0.0
  %v153 = vsel %vm89, 1.0, 0.0
  %v154 = vsel %vm90, 1.0, 0.0
  %v155 = vsel %vm91, 1.0, 0.0
  %v156 = vsel %vm92, 1.0, 0.0
  %v157 = vsel %vm93, 1.0, 0.0
  %v158 = vsel %vm94, 1.0, 0.0
  %v159 = vsel %vm95, 1.0, 0.0
  %v160 = vsel %vm96, 1.0, 0.0
  %v161 = vsel %vm97, 1.0, 0.0
  %v162 = vsel %vm98, 1.0, 0.0
  %v163 = vsel %vm99, 1.0, 0.0
  %v164 = vsel %vm100, 1.0, 0.0
  %v165 = vsel %vm101, 1.0, 0.0
  %v166 = vsel %vm102, 1.0, 0.0
  %v167 = vsel %vm103, 1.0, 0.0
  %v168 = vsel %vm104, 1.0, 0.0
  %v169 = vsel %vm105, 1.0, 0.0
  %v170 = vsel %vm106, 1.0, 0.0
  %v171 = vsel %vm107, 1.0, 0.0
  %v172 = vsel %vm108, 1.0, 0.0
  %v173 = vsel %vm109, 1.0, 0.0
  %v174 = vsel %vm110, 1.0, 0.0
  %v175 = vsel %vm111, 1.0, 0.0
  %v176 = vsel %vm112, 1.0, 0.0
  %v177 = vsel %vm113, 1.0, 0.0
  %v178 = vsel %vm114, 1.0, 0.0
  %v179 = vsel %vm115, 1.0, 0.0
  %v180 = vsel %vm116, 1.0, 0.0
  %v181 = vsel %vm117, 1.0, 0.0
  %v182 = vsel %vm118, 1.0, 0.0
  %v183 = vsel %vm119, 1.0, 0.0
  %v184 = vsel %vm120, 1.0, 0.0
  %v185 = vsel %vm121, 1.0, 0.0
  %v186 = vsel %vm122, 1.0, 0.0
  %v187 = vsel %vm123, 1.0, 0.0
  %v188 = vsel %vm124, 1.0, 0.0
  %v189 = vsel %vm125, 1.0, 0.0
  %v190 = vsel %vm126, 1.0, 0.0
  %v191 = vsel %vm127, 1.0, 0.0
  %v192 = vsel %vm128, 1.0, 0.0
  %v193 = vsel %vm129, 1.0, 0.0
  %v194 = vsel %vm130, 1.0, 0.0
  %v195 = vsel %vm131, 1.0, 0.0
  %v196 = vsel %vm132, 1.0, 0.0
  %v197 = vsel %vm133, 1.0, 0.0
  %v198 = vsel %vm134, 1.0, 0.0
  %v199 = vsel %vm135, 1.0, 0.0
  %v200 = vsel %vm136, 1.0, 0.0
  %v201 = vsel %vm137, 1.0, 0.0
  %v202 = vadd.s32 %v70, 32
  %v203 = vadd.s32 %v71, 32
  %vm204 = vcmp.eq.s32.totalorder %v37, %v202
  %vm205 = vcmp.eq.s32.totalorder %v37, %v203
  %vm206 = vcmp.eq.s32.totalorder %v38, %v202
  %vm207 = vcmp.eq.s32.totalorder %v38, %v203
  %vm208 = vcmp.eq.s32.totalorder %v39, %v202
  %vm209 = vcmp.eq.s32.totalorder %v39, %v203
  %vm210 = vcmp.eq.s32.totalorder %v40, %v202
  %vm211 = vcmp.eq.s32.totalorder %v40, %v203
  %vm212 = vcmp.eq.s32.totalorder %v41, %v202
  %vm213 = vcmp.eq.s32.totalorder %v41, %v203
  %vm214 = vcmp.eq.s32.totalorder %v42, %v202
  %vm215 = vcmp.eq.s32.totalorder %v42, %v203
  %vm216 = vcmp.eq.s32.totalorder %v43, %v202
  %vm217 = vcmp.eq.s32.totalorder %v43, %v203
  %vm218 = vcmp.eq.s32.totalorder %v44, %v202
  %vm219 = vcmp.eq.s32.totalorder %v44, %v203
  %vm220 = vcmp.eq.s32.totalorder %v45, %v202
  %vm221 = vcmp.eq.s32.totalorder %v45, %v203
  %vm222 = vcmp.eq.s32.totalorder %v46, %v202
  %vm223 = vcmp.eq.s32.totalorder %v46, %v203
  %vm224 = vcmp.eq.s32.totalorder %v47, %v202
  %vm225 = vcmp.eq.s32.totalorder %v47, %v203
  %vm226 = vcmp.eq.s32.totalorder %v48, %v202
  %vm227 = vcmp.eq.s32.totalorder %v48, %v203
  %vm228 = vcmp.eq.s32.totalorder %v49, %v202
  %vm229 = vcmp.eq.s32.totalorder %v49, %v203
  %vm230 = vcmp.eq.s32.totalorder %v50, %v202
  %vm231 = vcmp.eq.s32.totalorder %v50, %v203
  %vm232 = vcmp.eq.s32.totalorder %v51, %v202
  %vm233 = vcmp.eq.s32.totalorder %v51, %v203
  %vm234 = vcmp.eq.s32.totalorder %v52, %v202
  %vm235 = vcmp.eq.s32.totalorder %v52, %v203
  %vm236 = vcmp.eq.s32.totalorder %v53, %v202
  %vm237 = vcmp.eq.s32.totalorder %v53, %v203
  %vm238 = vcmp.eq.s32.totalorder %v54, %v202
  %vm239 = vcmp.eq.s32.totalorder %v54, %v203
  %vm240 = vcmp.eq.s32.totalorder %v55, %v202
  %vm241 = vcmp.eq.s32.totalorder %v55, %v203
  %vm242 = vcmp.eq.s32.totalorder %v56, %v202
  %vm243 = vcmp.eq.s32.totalorder %v56, %v203
  %vm244 = vcmp.eq.s32.totalorder %v57, %v202
  %vm245 = vcmp.eq.s32.totalorder %v57, %v203
  %vm246 = vcmp.eq.s32.totalorder %v58, %v202
  %vm247 = vcmp.eq.s32.totalorder %v58, %v203
  %vm248 = vcmp.eq.s32.totalorder %v59, %v202
  %vm249 = vcmp.eq.s32.totalorder %v59, %v203
  %vm250 = vcmp.eq.s32.totalorder %v60, %v202
  %vm251 = vcmp.eq.s32.totalorder %v60, %v203
  %vm252 = vcmp.eq.s32.totalorder %v61, %v202
  %vm253 = vcmp.eq.s32.totalorder %v61, %v203
  %vm254 = vcmp.eq.s32.totalorder %v62, %v202
  %vm255 = vcmp.eq.s32.totalorder %v62, %v203
  %vm256 = vcmp.eq.s32.totalorder %v63, %v202
  %vm257 = vcmp.eq.s32.totalorder %v63, %v203
  %vm258 = vcmp.eq.s32.totalorder %v64, %v202
  %vm259 = vcmp.eq.s32.totalorder %v64, %v203
  %vm260 = vcmp.eq.s32.totalorder %v65, %v202
  %vm261 = vcmp.eq.s32.totalorder %v65, %v203
  %vm262 = vcmp.eq.s32.totalorder %v66, %v202
  %vm263 = vcmp.eq.s32.totalorder %v66, %v203
  %vm264 = vcmp.eq.s32.totalorder %v67, %v202
  %vm265 = vcmp.eq.s32.totalorder %v67, %v203
  %vm266 = vcmp.eq.s32.totalorder %v68, %v202
  %vm267 = vcmp.eq.s32.totalorder %v68, %v203
  %v268 = vsel %vm204, 1.0, 0.0
  %v269 = vsel %vm205, 1.0, 0.0
  %v270 = vsel %vm206, 1.0, 0.0
  %v271 = vsel %vm207, 1.0, 0.0
  %v272 = vsel %vm208, 1.0, 0.0
  %v273 = vsel %vm209, 1.0, 0.0
  %v274 = vsel %vm210, 1.0, 0.0
  %v275 = vsel %vm211, 1.0, 0.0
  %v276 = vsel %vm212, 1.0, 0.0
  %v277 = vsel %vm213, 1.0, 0.0
  %v278 = vsel %vm214, 1.0, 0.0
  %v279 = vsel %vm215, 1.0, 0.0
  %v280 = vsel %vm216, 1.0, 0.0
  %v281 = vsel %vm217, 1.0, 0.0
  %v282 = vsel %vm218, 1.0, 0.0
  %v283 = vsel %vm219, 1.0, 0.0
  %v284 = vsel %vm220, 1.0, 0.0
  %v285 = vsel %vm221, 1.0, 0.0
  %v286 = vsel %vm222, 1.0, 0.0
  %v287 = vsel %vm223, 1.0, 0.0
  %v288 = vsel %vm224, 1.0, 0.0
  %v289 = vsel %vm225, 1.0, 0.0
  %v290 = vsel %vm226, 1.0, 0.0
  %v291 = vsel %vm227, 1.0, 0.0
  %v292 = vsel %vm228, 1.0, 0.0
  %v293 = vsel %vm229, 1.0, 0.0
  %v294 = vsel %vm230, 1.0, 0.0
  %v295 = vsel %vm231, 1.0, 0.0
  %v296 = vsel %vm232, 1.0, 0.0
  %v297 = vsel %vm233, 1.0, 0.0
  %v298 = vsel %vm234, 1.0, 0.0
  %v299 = vsel %vm235, 1.0, 0.0
  %v300 = vsel %vm236, 1.0, 0.0
  %v301 = vsel %vm237, 1.0, 0.0
  %v302 = vsel %vm238, 1.0, 0.0
  %v303 = vsel %vm239, 1.0, 0.0
  %v304 = vsel %vm240, 1.0, 0.0
  %v305 = vsel %vm241, 1.0, 0.0
  %v306 = vsel %vm242, 1.0, 0.0
  %v307 = vsel %vm243, 1.0, 0.0
  %v308 = vsel %vm244, 1.0, 0.0
  %v309 = vsel %vm245, 1.0, 0.0
  %v310 = vsel %vm246, 1.0, 0.0
  %v311 = vsel %vm247, 1.0, 0.0
  %v312 = vsel %vm248, 1.0, 0.0
  %v313 = vsel %vm249, 1.0, 0.0
  %v314 = vsel %vm250, 1.0, 0.0
  %v315 = vsel %vm251, 1.0, 0.0
  %v316 = vsel %vm252, 1.0, 0.0
  %v317 = vsel %vm253, 1.0, 0.0
  %v318 = vsel %vm254, 1.0, 0.0
  %v319 = vsel %vm255, 1.0, 0.0
  %v320 = vsel %vm256, 1.0, 0.0
  %v321 = vsel %vm257, 1.0, 0.0
  %v322 = vsel %vm258, 1.0, 0.0
  %v323 = vsel %vm259, 1.0, 0.0
  %v324 = vsel %vm260, 1.0, 0.0
  %v325 = vsel %vm261, 1.0, 0.0
  %v326 = vsel %vm262, 1.0, 0.0
  %v327 = vsel %vm263, 1.0, 0.0
  %v328 = vsel %vm264, 1.0, 0.0
  %v329 = vsel %vm265, 1.0, 0.0
  %v330 = vsel %vm266, 1.0, 0.0
  %v331 = vsel %vm267, 1.0, 0.0
  %v332 = vadd.s32 %v70, 48
  %v333 = vadd.s32 %v71, 48
  %vm334 = vcmp.eq.s32.totalorder %v37, %v332
  %vm335 = vcmp.eq.s32.totalorder %v37, %v333
  %vm336 = vcmp.eq.s32.totalorder %v38, %v332
  %vm337 = vcmp.eq.s32.totalorder %v38, %v333
  %vm338 = vcmp.eq.s32.totalorder %v39, %v332
  %vm339 = vcmp.eq.s32.totalorder %v39, %v333
  %vm340 = vcmp.eq.s32.totalorder %v40, %v332
  %vm341 = vcmp.eq.s32.totalorder %v40, %v333
  %vm342 = vcmp.eq.s32.totalorder %v41, %v332
  %vm343 = vcmp.eq.s32.totalorder %v41, %v333
  %vm344 = vcmp.eq.s32.totalorder %v42, %v332
  %vm345 = vcmp.eq.s32.totalorder %v42, %v333
  %vm346 = vcmp.eq.s32.totalorder %v43, %v332
  %vm347 = vcmp.eq.s32.totalorder %v43, %v333
  %vm348 = vcmp.eq.s32.totalorder %v44, %v332
  %vm349 = vcmp.eq.s32.totalorder %v44, %v333
  %vm350 = vcmp.eq.s32.totalorder %v45, %v332
  %vm351 = vcmp.eq.s32.totalorder %v45, %v333
  %vm352 = vcmp.eq.s32.totalorder %v46, %v332
  %vm353 = vcmp.eq.s32.totalorder %v46, %v333
  %vm354 = vcmp.eq.s32.totalorder %v47, %v332
  %vm355 = vcmp.eq.s32.totalorder %v47, %v333
  %vm356 = vcmp.eq.s32.totalorder %v48, %v332
  %vm357 = vcmp.eq.s32.totalorder %v48, %v333
  %vm358 = vcmp.eq.s32.totalorder %v49, %v332
  %vm359 = vcmp.eq.s32.totalorder %v49, %v333
  %vm360 = vcmp.eq.s32.totalorder %v50, %v332
  %vm361 = vcmp.eq.s32.totalorder %v50, %v333
  %vm362 = vcmp.eq.s32.totalorder %v51, %v332
  %vm363 = vcmp.eq.s32.totalorder %v51, %v333
  %vm364 = vcmp.eq.s32.totalorder %v52, %v332
  %vm365 = vcmp.eq.s32.totalorder %v52, %v333
  %vm366 = vcmp.eq.s32.totalorder %v53, %v332
  %vm367 = vcmp.eq.s32.totalorder %v53, %v333
  %vm368 = vcmp.eq.s32.totalorder %v54, %v332
  %vm369 = vcmp.eq.s32.totalorder %v54, %v333
  %vm370 = vcmp.eq.s32.totalorder %v55, %v332
  %vm371 = vcmp.eq.s32.totalorder %v55, %v333
  %vm372 = vcmp.eq.s32.totalorder %v56, %v332
  %vm373 = vcmp.eq.s32.totalorder %v56, %v333
  %vm374 = vcmp.eq.s32.totalorder %v57, %v332
  %vm375 = vcmp.eq.s32.totalorder %v57, %v333
  %vm376 = vcmp.eq.s32.totalorder %v58, %v332
  %vm377 = vcmp.eq.s32.totalorder %v58, %v333
  %vm378 = vcmp.eq.s32.totalorder %v59, %v332
  %vm379 = vcmp.eq.s32.totalorder %v59, %v333
  %vm380 = vcmp.eq.s32.totalorder %v60, %v332
  %vm381 = vcmp.eq.s32.totalorder %v60, %v333
  %vm382 = vcmp.eq.s32.totalorder %v61, %v332
  %vm383 = vcmp.eq.s32.totalorder %v61, %v333
  %vm384 = vcmp.eq.s32.totalorder %v62, %v332
  %vm385 = vcmp.eq.s32.totalorder %v62, %v333
  %vm386 = vcmp.eq.s32.totalorder %v63, %v332
  %vm387 = vcmp.eq.s32.totalorder %v63, %v333
  %vm388 = vcmp.eq.s32.totalorder %v64, %v332
  %vm389 = vcmp.eq.s32.totalorder %v64, %v333
  %vm390 = vcmp.eq.s32.totalorder %v65, %v332
  %vm391 = vcmp.eq.s32.totalorder %v65, %v333
  %vm392 = vcmp.eq.s32.totalorder %v66, %v332
  %vm393 = vcmp.eq.s32.totalorder %v66, %v333
  %vm394 = vcmp.eq.s32.totalorder %v67, %v332
  %vm395 = vcmp.eq.s32.totalorder %v67, %v333
  %vm396 = vcmp.eq.s32.totalorder %v68, %v332
  %vm397 = vcmp.eq.s32.totalorder %v68, %v333
  %v398 = vsel %vm334, 1.0, 0.0
  %v399 = vsel %vm335, 1.0, 0.0
  %v400 = vsel %vm336, 1.0, 0.0
  %v401 = vsel %vm337, 1.0, 0.0
  %v402 = vsel %vm338, 1.0, 0.0
  %v403 = vsel %vm339, 1.0, 0.0
  %v404 = vsel %vm340, 1.0, 0.0
  %v405 = vsel %vm341, 1.0, 0.0
  %v406 = vsel %vm342, 1.0, 0.0
  %v407 = vsel %vm343, 1.0, 0.0
  %v408 = vsel %vm344, 1.0, 0.0
  %v409 = vsel %vm345, 1.0, 0.0
  %v410 = vsel %vm346, 1.0, 0.0
  %v411 = vsel %vm347, 1.0, 0.0
  %v412 = vsel %vm348, 1.0, 0.0
  %v413 = vsel %vm349, 1.0, 0.0
  %v414 = vsel %vm350, 1.0, 0.0
  %v415 = vsel %vm351, 1.0, 0.0
  %v416 = vsel %vm352, 1.0, 0.0
  %v417 = vsel %vm353, 1.0, 0.0
  %v418 = vsel %vm354, 1.0, 0.0
  %v419 = vsel %vm355, 1.0, 0.0
  %v420 = vsel %vm356, 1.0, 0.0
  %v421 = vsel %vm357, 1.0, 0.0
  %v422 = vsel %vm358, 1.0, 0.0
  %v423 = vsel %vm359, 1.0, 0.0
  %v424 = vsel %vm360, 1.0, 0.0
  %v425 = vsel %vm361, 1.0, 0.0
  %v426 = vsel %vm362, 1.0, 0.0
  %v427 = vsel %vm363, 1.0, 0.0
  %v428 = vsel %vm364, 1.0, 0.0
  %v429 = vsel %vm365, 1.0, 0.0
  %v430 = vsel %vm366, 1.0, 0.0
  %v431 = vsel %vm367, 1.0, 0.0
  %v432 = vsel %vm368, 1.0, 0.0
  %v433 = vsel %vm369, 1.0, 0.0
  %v434 = vsel %vm370, 1.0, 0.0
  %v435 = vsel %vm371, 1.0, 0.0
  %v436 = vsel %vm372, 1.0, 0.0
  %v437 = vsel %vm373, 1.0, 0.0
  %v438 = vsel %vm374, 1.0, 0.0
  %v439 = vsel %vm375, 1.0, 0.0
  %v440 = vsel %vm376, 1.0, 0.0
  %v441 = vsel %vm377, 1.0, 0.0
  %v442 = vsel %vm378, 1.0, 0.0
  %v443 = vsel %vm379, 1.0, 0.0
  %v444 = vsel %vm380, 1.0, 0.0
  %v445 = vsel %vm381, 1.0, 0.0
  %v446 = vsel %vm382, 1.0, 0.0
  %v447 = vsel %vm383, 1.0, 0.0
  %v448 = vsel %vm384, 1.0, 0.0
  %v449 = vsel %vm385, 1.0, 0.0
  %v450 = vsel %vm386, 1.0, 0.0
  %v451 = vsel %vm387, 1.0, 0.0
  %v452 = vsel %vm388, 1.0, 0.0
  %v453 = vsel %vm389, 1.0, 0.0
  %v454 = vsel %vm390, 1.0, 0.0
  %v455 = vsel %vm391, 1.0, 0.0
  %v456 = vsel %vm392, 1.0, 0.0
  %v457 = vsel %vm393, 1.0, 0.0
  %v458 = vsel %vm394, 1.0, 0.0
  %v459 = vsel %vm395, 1.0, 0.0
  %v460 = vsel %vm396, 1.0, 0.0
  %v461 = vsel %vm397, 1.0, 0.0
  %v462 = vadd.s32 %v70, 64
  %v463 = vadd.s32 %v71, 64
  %vm464 = vcmp.eq.s32.totalorder %v37, %v462
  %vm465 = vcmp.eq.s32.totalorder %v37, %v463
  %vm466 = vcmp.eq.s32.totalorder %v38, %v462
  %vm467 = vcmp.eq.s32.totalorder %v38, %v463
  %vm468 = vcmp.eq.s32.totalorder %v39, %v462
  %vm469 = vcmp.eq.s32.totalorder %v39, %v463
  %vm470 = vcmp.eq.s32.totalorder %v40, %v462
  %vm471 = vcmp.eq.s32.totalorder %v40, %v463
  %vm472 = vcmp.eq.s32.totalorder %v41, %v462
  %vm473 = vcmp.eq.s32.totalorder %v41, %v463
  %vm474 = vcmp.eq.s32.totalorder %v42, %v462
  %vm475 = vcmp.eq.s32.totalorder %v42, %v463
  %vm476 = vcmp.eq.s32.totalorder %v43, %v462
  %vm477 = vcmp.eq.s32.totalorder %v43, %v463
  %vm478 = vcmp.eq.s32.totalorder %v44, %v462
  %vm479 = vcmp.eq.s32.totalorder %v44, %v463
  %vm480 = vcmp.eq.s32.totalorder %v45, %v462
  %vm481 = vcmp.eq.s32.totalorder %v45, %v463
  %vm482 = vcmp.eq.s32.totalorder %v46, %v462
  %vm483 = vcmp.eq.s32.totalorder %v46, %v463
  %vm484 = vcmp.eq.s32.totalorder %v47, %v462
  %vm485 = vcmp.eq.s32.totalorder %v47, %v463
  %vm486 = vcmp.eq.s32.totalorder %v48, %v462
  %vm487 = vcmp.eq.s32.totalorder %v48, %v463
  %vm488 = vcmp.eq.s32.totalorder %v49, %v462
  %vm489 = vcmp.eq.s32.totalorder %v49, %v463
  %vm490 = vcmp.eq.s32.totalorder %v50, %v462
  %vm491 = vcmp.eq.s32.totalorder %v50, %v463
  %vm492 = vcmp.eq.s32.totalorder %v51, %v462
  %vm493 = vcmp.eq.s32.totalorder %v51, %v463
  %vm494 = vcmp.eq.s32.totalorder %v52, %v462
  %vm495 = vcmp.eq.s32.totalorder %v52, %v463
  %vm496 = vcmp.eq.s32.totalorder %v53, %v462
  %vm497 = vcmp.eq.s32.totalorder %v53, %v463
  %vm498 = vcmp.eq.s32.totalorder %v54, %v462
  %vm499 = vcmp.eq.s32.totalorder %v54, %v463
  %vm500 = vcmp.eq.s32.totalorder %v55, %v462
  %vm501 = vcmp.eq.s32.totalorder %v55, %v463
  %vm502 = vcmp.eq.s32.totalorder %v56, %v462
  %vm503 = vcmp.eq.s32.totalorder %v56, %v463
  %vm504 = vcmp.eq.s32.totalorder %v57, %v462
  %vm505 = vcmp.eq.s32.totalorder %v57, %v463
  %vm506 = vcmp.eq.s32.totalorder %v58, %v462
  %vm507 = vcmp.eq.s32.totalorder %v58, %v463
  %vm508 = vcmp.eq.s32.totalorder %v59, %v462
  %vm509 = vcmp.eq.s32.totalorder %v59, %v463
  %vm510 = vcmp.eq.s32.totalorder %v60, %v462
  %vm511 = vcmp.eq.s32.totalorder %v60, %v463
  %vm512 = vcmp.eq.s32.totalorder %v61, %v462
  %vm513 = vcmp.eq.s32.totalorder %v61, %v463
  %vm514 = vcmp.eq.s32.totalorder %v62, %v462
  %vm515 = vcmp.eq.s32.totalorder %v62, %v463
  %vm516 = vcmp.eq.s32.totalorder %v63, %v462
  %vm517 = vcmp.eq.s32.totalorder %v63, %v463
  %vm518 = vcmp.eq.s32.totalorder %v64, %v462
  %vm519 = vcmp.eq.s32.totalorder %v64, %v463
  %vm520 = vcmp.eq.s32.totalorder %v65, %v462
  %vm521 = vcmp.eq.s32.totalorder %v65, %v463
  %vm522 = vcmp.eq.s32.totalorder %v66, %v462
  %vm523 = vcmp.eq.s32.totalorder %v66, %v463
  %vm524 = vcmp.eq.s32.totalorder %v67, %v462
  %vm525 = vcmp.eq.s32.totalorder %v67, %v463
  %vm526 = vcmp.eq.s32.totalorder %v68, %v462
  %vm527 = vcmp.eq.s32.totalorder %v68, %v463
  %v528 = vsel %vm464, 1.0, 0.0
  %v529 = vsel %vm465, 1.0, 0.0
  %v530 = vsel %vm466, 1.0, 0.0
  %v531 = vsel %vm467, 1.0, 0.0
  %v532 = vsel %vm468, 1.0, 0.0
  %v533 = vsel %vm469, 1.0, 0.0
  %v534 = vsel %vm470, 1.0, 0.0
  %v535 = vsel %vm471, 1.0, 0.0
  %v536 = vsel %vm472, 1.0, 0.0
  %v537 = vsel %vm473, 1.0, 0.0
  %v538 = vsel %vm474, 1.0, 0.0
  %v539 = vsel %vm475, 1.0, 0.0
  %v540 = vsel %vm476, 1.0, 0.0
  %v541 = vsel %vm477, 1.0, 0.0
  %v542 = vsel %vm478, 1.0, 0.0
  %v543 = vsel %vm479, 1.0, 0.0
  %v544 = vsel %vm480, 1.0, 0.0
  %v545 = vsel %vm481, 1.0, 0.0
  %v546 = vsel %vm482, 1.0, 0.0
  %v547 = vsel %vm483, 1.0, 0.0
  %v548 = vsel %vm484, 1.0, 0.0
  %v549 = vsel %vm485, 1.0, 0.0
  %v550 = vsel %vm486, 1.0, 0.0
  %v551 = vsel %vm487, 1.0, 0.0
  %v552 = vsel %vm488, 1.0, 0.0
  %v553 = vsel %vm489, 1.0, 0.0
  %v554 = vsel %vm490, 1.0, 0.0
  %v555 = vsel %vm491, 1.0, 0.0
  %v556 = vsel %vm492, 1.0, 0.0
  %v557 = vsel %vm493, 1.0, 0.0
  %v558 = vsel %vm494, 1.0, 0.0
  %v559 = vsel %vm495, 1.0, 0.0
  %v560 = vsel %vm496, 1.0, 0.0
  %v561 = vsel %vm497, 1.0, 0.0
  %v562 = vsel %vm498, 1.0, 0.0
  %v563 = vsel %vm499, 1.0, 0.0
  %v564 = vsel %vm500, 1.0, 0.0
  %v565 = vsel %vm501, 1.0, 0.0
  %v566 = vsel %vm502, 1.0, 0.0
  %v567 = vsel %vm503, 1.0, 0.0
  %v568 = vsel %vm504, 1.0, 0.0
  %v569 = vsel %vm505, 1.0, 0.0
  %v570 = vsel %vm506, 1.0, 0.0
  %v571 = vsel %vm507, 1.0, 0.0
  %v572 = vsel %vm508, 1.0, 0.0
  %v573 = vsel %vm509, 1.0, 0.0
  %v574 = vsel %vm510, 1.0, 0.0
  %v575 = vsel %vm511, 1.0, 0.0
  %v576 = vsel %vm512, 1.0, 0.0
  %v577 = vsel %vm513, 1.0, 0.0
  %v578 = vsel %vm514, 1.0, 0.0
  %v579 = vsel %vm515, 1.0, 0.0
  %v580 = vsel %vm516, 1.0, 0.0
  %v581 = vsel %vm517, 1.0, 0.0
  %v582 = vsel %vm518, 1.0, 0.0
  %v583 = vsel %vm519, 1.0, 0.0
  %v584 = vsel %vm520, 1.0, 0.0
  %v585 = vsel %vm521, 1.0, 0.0
  %v586 = vsel %vm522, 1.0, 0.0
  %v587 = vsel %vm523, 1.0, 0.0
  %v588 = vsel %vm524, 1.0, 0.0
  %v589 = vsel %vm525, 1.0, 0.0
  %v590 = vsel %vm526, 1.0, 0.0
  %v591 = vsel %vm527, 1.0, 0.0
  %v592 = vld [vmem:[%s0] sm:$0x3]
  %v593 = vld [vmem:[%s1] sm:$0xff]
  %v594 = vld [vmem:[%s1 + $0x8] sm:$0xff]
  %v595 = vld [vmem:[%s1 + $0x10] sm:$0xff]
  %v596 = vld [vmem:[%s1 + $0x18] sm:$0xff]
  %598 = vset.pattern.permute.xlu0 0
  %599 = vperm.xlu0 %598, %v593
  %v600 = vpop.permute.xlu0 %599
  %603 = vset.pattern.permute.xlu0 0
  %604 = vperm.xlu0 %603, %v594
  %v605 = vpop.permute.xlu0 %604
  %608 = vset.pattern.permute.xlu0 0
  %609 = vperm.xlu0 %608, %v595
  %v610 = vpop.permute.xlu0 %609
  %613 = vset.pattern.permute.xlu0 0
  %614 = vperm.xlu0 %613, %v596
  %v615 = vpop.permute.xlu0 %614
  %v618 = vlaneseq
  %v619 = vshrl.u32 %v618, 7
  %v620 = vsub.s32 0, %v619
  %v621 = vrot.slane %v592, %v620
  %v622 = vlaneseq
  %v623 = vshrl.u32 %v622, 7
  %v624 = vsub.s32 1, %v623
  %v625 = vrot.slane %v592, %v624
  %v628 = vmul.f32 %v600, %v621
  %v629 = vmul.f32 %v600, %v625
  %v630 = vmul.f32 %v605, %v621
  %v631 = vmul.f32 %v605, %v625
  %v632 = vmul.f32 %v610, %v621
  %v633 = vmul.f32 %v610, %v625
  %v634 = vmul.f32 %v615, %v621
  %v635 = vmul.f32 %v615, %v625
  %636 = vmatprep.subr.mxu0 %v169
  %637 = vmatpush1.msra.mxu0 %v168
  %638 = vmatprep.subr.mxu0 %v167
  %639 = vmatpush1.msra.mxu0 %v166
  %640 = vmatprep.subr.mxu0 %v165
  %641 = vmatpush1.msra.mxu0 %v164
  %642 = vmatprep.subr.mxu0 %v163
  %643 = vmatpush1.msra.mxu0 %v162
  %644 = vmatprep.subr.mxu0 %v161
  %645 = vmatpush1.msra.mxu0 %v160
  %646 = vmatprep.subr.mxu0 %v159
  %647 = vmatpush1.msra.mxu0 %v158
  %648 = vmatprep.subr.mxu0 %v157
  %649 = vmatpush1.msra.mxu0 %v156
  %650 = vmatprep.subr.mxu0 %v155
  %651 = vmatpush1.msra.mxu0 %v154
  %652 = vmatprep.subr.mxu0 %v153
  %653 = vmatpush1.msra.mxu0 %v152
  %654 = vmatprep.subr.mxu0 %v151
  %655 = vmatpush1.msra.mxu0 %v150
  %656 = vmatprep.subr.mxu0 %v149
  %657 = vmatpush1.msra.mxu0 %v148
  %658 = vmatprep.subr.mxu0 %v147
  %659 = vmatpush1.msra.mxu0 %v146
  %660 = vmatprep.subr.mxu0 %v145
  %661 = vmatpush1.msra.mxu0 %v144
  %662 = vmatprep.subr.mxu0 %v143
  %663 = vmatpush1.msra.mxu0 %v142
  %664 = vmatprep.subr.mxu0 %v141
  %665 = vmatpush1.msra.mxu0 %v140
  %666 = vmatprep.subr.mxu0 %v139
  %667 = vmatpush1.msra.mxu0 %v138
  %668 = vmatprep.subr.mxu0 %v201
  %669 = vmatpush2.msra.mxu0 %v200
  %670 = vmatprep.subr.mxu0 %v199
  %671 = vmatpush2.msra.mxu0 %v198
  %672 = vmatprep.subr.mxu0 %v197
  %673 = vmatpush2.msra.mxu0 %v196
  %674 = vmatprep.subr.mxu0 %v195
  %675 = vmatpush2.msra.mxu0 %v194
  %676 = vmatprep.subr.mxu0 %v193
  %677 = vmatpush2.msra.mxu0 %v192
  %678 = vmatprep.subr.mxu0 %v191
  %679 = vmatpush2.msra.mxu0 %v190
  %680 = vmatprep.subr.mxu0 %v189
  %681 = vmatpush2.msra.mxu0 %v188
  %682 = vmatprep.subr.mxu0 %v187
  %683 = vmatpush2.msra.mxu0 %v186
  %684 = vmatprep.subr.mxu0 %v185
  %685 = vmatpush2.msra.mxu0 %v184
  %686 = vmatprep.subr.mxu0 %v183
  %687 = vmatpush2.msra.mxu0 %v182
  %688 = vmatprep.subr.mxu0 %v181
  %689 = vmatpush2.msra.mxu0 %v180
  %690 = vmatprep.subr.mxu0 %v179
  %691 = vmatpush2.msra.mxu0 %v178
  %692 = vmatprep.subr.mxu0 %v177
  %693 = vmatpush2.msra.mxu0 %v176
  %694 = vmatprep.subr.mxu0 %v175
  %695 = vmatpush2.msra.mxu0 %v174
  %696 = vmatprep.subr.mxu0 %v173
  %697 = vmatpush2.msra.mxu0 %v172
  %698 = vmatprep.subr.mxu0 %v171
  %699 = vmatpush2.msra.mxu0 %v170
  %700 = vmatprep.mubr.f32.mxu0 %v625
  %701 = vmatmul.mubr.f32.gmra.mxu0 %v621
  %v702 = vpop.f32.mrf.mxu0
  %v703 = vadd.f32 0.0, %v702
  %v704 = vpop.f32.mrf.mxu0
  %v705 = vadd.f32 0.0, %v704
  %706 = vdwg.mxu0
  %s707 = scalar_lea.vmem %s1, 32
  %v708 = vld [vmem:[%s707] sm:$0xff]
  %v709 = vld [vmem:[%s707 + $0x8] sm:$0xff]
  %v710 = vld [vmem:[%s707 + $0x10] sm:$0xff]
  %v711 = vld [vmem:[%s707 + $0x18] sm:$0xff]
  %713 = vset.pattern.permute.xlu0 0
  %714 = vperm.xlu0 %713, %v708
  %v715 = vpop.permute.xlu0 %714
  %718 = vset.pattern.permute.xlu0 0
  %719 = vperm.xlu0 %718, %v709
  %v720 = vpop.permute.xlu0 %719
  %723 = vset.pattern.permute.xlu0 0
  %724 = vperm.xlu0 %723, %v710
  %v725 = vpop.permute.xlu0 %724
  %728 = vset.pattern.permute.xlu0 0
  %729 = vperm.xlu0 %728, %v711
  %v730 = vpop.permute.xlu0 %729
  %v732 = vlaneseq
  %v733 = vshrl.u32 %v732, 7
  %v734 = vsub.s32 0, %v733
  %v735 = vrot.slane %v703, %v734
  %v736 = vlaneseq
  %v737 = vshrl.u32 %v736, 7
  %v738 = vsub.s32 0, %v737
  %v739 = vrot.slane %v705, %v738
  %v740 = vmul.f32 %v715, %v735
  %v741 = vmul.f32 %v715, %v739
  %v742 = vmul.f32 %v720, %v735
  %v743 = vmul.f32 %v720, %v739
  %v744 = vmul.f32 %v725, %v735
  %v745 = vmul.f32 %v725, %v739
  %v746 = vmul.f32 %v730, %v735
  %v747 = vmul.f32 %v730, %v739
  %v748 = vadd.f32 %v628, %v740
  %v749 = vadd.f32 %v629, %v741
  %v750 = vadd.f32 %v630, %v742
  %v751 = vadd.f32 %v631, %v743
  %v752 = vadd.f32 %v632, %v744
  %v753 = vadd.f32 %v633, %v745
  %v754 = vadd.f32 %v634, %v746
  %v755 = vadd.f32 %v635, %v747
  %756 = vmatprep.subr.mxu0 %v299
  %757 = vmatpush1.msra.mxu0 %v298
  %758 = vmatprep.subr.mxu0 %v297
  %759 = vmatpush1.msra.mxu0 %v296
  %760 = vmatprep.subr.mxu0 %v295
  %761 = vmatpush1.msra.mxu0 %v294
  %762 = vmatprep.subr.mxu0 %v293
  %763 = vmatpush1.msra.mxu0 %v292
  %764 = vmatprep.subr.mxu0 %v291
  %765 = vmatpush1.msra.mxu0 %v290
  %766 = vmatprep.subr.mxu0 %v289
  %767 = vmatpush1.msra.mxu0 %v288
  %768 = vmatprep.subr.mxu0 %v287
  %769 = vmatpush1.msra.mxu0 %v286
  %770 = vmatprep.subr.mxu0 %v285
  %771 = vmatpush1.msra.mxu0 %v284
  %772 = vmatprep.subr.mxu0 %v283
  %773 = vmatpush1.msra.mxu0 %v282
  %774 = vmatprep.subr.mxu0 %v281
  %775 = vmatpush1.msra.mxu0 %v280
  %776 = vmatprep.subr.mxu0 %v279
  %777 = vmatpush1.msra.mxu0 %v278
  %778 = vmatprep.subr.mxu0 %v277
  %779 = vmatpush1.msra.mxu0 %v276
  %780 = vmatprep.subr.mxu0 %v275
  %781 = vmatpush1.msra.mxu0 %v274
  %782 = vmatprep.subr.mxu0 %v273
  %783 = vmatpush1.msra.mxu0 %v272
  %784 = vmatprep.subr.mxu0 %v271
  %785 = vmatpush1.msra.mxu0 %v270
  %786 = vmatprep.subr.mxu0 %v269
  %787 = vmatpush1.msra.mxu0 %v268
  %788 = vmatprep.subr.mxu0 %v331
  %789 = vmatpush2.msra.mxu0 %v330
  %790 = vmatprep.subr.mxu0 %v329
  %791 = vmatpush2.msra.mxu0 %v328
  %792 = vmatprep.subr.mxu0 %v327
  %793 = vmatpush2.msra.mxu0 %v326
  %794 = vmatprep.subr.mxu0 %v325
  %795 = vmatpush2.msra.mxu0 %v324
  %796 = vmatprep.subr.mxu0 %v323
  %797 = vmatpush2.msra.mxu0 %v322
  %798 = vmatprep.subr.mxu0 %v321
  %799 = vmatpush2.msra.mxu0 %v320
  %800 = vmatprep.subr.mxu0 %v319
  %801 = vmatpush2.msra.mxu0 %v318
  %802 = vmatprep.subr.mxu0 %v317
  %803 = vmatpush2.msra.mxu0 %v316
  %804 = vmatprep.subr.mxu0 %v315
  %805 = vmatpush2.msra.mxu0 %v314
  %806 = vmatprep.subr.mxu0 %v313
  %807 = vmatpush2.msra.mxu0 %v312
  %808 = vmatprep.subr.mxu0 %v311
  %809 = vmatpush2.msra.mxu0 %v310
  %810 = vmatprep.subr.mxu0 %v309
  %811 = vmatpush2.msra.mxu0 %v308
  %812 = vmatprep.subr.mxu0 %v307
  %813 = vmatpush2.msra.mxu0 %v306
  %814 = vmatprep.subr.mxu0 %v305
  %815 = vmatpush2.msra.mxu0 %v304
  %816 = vmatprep.subr.mxu0 %v303
  %817 = vmatpush2.msra.mxu0 %v302
  %818 = vmatprep.subr.mxu0 %v301
  %819 = vmatpush2.msra.mxu0 %v300
  %820 = vmatprep.mubr.f32.mxu0 %v625
  %821 = vmatmul.mubr.f32.gmra.mxu0 %v621
  %v822 = vpop.f32.mrf.mxu0
  %v823 = vadd.f32 0.0, %v822
  %v824 = vpop.f32.mrf.mxu0
  %v825 = vadd.f32 0.0, %v824
  %826 = vdwg.mxu0
  %s827 = scalar_lea.vmem %s1, 64
  %v828 = vld [vmem:[%s827] sm:$0xff]
  %v829 = vld [vmem:[%s827 + $0x8] sm:$0xff]
  %v830 = vld [vmem:[%s827 + $0x10] sm:$0xff]
  %v831 = vld [vmem:[%s827 + $0x18] sm:$0xff]
  %833 = vset.pattern.permute.xlu0 0
  %834 = vperm.xlu0 %833, %v828
  %v835 = vpop.permute.xlu0 %834
  %838 = vset.pattern.permute.xlu0 0
  %839 = vperm.xlu0 %838, %v829
  %v840 = vpop.permute.xlu0 %839
  %843 = vset.pattern.permute.xlu0 0
  %844 = vperm.xlu0 %843, %v830
  %v845 = vpop.permute.xlu0 %844
  %848 = vset.pattern.permute.xlu0 0
  %849 = vperm.xlu0 %848, %v831
  %v850 = vpop.permute.xlu0 %849
  %v852 = vlaneseq
  %v853 = vshrl.u32 %v852, 7
  %v854 = vsub.s32 0, %v853
  %v855 = vrot.slane %v823, %v854
  %v856 = vlaneseq
  %v857 = vshrl.u32 %v856, 7
  %v858 = vsub.s32 0, %v857
  %v859 = vrot.slane %v825, %v858
  %v860 = vmul.f32 %v835, %v855
  %v861 = vmul.f32 %v835, %v859
  %v862 = vmul.f32 %v840, %v855
  %v863 = vmul.f32 %v840, %v859
  %v864 = vmul.f32 %v845, %v855
  %v865 = vmul.f32 %v845, %v859
  %v866 = vmul.f32 %v850, %v855
  %v867 = vmul.f32 %v850, %v859
  %v868 = vadd.f32 %v748, %v860
  %v869 = vadd.f32 %v749, %v861
  %v870 = vadd.f32 %v750, %v862
  %v871 = vadd.f32 %v751, %v863
  %v872 = vadd.f32 %v752, %v864
  %v873 = vadd.f32 %v753, %v865
  %v874 = vadd.f32 %v754, %v866
  %v875 = vadd.f32 %v755, %v867
  %876 = vmatprep.subr.mxu0 %v429
  %877 = vmatpush1.msra.mxu0 %v428
  %878 = vmatprep.subr.mxu0 %v427
  %879 = vmatpush1.msra.mxu0 %v426
  %880 = vmatprep.subr.mxu0 %v425
  %881 = vmatpush1.msra.mxu0 %v424
  %882 = vmatprep.subr.mxu0 %v423
  %883 = vmatpush1.msra.mxu0 %v422
  %884 = vmatprep.subr.mxu0 %v421
  %885 = vmatpush1.msra.mxu0 %v420
  %886 = vmatprep.subr.mxu0 %v419
  %887 = vmatpush1.msra.mxu0 %v418
  %888 = vmatprep.subr.mxu0 %v417
  %889 = vmatpush1.msra.mxu0 %v416
  %890 = vmatprep.subr.mxu0 %v415
  %891 = vmatpush1.msra.mxu0 %v414
  %892 = vmatprep.subr.mxu0 %v413
  %893 = vmatpush1.msra.mxu0 %v412
  %894 = vmatprep.subr.mxu0 %v411
  %895 = vmatpush1.msra.mxu0 %v410
  %896 = vmatprep.subr.mxu0 %v409
  %897 = vmatpush1.msra.mxu0 %v408
  %898 = vmatprep.subr.mxu0 %v407
  %899 = vmatpush1.msra.mxu0 %v406
  %900 = vmatprep.subr.mxu0 %v405
  %901 = vmatpush1.msra.mxu0 %v404
  %902 = vmatprep.subr.mxu0 %v403
  %903 = vmatpush1.msra.mxu0 %v402
  %904 = vmatprep.subr.mxu0 %v401
  %905 = vmatpush1.msra.mxu0 %v400
  %906 = vmatprep.subr.mxu0 %v399
  %907 = vmatpush1.msra.mxu0 %v398
  %908 = vmatprep.subr.mxu0 %v461
  %909 = vmatpush2.msra.mxu0 %v460
  %910 = vmatprep.subr.mxu0 %v459
  %911 = vmatpush2.msra.mxu0 %v458
  %912 = vmatprep.subr.mxu0 %v457
  %913 = vmatpush2.msra.mxu0 %v456
  %914 = vmatprep.subr.mxu0 %v455
  %915 = vmatpush2.msra.mxu0 %v454
  %916 = vmatprep.subr.mxu0 %v453
  %917 = vmatpush2.msra.mxu0 %v452
  %918 = vmatprep.subr.mxu0 %v451
  %919 = vmatpush2.msra.mxu0 %v450
  %920 = vmatprep.subr.mxu0 %v449
  %921 = vmatpush2.msra.mxu0 %v448
  %922 = vmatprep.subr.mxu0 %v447
  %923 = vmatpush2.msra.mxu0 %v446
  %924 = vmatprep.subr.mxu0 %v445
  %925 = vmatpush2.msra.mxu0 %v444
  %926 = vmatprep.subr.mxu0 %v443
  %927 = vmatpush2.msra.mxu0 %v442
  %928 = vmatprep.subr.mxu0 %v441
  %929 = vmatpush2.msra.mxu0 %v440
  %930 = vmatprep.subr.mxu0 %v439
  %931 = vmatpush2.msra.mxu0 %v438
  %932 = vmatprep.subr.mxu0 %v437
  %933 = vmatpush2.msra.mxu0 %v436
  %934 = vmatprep.subr.mxu0 %v435
  %935 = vmatpush2.msra.mxu0 %v434
  %936 = vmatprep.subr.mxu0 %v433
  %937 = vmatpush2.msra.mxu0 %v432
  %938 = vmatprep.subr.mxu0 %v431
  %939 = vmatpush2.msra.mxu0 %v430
  %940 = vmatprep.mubr.f32.mxu0 %v625
  %941 = vmatmul.mubr.f32.gmra.mxu0 %v621
  %v942 = vpop.f32.mrf.mxu0
  %v943 = vadd.f32 0.0, %v942
  %v944 = vpop.f32.mrf.mxu0
  %v945 = vadd.f32 0.0, %v944
  %946 = vdwg.mxu0
  %s947 = scalar_lea.vmem %s1, 96
  %v948 = vld [vmem:[%s947] sm:$0xff]
  %v949 = vld [vmem:[%s947 + $0x8] sm:$0xff]
  %v950 = vld [vmem:[%s947 + $0x10] sm:$0xff]
  %v951 = vld [vmem:[%s947 + $0x18] sm:$0xff]
  %953 = vset.pattern.permute.xlu0 0
  %954 = vperm.xlu0 %953, %v948
  %v955 = vpop.permute.xlu0 %954
  %958 = vset.pattern.permute.xlu0 0
  %959 = vperm.xlu0 %958, %v949
  %v960 = vpop.permute.xlu0 %959
  %963 = vset.pattern.permute.xlu0 0
  %964 = vperm.xlu0 %963, %v950
  %v965 = vpop.permute.xlu0 %964
  %968 = vset.pattern.permute.xlu0 0
  %969 = vperm.xlu0 %968, %v951
  %v970 = vpop.permute.xlu0 %969
  %v972 = vlaneseq
  %v973 = vshrl.u32 %v972, 7
  %v974 = vsub.s32 0, %v973
  %v975 = vrot.slane %v943, %v974
  %v976 = vlaneseq
  %v977 = vshrl.u32 %v976, 7
  %v978 = vsub.s32 0, %v977
  %v979 = vrot.slane %v945, %v978
  %v980 = vmul.f32 %v955, %v975
  %v981 = vmul.f32 %v955, %v979
  %v982 = vmul.f32 %v960, %v975
  %v983 = vmul.f32 %v960, %v979
  %v984 = vmul.f32 %v965, %v975
  %v985 = vmul.f32 %v965, %v979
  %v986 = vmul.f32 %v970, %v975
  %v987 = vmul.f32 %v970, %v979
  %v988 = vadd.f32 %v868, %v980
  %v989 = vadd.f32 %v869, %v981
  %v990 = vadd.f32 %v870, %v982
  %v991 = vadd.f32 %v871, %v983
  %v992 = vadd.f32 %v872, %v984
  %v993 = vadd.f32 %v873, %v985
  %v994 = vadd.f32 %v874, %v986
  %v995 = vadd.f32 %v875, %v987
  %996 = vmatprep.subr.mxu0 %v559
  %997 = vmatpush1.msra.mxu0 %v558
  %998 = vmatprep.subr.mxu0 %v557
  %999 = vmatpush1.msra.mxu0 %v556
  %1000 = vmatprep.subr.mxu0 %v555
  %1001 = vmatpush1.msra.mxu0 %v554
  %1002 = vmatprep.subr.mxu0 %v553
  %1003 = vmatpush1.msra.mxu0 %v552
  %1004 = vmatprep.subr.mxu0 %v551
  %1005 = vmatpush1.msra.mxu0 %v550
  %1006 = vmatprep.subr.mxu0 %v549
  %1007 = vmatpush1.msra.mxu0 %v548
  %1008 = vmatprep.subr.mxu0 %v547
  %1009 = vmatpush1.msra.mxu0 %v546
  %1010 = vmatprep.subr.mxu0 %v545
  %1011 = vmatpush1.msra.mxu0 %v544
  %1012 = vmatprep.subr.mxu0 %v543
  %1013 = vmatpush1.msra.mxu0 %v542
  %1014 = vmatprep.subr.mxu0 %v541
  %1015 = vmatpush1.msra.mxu0 %v540
  %1016 = vmatprep.subr.mxu0 %v539
  %1017 = vmatpush1.msra.mxu0 %v538
  %1018 = vmatprep.subr.mxu0 %v537
  %1019 = vmatpush1.msra.mxu0 %v536
  %1020 = vmatprep.subr.mxu0 %v535
  %1021 = vmatpush1.msra.mxu0 %v534
  %1022 = vmatprep.subr.mxu0 %v533
  %1023 = vmatpush1.msra.mxu0 %v532
  %1024 = vmatprep.subr.mxu0 %v531
  %1025 = vmatpush1.msra.mxu0 %v530
  %1026 = vmatprep.subr.mxu0 %v529
  %1027 = vmatpush1.msra.mxu0 %v528
  %1028 = vmatprep.subr.mxu0 %v591
  %1029 = vmatpush2.msra.mxu0 %v590
  %1030 = vmatprep.subr.mxu0 %v589
  %1031 = vmatpush2.msra.mxu0 %v588
  %1032 = vmatprep.subr.mxu0 %v587
  %1033 = vmatpush2.msra.mxu0 %v586
  %1034 = vmatprep.subr.mxu0 %v585
  %1035 = vmatpush2.msra.mxu0 %v584
  %1036 = vmatprep.subr.mxu0 %v583
  %1037 = vmatpush2.msra.mxu0 %v582
  %1038 = vmatprep.subr.mxu0 %v581
  %1039 = vmatpush2.msra.mxu0 %v580
  %1040 = vmatprep.subr.mxu0 %v579
  %1041 = vmatpush2.msra.mxu0 %v578
  %1042 = vmatprep.subr.mxu0 %v577
  %1043 = vmatpush2.msra.mxu0 %v576
  %1044 = vmatprep.subr.mxu0 %v575
  %1045 = vmatpush2.msra.mxu0 %v574
  %1046 = vmatprep.subr.mxu0 %v573
  %1047 = vmatpush2.msra.mxu0 %v572
  %1048 = vmatprep.subr.mxu0 %v571
  %1049 = vmatpush2.msra.mxu0 %v570
  %1050 = vmatprep.subr.mxu0 %v569
  %1051 = vmatpush2.msra.mxu0 %v568
  %1052 = vmatprep.subr.mxu0 %v567
  %1053 = vmatpush2.msra.mxu0 %v566
  %1054 = vmatprep.subr.mxu0 %v565
  %1055 = vmatpush2.msra.mxu0 %v564
  %1056 = vmatprep.subr.mxu0 %v563
  %1057 = vmatpush2.msra.mxu0 %v562
  %1058 = vmatprep.subr.mxu0 %v561
  %1059 = vmatpush2.msra.mxu0 %v560
  %1060 = vmatprep.mubr.f32.mxu0 %v625
  %1061 = vmatmul.mubr.f32.gmra.mxu0 %v621
  %v1062 = vpop.f32.mrf.mxu0
  %v1063 = vadd.f32 0.0, %v1062
  %v1064 = vpop.f32.mrf.mxu0
  %v1065 = vadd.f32 0.0, %v1064
  %1066 = vdwg.mxu0
  %s1067 = scalar_lea.vmem %s1, 128
  %v1068 = vld [vmem:[%s1067] sm:$0xff]
  %v1069 = vld [vmem:[%s1067 + $0x8] sm:$0xff]
  %v1070 = vld [vmem:[%s1067 + $0x10] sm:$0xff]
  %v1071 = vld [vmem:[%s1067 + $0x18] sm:$0xff]
  %1073 = vset.pattern.permute.xlu0 0
  %1074 = vperm.xlu0 %1073, %v1068
  %v1075 = vpop.permute.xlu0 %1074
  %1078 = vset.pattern.permute.xlu0 0
  %1079 = vperm.xlu0 %1078, %v1069
  %v1080 = vpop.permute.xlu0 %1079
  %1083 = vset.pattern.permute.xlu0 0
  %1084 = vperm.xlu0 %1083, %v1070
  %v1085 = vpop.permute.xlu0 %1084
  %1088 = vset.pattern.permute.xlu0 0
  %1089 = vperm.xlu0 %1088, %v1071
  %v1090 = vpop.permute.xlu0 %1089
  %v1092 = vlaneseq
  %v1093 = vshrl.u32 %v1092, 7
  %v1094 = vsub.s32 0, %v1093
  %v1095 = vrot.slane %v1063, %v1094
  %v1096 = vlaneseq
  %v1097 = vshrl.u32 %v1096, 7
  %v1098 = vsub.s32 0, %v1097
  %v1099 = vrot.slane %v1065, %v1098
  %v1100 = vmul.f32 %v1075, %v1095
  %v1101 = vmul.f32 %v1075, %v1099
  %v1102 = vmul.f32 %v1080, %v1095
  %v1103 = vmul.f32 %v1080, %v1099
  %v1104 = vmul.f32 %v1085, %v1095
  %v1105 = vmul.f32 %v1085, %v1099
  %v1106 = vmul.f32 %v1090, %v1095
  %v1107 = vmul.f32 %v1090, %v1099
  %v1108 = vadd.f32 %v988, %v1100
  %v1109 = vadd.f32 %v989, %v1101
  %v1110 = vadd.f32 %v990, %v1102
  %v1111 = vadd.f32 %v991, %v1103
  %v1112 = vadd.f32 %v992, %v1104
  %v1113 = vadd.f32 %v993, %v1105
  %v1114 = vadd.f32 %v994, %v1106
  %v1115 = vadd.f32 %v995, %v1107
  %v1116 = vld [vmem:[%s2] sm:$0xff]
  %v1117 = vld [vmem:[%s2 + $0x8] sm:$0xff]
  %v1118 = vld [vmem:[%s2 + $0x10] sm:$0xff]
  %v1119 = vld [vmem:[%s2 + $0x18] sm:$0xff]
  %1121 = vset.pattern.permute.xlu0 0
  %1122 = vperm.xlu0 %1121, %v1116
  %v1123 = vpop.permute.xlu0 %1122
  %1126 = vset.pattern.permute.xlu0 0
  %1127 = vperm.xlu0 %1126, %v1117
  %v1128 = vpop.permute.xlu0 %1127
  %1131 = vset.pattern.permute.xlu0 0
  %1132 = vperm.xlu0 %1131, %v1118
  %v1133 = vpop.permute.xlu0 %1132
  %1136 = vset.pattern.permute.xlu0 0
  %1137 = vperm.xlu0 %1136, %v1119
  %v1138 = vpop.permute.xlu0 %1137
  %v1140 = vadd.f32 %v1108, %v1123
  %v1141 = vadd.f32 %v1109, %v1123
  %v1142 = vadd.f32 %v1110, %v1128
  %v1143 = vadd.f32 %v1111, %v1128
  %v1144 = vadd.f32 %v1112, %v1133
  %v1145 = vadd.f32 %v1113, %v1133
  %v1146 = vadd.f32 %v1114, %v1138
  %v1147 = vadd.f32 %v1115, %v1138
  %v1148 = vmax.f32 %v1140, 0.0
  %v1149 = vmax.f32 %v1141, 0.0
  %v1150 = vmax.f32 %v1142, 0.0
  %v1151 = vmax.f32 %v1143, 0.0
  %v1152 = vmax.f32 %v1144, 0.0
  %v1153 = vmax.f32 %v1145, 0.0
  %v1154 = vmax.f32 %v1146, 0.0
  %v1155 = vmax.f32 %v1147, 0.0
  %v1156 = vld [vmem:[%s3] sm:$0xff]
  %v1157 = vld [vmem:[%s3 + $0x8] sm:$0xff]
  %v1158 = vld [vmem:[%s3 + $0x10] sm:$0xff]
  %v1159 = vld [vmem:[%s3 + $0x18] sm:$0xff]
  %s1160 = scalar_lea.vmem %s3, 32
  %v1161 = vld [vmem:[%s1160] sm:$0xff]
  %v1162 = vld [vmem:[%s1160 + $0x8] sm:$0xff]
  %v1163 = vld [vmem:[%s1160 + $0x10] sm:$0xff]
  %v1164 = vld [vmem:[%s1160 + $0x18] sm:$0xff]
  %1165 = vmatprep.subr.mxu0 %v169
  %1166 = vmatpush1.msra.mxu0 %v168
  %1167 = vmatprep.subr.mxu0 %v167
  %1168 = vmatpush1.msra.mxu0 %v166
  %1169 = vmatprep.subr.mxu0 %v165
  %1170 = vmatpush1.msra.mxu0 %v164
  %1171 = vmatprep.subr.mxu0 %v163
  %1172 = vmatpush1.msra.mxu0 %v162
  %1173 = vmatprep.subr.mxu0 %v161
  %1174 = vmatpush1.msra.mxu0 %v160
  %1175 = vmatprep.subr.mxu0 %v159
  %1176 = vmatpush1.msra.mxu0 %v158
  %1177 = vmatprep.subr.mxu0 %v157
  %1178 = vmatpush1.msra.mxu0 %v156
  %1179 = vmatprep.subr.mxu0 %v155
  %1180 = vmatpush1.msra.mxu0 %v154
  %1181 = vmatprep.subr.mxu0 %v153
  %1182 = vmatpush1.msra.mxu0 %v152
  %1183 = vmatprep.subr.mxu0 %v151
  %1184 = vmatpush1.msra.mxu0 %v150
  %1185 = vmatprep.subr.mxu0 %v149
  %1186 = vmatpush1.msra.mxu0 %v148
  %1187 = vmatprep.subr.mxu0 %v147
  %1188 = vmatpush1.msra.mxu0 %v146
  %1189 = vmatprep.subr.mxu0 %v145
  %1190 = vmatpush1.msra.mxu0 %v144
  %1191 = vmatprep.subr.mxu0 %v143
  %1192 = vmatpush1.msra.mxu0 %v142
  %1193 = vmatprep.subr.mxu0 %v141
  %1194 = vmatpush1.msra.mxu0 %v140
  %1195 = vmatprep.subr.mxu0 %v139
  %1196 = vmatpush1.msra.mxu0 %v138
  %1197 = vmatprep.subr.mxu0 %v201
  %1198 = vmatpush2.msra.mxu0 %v200
  %1199 = vmatprep.subr.mxu0 %v199
  %1200 = vmatpush2.msra.mxu0 %v198
  %1201 = vmatprep.subr.mxu0 %v197
  %1202 = vmatpush2.msra.mxu0 %v196
  %1203 = vmatprep.subr.mxu0 %v195
  %1204 = vmatpush2.msra.mxu0 %v194
  %1205 = vmatprep.subr.mxu0 %v193
  %1206 = vmatpush2.msra.mxu0 %v192
  %1207 = vmatprep.subr.mxu0 %v191
  %1208 = vmatpush2.msra.mxu0 %v190
  %1209 = vmatprep.subr.mxu0 %v189
  %1210 = vmatpush2.msra.mxu0 %v188
  %1211 = vmatprep.subr.mxu0 %v187
  %1212 = vmatpush2.msra.mxu0 %v186
  %1213 = vmatprep.subr.mxu0 %v185
  %1214 = vmatpush2.msra.mxu0 %v184
  %1215 = vmatprep.subr.mxu0 %v183
  %1216 = vmatpush2.msra.mxu0 %v182
  %1217 = vmatprep.subr.mxu0 %v181
  %1218 = vmatpush2.msra.mxu0 %v180
  %1219 = vmatprep.subr.mxu0 %v179
  %1220 = vmatpush2.msra.mxu0 %v178
  %1221 = vmatprep.subr.mxu0 %v177
  %1222 = vmatpush2.msra.mxu0 %v176
  %1223 = vmatprep.subr.mxu0 %v175
  %1224 = vmatpush2.msra.mxu0 %v174
  %1225 = vmatprep.subr.mxu0 %v173
  %1226 = vmatpush2.msra.mxu0 %v172
  %1227 = vmatprep.subr.mxu0 %v171
  %1228 = vmatpush2.msra.mxu0 %v170
  %1229 = vmatprep.mubr.f32.mxu0 %v1149
  %1230 = vmatmul.mubr.f32.gmra.mxu0 %v1148
  %v1231 = vpop.f32.mrf.mxu0
  %v1232 = vadd.f32 0.0, %v1231
  %v1233 = vpop.f32.mrf.mxu0
  %v1234 = vadd.f32 0.0, %v1233
  %1235 = vmatprep.mubr.f32.mxu0 %v1151
  %1236 = vmatmul.mubr.f32.gmra.mxu0 %v1150
  %v1237 = vpop.f32.mrf.mxu0
  %v1238 = vadd.f32 0.0, %v1237
  %v1239 = vpop.f32.mrf.mxu0
  %v1240 = vadd.f32 0.0, %v1239
  %1241 = vmatprep.mubr.f32.mxu0 %v1153
  %1242 = vmatmul.mubr.f32.gmra.mxu0 %v1152
  %v1243 = vpop.f32.mrf.mxu0
  %v1244 = vadd.f32 0.0, %v1243
  %v1245 = vpop.f32.mrf.mxu0
  %v1246 = vadd.f32 0.0, %v1245
  %1247 = vmatprep.mubr.f32.mxu0 %v1155
  %1248 = vmatmul.mubr.f32.gmra.mxu0 %v1154
  %v1249 = vpop.f32.mrf.mxu0
  %v1250 = vadd.f32 0.0, %v1249
  %v1251 = vpop.f32.mrf.mxu0
  %v1252 = vadd.f32 0.0, %v1251
  %1253 = vdwg.mxu0
  %vm1254 = vcmask 261120
  %v1256 = vsel %vm1254, %v1161, 0
  %v1259 = vsel %vm1254, %v1162, 0
  %v1262 = vsel %vm1254, %v1163, 0
  %v1265 = vsel %vm1254, %v1164, 0
  %1267 = vmatprep.subr.mxu0 0.0
  %1268 = vmatpush1.msra.mxu0 0.0
  %1269 = vmatprep.subr.mxu0 0.0
  %1270 = vmatpush1.msra.mxu0 0.0
  %1271 = vmatprep.subr.mxu0 0.0
  %1272 = vmatpush1.msra.mxu0 0.0
  %1273 = vmatprep.subr.mxu0 0.0
  %1274 = vmatpush1.msra.mxu0 0.0
  %1275 = vmatprep.subr.mxu0 0.0
  %1276 = vmatpush1.msra.mxu0 0.0
  %1277 = vmatprep.subr.mxu0 0.0
  %1278 = vmatpush1.msra.mxu0 0.0
  %1279 = vmatprep.subr.mxu0 0.0
  %1280 = vmatpush1.msra.mxu0 0.0
  %1281 = vmatprep.subr.mxu0 0.0
  %1282 = vmatpush1.msra.mxu0 0.0
  %1283 = vmatprep.subr.mxu0 0.0
  %1284 = vmatpush1.msra.mxu0 0.0
  %1285 = vmatprep.subr.mxu0 0.0
  %1286 = vmatpush1.msra.mxu0 0.0
  %1287 = vmatprep.subr.mxu0 0.0
  %1288 = vmatpush1.msra.mxu0 0.0
  %1289 = vmatprep.subr.mxu0 0.0
  %1290 = vmatpush1.msra.mxu0 0.0
  %1291 = vmatprep.subr.mxu0 %v1252
  %1292 = vmatpush1.msra.mxu0 %v1250
  %1293 = vmatprep.subr.mxu0 %v1246
  %1294 = vmatpush1.msra.mxu0 %v1244
  %1295 = vmatprep.subr.mxu0 %v1240
  %1296 = vmatpush1.msra.mxu0 %v1238
  %1297 = vmatprep.subr.mxu0 %v1234
  %1298 = vmatpush1.msra.mxu0 %v1232
  %1299 = vmatprep.subr.mxu0 0.0
  %1300 = vmatpush2.msra.mxu0 0.0
  %1301 = vmatprep.subr.mxu0 0.0
  %1302 = vmatpush2.msra.mxu0 0.0
  %1303 = vmatprep.subr.mxu0 0.0
  %1304 = vmatpush2.msra.mxu0 0.0
  %1305 = vmatprep.subr.mxu0 0.0
  %1306 = vmatpush2.msra.mxu0 0.0
  %1307 = vmatprep.subr.mxu0 0.0
  %1308 = vmatpush2.msra.mxu0 0.0
  %1309 = vmatprep.subr.mxu0 0.0
  %1310 = vmatpush2.msra.mxu0 0.0
  %1311 = vmatprep.subr.mxu0 0.0
  %1312 = vmatpush2.msra.mxu0 0.0
  %1313 = vmatprep.subr.mxu0 0.0
  %1314 = vmatpush2.msra.mxu0 0.0
  %1315 = vmatprep.subr.mxu0 0.0
  %1316 = vmatpush2.msra.mxu0 0.0
  %1317 = vmatprep.subr.mxu0 0.0
  %1318 = vmatpush2.msra.mxu0 0.0
  %1319 = vmatprep.subr.mxu0 0.0
  %1320 = vmatpush2.msra.mxu0 0.0
  %1321 = vmatprep.subr.mxu0 0.0
  %1322 = vmatpush2.msra.mxu0 0.0
  %1323 = vmatprep.subr.mxu0 0.0
  %1324 = vmatpush2.msra.mxu0 0.0
  %1325 = vmatprep.subr.mxu0 0.0
  %1326 = vmatpush2.msra.mxu0 0.0
  %1327 = vmatprep.subr.mxu0 0.0
  %1328 = vmatpush2.msra.mxu0 0.0
  %1329 = vmatprep.subr.mxu0 0.0
  %1330 = vmatpush2.msra.mxu0 0.0
  %1331 = vmatprep.mubr.f32.mxu0 0.0
  %1332 = vmatmul.mubr.f32.gmra.mxu0 %v1256
  %v1333 = vpop.f32.mrf.mxu0
  %v1334 = vadd.f32 0.0, %v1333
  %v1335 = vpop.f32.mrf.mxu0
  %v1336 = vadd.f32 0.0, %v1335
  %1337 = vmatprep.mubr.f32.mxu0 0.0
  %1338 = vmatmul.mubr.f32.gmra.mxu0 %v1259
  %v1339 = vpop.f32.mrf.mxu0
  %v1340 = vadd.f32 0.0, %v1339
  %v1341 = vpop.f32.mrf.mxu0
  %v1342 = vadd.f32 0.0, %v1341
  %1343 = vmatprep.mubr.f32.mxu0 0.0
  %1344 = vmatmul.mubr.f32.gmra.mxu0 %v1262
  %v1345 = vpop.f32.mrf.mxu0
  %v1346 = vadd.f32 0.0, %v1345
  %v1347 = vpop.f32.mrf.mxu0
  %v1348 = vadd.f32 0.0, %v1347
  %1349 = vmatprep.mubr.f32.mxu0 0.0
  %1350 = vmatmul.mubr.f32.gmra.mxu0 %v1265
  %v1351 = vpop.f32.mrf.mxu0
  %v1352 = vadd.f32 0.0, %v1351
  %v1353 = vpop.f32.mrf.mxu0
  %v1354 = vadd.f32 0.0, %v1353
  %1355 = vdwg.mxu0
  %v1357 = vsel %vm1254, %v1156, 0
  %v1360 = vsel %vm1254, %v1157, 0
  %v1363 = vsel %vm1254, %v1158, 0
  %v1366 = vsel %vm1254, %v1159, 0
  %1368 = vmatprep.subr.mxu0 0.0
  %1369 = vmatpush1.msra.mxu0 0.0
  %1370 = vmatprep.subr.mxu0 0.0
  %1371 = vmatpush1.msra.mxu0 0.0
  %1372 = vmatprep.subr.mxu0 0.0
  %1373 = vmatpush1.msra.mxu0 0.0
  %1374 = vmatprep.subr.mxu0 0.0
  %1375 = vmatpush1.msra.mxu0 0.0
  %1376 = vmatprep.subr.mxu0 0.0
  %1377 = vmatpush1.msra.mxu0 0.0
  %1378 = vmatprep.subr.mxu0 0.0
  %1379 = vmatpush1.msra.mxu0 0.0
  %1380 = vmatprep.subr.mxu0 0.0
  %1381 = vmatpush1.msra.mxu0 0.0
  %1382 = vmatprep.subr.mxu0 0.0
  %1383 = vmatpush1.msra.mxu0 0.0
  %1384 = vmatprep.subr.mxu0 0.0
  %1385 = vmatpush1.msra.mxu0 0.0
  %1386 = vmatprep.subr.mxu0 0.0
  %1387 = vmatpush1.msra.mxu0 0.0
  %1388 = vmatprep.subr.mxu0 0.0
  %1389 = vmatpush1.msra.mxu0 0.0
  %1390 = vmatprep.subr.mxu0 0.0
  %1391 = vmatpush1.msra.mxu0 0.0
  %1392 = vmatprep.subr.mxu0 %v1155
  %1393 = vmatpush1.msra.mxu0 %v1154
  %1394 = vmatprep.subr.mxu0 %v1153
  %1395 = vmatpush1.msra.mxu0 %v1152
  %1396 = vmatprep.subr.mxu0 %v1151
  %1397 = vmatpush1.msra.mxu0 %v1150
  %1398 = vmatprep.subr.mxu0 %v1149
  %1399 = vmatpush1.msra.mxu0 %v1148
  %1400 = vmatprep.subr.mxu0 0.0
  %1401 = vmatpush2.msra.mxu0 0.0
  %1402 = vmatprep.subr.mxu0 0.0
  %1403 = vmatpush2.msra.mxu0 0.0
  %1404 = vmatprep.subr.mxu0 0.0
  %1405 = vmatpush2.msra.mxu0 0.0
  %1406 = vmatprep.subr.mxu0 0.0
  %1407 = vmatpush2.msra.mxu0 0.0
  %1408 = vmatprep.subr.mxu0 0.0
  %1409 = vmatpush2.msra.mxu0 0.0
  %1410 = vmatprep.subr.mxu0 0.0
  %1411 = vmatpush2.msra.mxu0 0.0
  %1412 = vmatprep.subr.mxu0 0.0
  %1413 = vmatpush2.msra.mxu0 0.0
  %1414 = vmatprep.subr.mxu0 0.0
  %1415 = vmatpush2.msra.mxu0 0.0
  %1416 = vmatprep.subr.mxu0 0.0
  %1417 = vmatpush2.msra.mxu0 0.0
  %1418 = vmatprep.subr.mxu0 0.0
  %1419 = vmatpush2.msra.mxu0 0.0
  %1420 = vmatprep.subr.mxu0 0.0
  %1421 = vmatpush2.msra.mxu0 0.0
  %1422 = vmatprep.subr.mxu0 0.0
  %1423 = vmatpush2.msra.mxu0 0.0
  %1424 = vmatprep.subr.mxu0 0.0
  %1425 = vmatpush2.msra.mxu0 0.0
  %1426 = vmatprep.subr.mxu0 0.0
  %1427 = vmatpush2.msra.mxu0 0.0
  %1428 = vmatprep.subr.mxu0 0.0
  %1429 = vmatpush2.msra.mxu0 0.0
  %1430 = vmatprep.subr.mxu0 0.0
  %1431 = vmatpush2.msra.mxu0 0.0
  %1432 = vmatprep.mubr.f32.mxu0 0.0
  %1433 = vmatmul.mubr.f32.gmra.mxu0 %v1357
  %v1434 = vpop.f32.mrf.mxu0
  %v1435 = vadd.f32 %v1334, %v1434
  %v1436 = vpop.f32.mrf.mxu0
  %v1437 = vadd.f32 %v1336, %v1436
  %1438 = vmatprep.mubr.f32.mxu0 0.0
  %1439 = vmatmul.mubr.f32.gmra.mxu0 %v1360
  %v1440 = vpop.f32.mrf.mxu0
  %v1441 = vadd.f32 %v1340, %v1440
  %v1442 = vpop.f32.mrf.mxu0
  %v1443 = vadd.f32 %v1342, %v1442
  %1444 = vmatprep.mubr.f32.mxu0 0.0
  %1445 = vmatmul.mubr.f32.gmra.mxu0 %v1363
  %v1446 = vpop.f32.mrf.mxu0
  %v1447 = vadd.f32 %v1346, %v1446
  %v1448 = vpop.f32.mrf.mxu0
  %v1449 = vadd.f32 %v1348, %v1448
  %1450 = vmatprep.mubr.f32.mxu0 0.0
  %1451 = vmatmul.mubr.f32.gmra.mxu0 %v1366
  %v1452 = vpop.f32.mrf.mxu0
  %v1453 = vadd.f32 %v1352, %v1452
  %v1454 = vpop.f32.mrf.mxu0
  %v1455 = vadd.f32 %v1354, %v1454
  %1456 = vdwg.mxu0
  %s1457 = scalar_lea.vmem %s3, 64
  %v1458 = vld [vmem:[%s1457] sm:$0xff]
  %v1459 = vld [vmem:[%s1457 + $0x8] sm:$0xff]
  %v1460 = vld [vmem:[%s1457 + $0x10] sm:$0xff]
  %v1461 = vld [vmem:[%s1457 + $0x18] sm:$0xff]
  %1462 = vmatprep.subr.mxu0 %v299
  %1463 = vmatpush1.msra.mxu0 %v298
  %1464 = vmatprep.subr.mxu0 %v297
  %1465 = vmatpush1.msra.mxu0 %v296
  %1466 = vmatprep.subr.mxu0 %v295
  %1467 = vmatpush1.msra.mxu0 %v294
  %1468 = vmatprep.subr.mxu0 %v293
  %1469 = vmatpush1.msra.mxu0 %v292
  %1470 = vmatprep.subr.mxu0 %v291
  %1471 = vmatpush1.msra.mxu0 %v290
  %1472 = vmatprep.subr.mxu0 %v289
  %1473 = vmatpush1.msra.mxu0 %v288
  %1474 = vmatprep.subr.mxu0 %v287
  %1475 = vmatpush1.msra.mxu0 %v286
  %1476 = vmatprep.subr.mxu0 %v285
  %1477 = vmatpush1.msra.mxu0 %v284
  %1478 = vmatprep.subr.mxu0 %v283
  %1479 = vmatpush1.msra.mxu0 %v282
  %1480 = vmatprep.subr.mxu0 %v281
  %1481 = vmatpush1.msra.mxu0 %v280
  %1482 = vmatprep.subr.mxu0 %v279
  %1483 = vmatpush1.msra.mxu0 %v278
  %1484 = vmatprep.subr.mxu0 %v277
  %1485 = vmatpush1.msra.mxu0 %v276
  %1486 = vmatprep.subr.mxu0 %v275
  %1487 = vmatpush1.msra.mxu0 %v274
  %1488 = vmatprep.subr.mxu0 %v273
  %1489 = vmatpush1.msra.mxu0 %v272
  %1490 = vmatprep.subr.mxu0 %v271
  %1491 = vmatpush1.msra.mxu0 %v270
  %1492 = vmatprep.subr.mxu0 %v269
  %1493 = vmatpush1.msra.mxu0 %v268
  %1494 = vmatprep.subr.mxu0 %v331
  %1495 = vmatpush2.msra.mxu0 %v330
  %1496 = vmatprep.subr.mxu0 %v329
  %1497 = vmatpush2.msra.mxu0 %v328
  %1498 = vmatprep.subr.mxu0 %v327
  %1499 = vmatpush2.msra.mxu0 %v326
  %1500 = vmatprep.subr.mxu0 %v325
  %1501 = vmatpush2.msra.mxu0 %v324
  %1502 = vmatprep.subr.mxu0 %v323
  %1503 = vmatpush2.msra.mxu0 %v322
  %1504 = vmatprep.subr.mxu0 %v321
  %1505 = vmatpush2.msra.mxu0 %v320
  %1506 = vmatprep.subr.mxu0 %v319
  %1507 = vmatpush2.msra.mxu0 %v318
  %1508 = vmatprep.subr.mxu0 %v317
  %1509 = vmatpush2.msra.mxu0 %v316
  %1510 = vmatprep.subr.mxu0 %v315
  %1511 = vmatpush2.msra.mxu0 %v314
  %1512 = vmatprep.subr.mxu0 %v313
  %1513 = vmatpush2.msra.mxu0 %v312
  %1514 = vmatprep.subr.mxu0 %v311
  %1515 = vmatpush2.msra.mxu0 %v310
  %1516 = vmatprep.subr.mxu0 %v309
  %1517 = vmatpush2.msra.mxu0 %v308
  %1518 = vmatprep.subr.mxu0 %v307
  %1519 = vmatpush2.msra.mxu0 %v306
  %1520 = vmatprep.subr.mxu0 %v305
  %1521 = vmatpush2.msra.mxu0 %v304
  %1522 = vmatprep.subr.mxu0 %v303
  %1523 = vmatpush2.msra.mxu0 %v302
  %1524 = vmatprep.subr.mxu0 %v301
  %1525 = vmatpush2.msra.mxu0 %v300
  %1526 = vmatprep.mubr.f32.mxu0 %v1149
  %1527 = vmatmul.mubr.f32.gmra.mxu0 %v1148
  %v1528 = vpop.f32.mrf.mxu0
  %v1529 = vadd.f32 0.0, %v1528
  %v1530 = vpop.f32.mrf.mxu0
  %v1531 = vadd.f32 0.0, %v1530
  %1532 = vmatprep.mubr.f32.mxu0 %v1151
  %1533 = vmatmul.mubr.f32.gmra.mxu0 %v1150
  %v1534 = vpop.f32.mrf.mxu0
  %v1535 = vadd.f32 0.0, %v1534
  %v1536 = vpop.f32.mrf.mxu0
  %v1537 = vadd.f32 0.0, %v1536
  %1538 = vmatprep.mubr.f32.mxu0 %v1153
  %1539 = vmatmul.mubr.f32.gmra.mxu0 %v1152
  %v1540 = vpop.f32.mrf.mxu0
  %v1541 = vadd.f32 0.0, %v1540
  %v1542 = vpop.f32.mrf.mxu0
  %v1543 = vadd.f32 0.0, %v1542
  %1544 = vmatprep.mubr.f32.mxu0 %v1155
  %1545 = vmatmul.mubr.f32.gmra.mxu0 %v1154
  %v1546 = vpop.f32.mrf.mxu0
  %v1547 = vadd.f32 0.0, %v1546
  %v1548 = vpop.f32.mrf.mxu0
  %v1549 = vadd.f32 0.0, %v1548
  %1550 = vdwg.mxu0
  %v1552 = vsel %vm1254, %v1458, 0
  %v1555 = vsel %vm1254, %v1459, 0
  %v1558 = vsel %vm1254, %v1460, 0
  %v1561 = vsel %vm1254, %v1461, 0
  %1563 = vmatprep.subr.mxu0 0.0
  %1564 = vmatpush1.msra.mxu0 0.0
  %1565 = vmatprep.subr.mxu0 0.0
  %1566 = vmatpush1.msra.mxu0 0.0
  %1567 = vmatprep.subr.mxu0 0.0
  %1568 = vmatpush1.msra.mxu0 0.0
  %1569 = vmatprep.subr.mxu0 0.0
  %1570 = vmatpush1.msra.mxu0 0.0
  %1571 = vmatprep.subr.mxu0 0.0
  %1572 = vmatpush1.msra.mxu0 0.0
  %1573 = vmatprep.subr.mxu0 0.0
  %1574 = vmatpush1.msra.mxu0 0.0
  %1575 = vmatprep.subr.mxu0 0.0
  %1576 = vmatpush1.msra.mxu0 0.0
  %1577 = vmatprep.subr.mxu0 0.0
  %1578 = vmatpush1.msra.mxu0 0.0
  %1579 = vmatprep.subr.mxu0 0.0
  %1580 = vmatpush1.msra.mxu0 0.0
  %1581 = vmatprep.subr.mxu0 0.0
  %1582 = vmatpush1.msra.mxu0 0.0
  %1583 = vmatprep.subr.mxu0 0.0
  %1584 = vmatpush1.msra.mxu0 0.0
  %1585 = vmatprep.subr.mxu0 0.0
  %1586 = vmatpush1.msra.mxu0 0.0
  %1587 = vmatprep.subr.mxu0 %v1549
  %1588 = vmatpush1.msra.mxu0 %v1547
  %1589 = vmatprep.subr.mxu0 %v1543
  %1590 = vmatpush1.msra.mxu0 %v1541
  %1591 = vmatprep.subr.mxu0 %v1537
  %1592 = vmatpush1.msra.mxu0 %v1535
  %1593 = vmatprep.subr.mxu0 %v1531
  %1594 = vmatpush1.msra.mxu0 %v1529
  %1595 = vmatprep.subr.mxu0 0.0
  %1596 = vmatpush2.msra.mxu0 0.0
  %1597 = vmatprep.subr.mxu0 0.0
  %1598 = vmatpush2.msra.mxu0 0.0
  %1599 = vmatprep.subr.mxu0 0.0
  %1600 = vmatpush2.msra.mxu0 0.0
  %1601 = vmatprep.subr.mxu0 0.0
  %1602 = vmatpush2.msra.mxu0 0.0
  %1603 = vmatprep.subr.mxu0 0.0
  %1604 = vmatpush2.msra.mxu0 0.0
  %1605 = vmatprep.subr.mxu0 0.0
  %1606 = vmatpush2.msra.mxu0 0.0
  %1607 = vmatprep.subr.mxu0 0.0
  %1608 = vmatpush2.msra.mxu0 0.0
  %1609 = vmatprep.subr.mxu0 0.0
  %1610 = vmatpush2.msra.mxu0 0.0
  %1611 = vmatprep.subr.mxu0 0.0
  %1612 = vmatpush2.msra.mxu0 0.0
  %1613 = vmatprep.subr.mxu0 0.0
  %1614 = vmatpush2.msra.mxu0 0.0
  %1615 = vmatprep.subr.mxu0 0.0
  %1616 = vmatpush2.msra.mxu0 0.0
  %1617 = vmatprep.subr.mxu0 0.0
  %1618 = vmatpush2.msra.mxu0 0.0
  %1619 = vmatprep.subr.mxu0 0.0
  %1620 = vmatpush2.msra.mxu0 0.0
  %1621 = vmatprep.subr.mxu0 0.0
  %1622 = vmatpush2.msra.mxu0 0.0
  %1623 = vmatprep.subr.mxu0 0.0
  %1624 = vmatpush2.msra.mxu0 0.0
  %1625 = vmatprep.subr.mxu0 0.0
  %1626 = vmatpush2.msra.mxu0 0.0
  %1627 = vmatprep.mubr.f32.mxu0 0.0
  %1628 = vmatmul.mubr.f32.gmra.mxu0 %v1552
  %v1629 = vpop.f32.mrf.mxu0
  %v1630 = vadd.f32 0.0, %v1629
  %v1631 = vpop.f32.mrf.mxu0
  %v1632 = vadd.f32 0.0, %v1631
  %1633 = vmatprep.mubr.f32.mxu0 0.0
  %1634 = vmatmul.mubr.f32.gmra.mxu0 %v1555
  %v1635 = vpop.f32.mrf.mxu0
  %v1636 = vadd.f32 0.0, %v1635
  %v1637 = vpop.f32.mrf.mxu0
  %v1638 = vadd.f32 0.0, %v1637
  %1639 = vmatprep.mubr.f32.mxu0 0.0
  %1640 = vmatmul.mubr.f32.gmra.mxu0 %v1558
  %v1641 = vpop.f32.mrf.mxu0
  %v1642 = vadd.f32 0.0, %v1641
  %v1643 = vpop.f32.mrf.mxu0
  %v1644 = vadd.f32 0.0, %v1643
  %1645 = vmatprep.mubr.f32.mxu0 0.0
  %1646 = vmatmul.mubr.f32.gmra.mxu0 %v1561
  %v1647 = vpop.f32.mrf.mxu0
  %v1648 = vadd.f32 0.0, %v1647
  %v1649 = vpop.f32.mrf.mxu0
  %v1650 = vadd.f32 0.0, %v1649
  %1651 = vdwg.mxu0
  %v1652 = vadd.f32 %v1435, %v1630
  %v1653 = vadd.f32 %v1437, %v1632
  %v1654 = vadd.f32 %v1441, %v1636
  %v1655 = vadd.f32 %v1443, %v1638
  %v1656 = vadd.f32 %v1447, %v1642
  %v1657 = vadd.f32 %v1449, %v1644
  %v1658 = vadd.f32 %v1453, %v1648
  %v1659 = vadd.f32 %v1455, %v1650
  %s1660 = scalar_lea.vmem %s3, 96
  %v1661 = vld [vmem:[%s1660] sm:$0xff]
  %v1662 = vld [vmem:[%s1660 + $0x8] sm:$0xff]
  %v1663 = vld [vmem:[%s1660 + $0x10] sm:$0xff]
  %v1664 = vld [vmem:[%s1660 + $0x18] sm:$0xff]
  %1665 = vmatprep.subr.mxu0 %v429
  %1666 = vmatpush1.msra.mxu0 %v428
  %1667 = vmatprep.subr.mxu0 %v427
  %1668 = vmatpush1.msra.mxu0 %v426
  %1669 = vmatprep.subr.mxu0 %v425
  %1670 = vmatpush1.msra.mxu0 %v424
  %1671 = vmatprep.subr.mxu0 %v423
  %1672 = vmatpush1.msra.mxu0 %v422
  %1673 = vmatprep.subr.mxu0 %v421
  %1674 = vmatpush1.msra.mxu0 %v420
  %1675 = vmatprep.subr.mxu0 %v419
  %1676 = vmatpush1.msra.mxu0 %v418
  %1677 = vmatprep.subr.mxu0 %v417
  %1678 = vmatpush1.msra.mxu0 %v416
  %1679 = vmatprep.subr.mxu0 %v415
  %1680 = vmatpush1.msra.mxu0 %v414
  %1681 = vmatprep.subr.mxu0 %v413
  %1682 = vmatpush1.msra.mxu0 %v412
  %1683 = vmatprep.subr.mxu0 %v411
  %1684 = vmatpush1.msra.mxu0 %v410
  %1685 = vmatprep.subr.mxu0 %v409
  %1686 = vmatpush1.msra.mxu0 %v408
  %1687 = vmatprep.subr.mxu0 %v407
  %1688 = vmatpush1.msra.mxu0 %v406
  %1689 = vmatprep.subr.mxu0 %v405
  %1690 = vmatpush1.msra.mxu0 %v404
  %1691 = vmatprep.subr.mxu0 %v403
  %1692 = vmatpush1.msra.mxu0 %v402
  %1693 = vmatprep.subr.mxu0 %v401
  %1694 = vmatpush1.msra.mxu0 %v400
  %1695 = vmatprep.subr.mxu0 %v399
  %1696 = vmatpush1.msra.mxu0 %v398
  %1697 = vmatprep.subr.mxu0 %v461
  %1698 = vmatpush2.msra.mxu0 %v460
  %1699 = vmatprep.subr.mxu0 %v459
  %1700 = vmatpush2.msra.mxu0 %v458
  %1701 = vmatprep.subr.mxu0 %v457
  %1702 = vmatpush2.msra.mxu0 %v456
  %1703 = vmatprep.subr.mxu0 %v455
  %1704 = vmatpush2.msra.mxu0 %v454
  %1705 = vmatprep.subr.mxu0 %v453
  %1706 = vmatpush2.msra.mxu0 %v452
  %1707 = vmatprep.subr.mxu0 %v451
  %1708 = vmatpush2.msra.mxu0 %v450
  %1709 = vmatprep.subr.mxu0 %v449
  %1710 = vmatpush2.msra.mxu0 %v448
  %1711 = vmatprep.subr.mxu0 %v447
  %1712 = vmatpush2.msra.mxu0 %v446
  %1713 = vmatprep.subr.mxu0 %v445
  %1714 = vmatpush2.msra.mxu0 %v444
  %1715 = vmatprep.subr.mxu0 %v443
  %1716 = vmatpush2.msra.mxu0 %v442
  %1717 = vmatprep.subr.mxu0 %v441
  %1718 = vmatpush2.msra.mxu0 %v440
  %1719 = vmatprep.subr.mxu0 %v439
  %1720 = vmatpush2.msra.mxu0 %v438
  %1721 = vmatprep.subr.mxu0 %v437
  %1722 = vmatpush2.msra.mxu0 %v436
  %1723 = vmatprep.subr.mxu0 %v435
  %1724 = vmatpush2.msra.mxu0 %v434
  %1725 = vmatprep.subr.mxu0 %v433
  %1726 = vmatpush2.msra.mxu0 %v432
  %1727 = vmatprep.subr.mxu0 %v431
  %1728 = vmatpush2.msra.mxu0 %v430
  %1729 = vmatprep.mubr.f32.mxu0 %v1149
  %1730 = vmatmul.mubr.f32.gmra.mxu0 %v1148
  %v1731 = vpop.f32.mrf.mxu0
  %v1732 = vadd.f32 0.0, %v1731
  %v1733 = vpop.f32.mrf.mxu0
  %v1734 = vadd.f32 0.0, %v1733
  %1735 = vmatprep.mubr.f32.mxu0 %v1151
  %1736 = vmatmul.mubr.f32.gmra.mxu0 %v1150
  %v1737 = vpop.f32.mrf.mxu0
  %v1738 = vadd.f32 0.0, %v1737
  %v1739 = vpop.f32.mrf.mxu0
  %v1740 = vadd.f32 0.0, %v1739
  %1741 = vmatprep.mubr.f32.mxu0 %v1153
  %1742 = vmatmul.mubr.f32.gmra.mxu0 %v1152
  %v1743 = vpop.f32.mrf.mxu0
  %v1744 = vadd.f32 0.0, %v1743
  %v1745 = vpop.f32.mrf.mxu0
  %v1746 = vadd.f32 0.0, %v1745
  %1747 = vmatprep.mubr.f32.mxu0 %v1155
  %1748 = vmatmul.mubr.f32.gmra.mxu0 %v1154
  %v1749 = vpop.f32.mrf.mxu0
  %v1750 = vadd.f32 0.0, %v1749
  %v1751 = vpop.f32.mrf.mxu0
  %v1752 = vadd.f32 0.0, %v1751
  %1753 = vdwg.mxu0
  %v1755 = vsel %vm1254, %v1661, 0
  %v1758 = vsel %vm1254, %v1662, 0
  %v1761 = vsel %vm1254, %v1663, 0
  %v1764 = vsel %vm1254, %v1664, 0
  %1766 = vmatprep.subr.mxu0 0.0
  %1767 = vmatpush1.msra.mxu0 0.0
  %1768 = vmatprep.subr.mxu0 0.0
  %1769 = vmatpush1.msra.mxu0 0.0
  %1770 = vmatprep.subr.mxu0 0.0
  %1771 = vmatpush1.msra.mxu0 0.0
  %1772 = vmatprep.subr.mxu0 0.0
  %1773 = vmatpush1.msra.mxu0 0.0
  %1774 = vmatprep.subr.mxu0 0.0
  %1775 = vmatpush1.msra.mxu0 0.0
  %1776 = vmatprep.subr.mxu0 0.0
  %1777 = vmatpush1.msra.mxu0 0.0
  %1778 = vmatprep.subr.mxu0 0.0
  %1779 = vmatpush1.msra.mxu0 0.0
  %1780 = vmatprep.subr.mxu0 0.0
  %1781 = vmatpush1.msra.mxu0 0.0
  %1782 = vmatprep.subr.mxu0 0.0
  %1783 = vmatpush1.msra.mxu0 0.0
  %1784 = vmatprep.subr.mxu0 0.0
  %1785 = vmatpush1.msra.mxu0 0.0
  %1786 = vmatprep.subr.mxu0 0.0
  %1787 = vmatpush1.msra.mxu0 0.0
  %1788 = vmatprep.subr.mxu0 0.0
  %1789 = vmatpush1.msra.mxu0 0.0
  %1790 = vmatprep.subr.mxu0 %v1752
  %1791 = vmatpush1.msra.mxu0 %v1750
  %1792 = vmatprep.subr.mxu0 %v1746
  %1793 = vmatpush1.msra.mxu0 %v1744
  %1794 = vmatprep.subr.mxu0 %v1740
  %1795 = vmatpush1.msra.mxu0 %v1738
  %1796 = vmatprep.subr.mxu0 %v1734
  %1797 = vmatpush1.msra.mxu0 %v1732
  %1798 = vmatprep.subr.mxu0 0.0
  %1799 = vmatpush2.msra.mxu0 0.0
  %1800 = vmatprep.subr.mxu0 0.0
  %1801 = vmatpush2.msra.mxu0 0.0
  %1802 = vmatprep.subr.mxu0 0.0
  %1803 = vmatpush2.msra.mxu0 0.0
  %1804 = vmatprep.subr.mxu0 0.0
  %1805 = vmatpush2.msra.mxu0 0.0
  %1806 = vmatprep.subr.mxu0 0.0
  %1807 = vmatpush2.msra.mxu0 0.0
  %1808 = vmatprep.subr.mxu0 0.0
  %1809 = vmatpush2.msra.mxu0 0.0
  %1810 = vmatprep.subr.mxu0 0.0
  %1811 = vmatpush2.msra.mxu0 0.0
  %1812 = vmatprep.subr.mxu0 0.0
  %1813 = vmatpush2.msra.mxu0 0.0
  %1814 = vmatprep.subr.mxu0 0.0
  %1815 = vmatpush2.msra.mxu0 0.0
  %1816 = vmatprep.subr.mxu0 0.0
  %1817 = vmatpush2.msra.mxu0 0.0
  %1818 = vmatprep.subr.mxu0 0.0
  %1819 = vmatpush2.msra.mxu0 0.0
  %1820 = vmatprep.subr.mxu0 0.0
  %1821 = vmatpush2.msra.mxu0 0.0
  %1822 = vmatprep.subr.mxu0 0.0
  %1823 = vmatpush2.msra.mxu0 0.0
  %1824 = vmatprep.subr.mxu0 0.0
  %1825 = vmatpush2.msra.mxu0 0.0
  %1826 = vmatprep.subr.mxu0 0.0
  %1827 = vmatpush2.msra.mxu0 0.0
  %1828 = vmatprep.subr.mxu0 0.0
  %1829 = vmatpush2.msra.mxu0 0.0
  %1830 = vmatprep.mubr.f32.mxu0 0.0
  %1831 = vmatmul.mubr.f32.gmra.mxu0 %v1755
  %v1832 = vpop.f32.mrf.mxu0
  %v1833 = vadd.f32 0.0, %v1832
  %v1834 = vpop.f32.mrf.mxu0
  %v1835 = vadd.f32 0.0, %v1834
  %1836 = vmatprep.mubr.f32.mxu0 0.0
  %1837 = vmatmul.mubr.f32.gmra.mxu0 %v1758
  %v1838 = vpop.f32.mrf.mxu0
  %v1839 = vadd.f32 0.0, %v1838
  %v1840 = vpop.f32.mrf.mxu0
  %v1841 = vadd.f32 0.0, %v1840
  %1842 = vmatprep.mubr.f32.mxu0 0.0
  %1843 = vmatmul.mubr.f32.gmra.mxu0 %v1761
  %v1844 = vpop.f32.mrf.mxu0
  %v1845 = vadd.f32 0.0, %v1844
  %v1846 = vpop.f32.mrf.mxu0
  %v1847 = vadd.f32 0.0, %v1846
  %1848 = vmatprep.mubr.f32.mxu0 0.0
  %1849 = vmatmul.mubr.f32.gmra.mxu0 %v1764
  %v1850 = vpop.f32.mrf.mxu0
  %v1851 = vadd.f32 0.0, %v1850
  %v1852 = vpop.f32.mrf.mxu0
  %v1853 = vadd.f32 0.0, %v1852
  %1854 = vdwg.mxu0
  %v1855 = vadd.f32 %v1652, %v1833
  %v1856 = vadd.f32 %v1653, %v1835
  %v1857 = vadd.f32 %v1654, %v1839
  %v1858 = vadd.f32 %v1655, %v1841
  %v1859 = vadd.f32 %v1656, %v1845
  %v1860 = vadd.f32 %v1657, %v1847
  %v1861 = vadd.f32 %v1658, %v1851
  %v1862 = vadd.f32 %v1659, %v1853
  %s1863 = scalar_lea.vmem %s3, 128
  %v1864 = vld [vmem:[%s1863] sm:$0xff]
  %v1865 = vld [vmem:[%s1863 + $0x8] sm:$0xff]
  %v1866 = vld [vmem:[%s1863 + $0x10] sm:$0xff]
  %v1867 = vld [vmem:[%s1863 + $0x18] sm:$0xff]
  %1868 = vmatprep.subr.mxu0 %v559
  %1869 = vmatpush1.msra.mxu0 %v558
  %1870 = vmatprep.subr.mxu0 %v557
  %1871 = vmatpush1.msra.mxu0 %v556
  %1872 = vmatprep.subr.mxu0 %v555
  %1873 = vmatpush1.msra.mxu0 %v554
  %1874 = vmatprep.subr.mxu0 %v553
  %1875 = vmatpush1.msra.mxu0 %v552
  %1876 = vmatprep.subr.mxu0 %v551
  %1877 = vmatpush1.msra.mxu0 %v550
  %1878 = vmatprep.subr.mxu0 %v549
  %1879 = vmatpush1.msra.mxu0 %v548
  %1880 = vmatprep.subr.mxu0 %v547
  %1881 = vmatpush1.msra.mxu0 %v546
  %1882 = vmatprep.subr.mxu0 %v545
  %1883 = vmatpush1.msra.mxu0 %v544
  %1884 = vmatprep.subr.mxu0 %v543
  %1885 = vmatpush1.msra.mxu0 %v542
  %1886 = vmatprep.subr.mxu0 %v541
  %1887 = vmatpush1.msra.mxu0 %v540
  %1888 = vmatprep.subr.mxu0 %v539
  %1889 = vmatpush1.msra.mxu0 %v538
  %1890 = vmatprep.subr.mxu0 %v537
  %1891 = vmatpush1.msra.mxu0 %v536
  %1892 = vmatprep.subr.mxu0 %v535
  %1893 = vmatpush1.msra.mxu0 %v534
  %1894 = vmatprep.subr.mxu0 %v533
  %1895 = vmatpush1.msra.mxu0 %v532
  %1896 = vmatprep.subr.mxu0 %v531
  %1897 = vmatpush1.msra.mxu0 %v530
  %1898 = vmatprep.subr.mxu0 %v529
  %1899 = vmatpush1.msra.mxu0 %v528
  %1900 = vmatprep.subr.mxu0 %v591
  %1901 = vmatpush2.msra.mxu0 %v590
  %1902 = vmatprep.subr.mxu0 %v589
  %1903 = vmatpush2.msra.mxu0 %v588
  %1904 = vmatprep.subr.mxu0 %v587
  %1905 = vmatpush2.msra.mxu0 %v586
  %1906 = vmatprep.subr.mxu0 %v585
  %1907 = vmatpush2.msra.mxu0 %v584
  %1908 = vmatprep.subr.mxu0 %v583
  %1909 = vmatpush2.msra.mxu0 %v582
  %1910 = vmatprep.subr.mxu0 %v581
  %1911 = vmatpush2.msra.mxu0 %v580
  %1912 = vmatprep.subr.mxu0 %v579
  %1913 = vmatpush2.msra.mxu0 %v578
  %1914 = vmatprep.subr.mxu0 %v577
  %1915 = vmatpush2.msra.mxu0 %v576
  %1916 = vmatprep.subr.mxu0 %v575
  %1917 = vmatpush2.msra.mxu0 %v574
  %1918 = vmatprep.subr.mxu0 %v573
  %1919 = vmatpush2.msra.mxu0 %v572
  %1920 = vmatprep.subr.mxu0 %v571
  %1921 = vmatpush2.msra.mxu0 %v570
  %1922 = vmatprep.subr.mxu0 %v569
  %1923 = vmatpush2.msra.mxu0 %v568
  %1924 = vmatprep.subr.mxu0 %v567
  %1925 = vmatpush2.msra.mxu0 %v566
  %1926 = vmatprep.subr.mxu0 %v565
  %1927 = vmatpush2.msra.mxu0 %v564
  %1928 = vmatprep.subr.mxu0 %v563
  %1929 = vmatpush2.msra.mxu0 %v562
  %1930 = vmatprep.subr.mxu0 %v561
  %1931 = vmatpush2.msra.mxu0 %v560
  %1932 = vmatprep.mubr.f32.mxu0 %v1149
  %1933 = vmatmul.mubr.f32.gmra.mxu0 %v1148
  %v1934 = vpop.f32.mrf.mxu0
  %v1935 = vadd.f32 0.0, %v1934
  %v1936 = vpop.f32.mrf.mxu0
  %v1937 = vadd.f32 0.0, %v1936
  %1938 = vmatprep.mubr.f32.mxu0 %v1151
  %1939 = vmatmul.mubr.f32.gmra.mxu0 %v1150
  %v1940 = vpop.f32.mrf.mxu0
  %v1941 = vadd.f32 0.0, %v1940
  %v1942 = vpop.f32.mrf.mxu0
  %v1943 = vadd.f32 0.0, %v1942
  %1944 = vmatprep.mubr.f32.mxu0 %v1153
  %1945 = vmatmul.mubr.f32.gmra.mxu0 %v1152
  %v1946 = vpop.f32.mrf.mxu0
  %v1947 = vadd.f32 0.0, %v1946
  %v1948 = vpop.f32.mrf.mxu0
  %v1949 = vadd.f32 0.0, %v1948
  %1950 = vmatprep.mubr.f32.mxu0 %v1155
  %1951 = vmatmul.mubr.f32.gmra.mxu0 %v1154
  %v1952 = vpop.f32.mrf.mxu0
  %v1953 = vadd.f32 0.0, %v1952
  %v1954 = vpop.f32.mrf.mxu0
  %v1955 = vadd.f32 0.0, %v1954
  %1956 = vdwg.mxu0
  %v1958 = vsel %vm1254, %v1864, 0
  %v1961 = vsel %vm1254, %v1865, 0
  %v1964 = vsel %vm1254, %v1866, 0
  %v1967 = vsel %vm1254, %v1867, 0
  %1969 = vmatprep.subr.mxu0 0.0
  %1970 = vmatpush1.msra.mxu0 0.0
  %1971 = vmatprep.subr.mxu0 0.0
  %1972 = vmatpush1.msra.mxu0 0.0
  %1973 = vmatprep.subr.mxu0 0.0
  %1974 = vmatpush1.msra.mxu0 0.0
  %1975 = vmatprep.subr.mxu0 0.0
  %1976 = vmatpush1.msra.mxu0 0.0
  %1977 = vmatprep.subr.mxu0 0.0
  %1978 = vmatpush1.msra.mxu0 0.0
  %1979 = vmatprep.subr.mxu0 0.0
  %1980 = vmatpush1.msra.mxu0 0.0
  %1981 = vmatprep.subr.mxu0 0.0
  %1982 = vmatpush1.msra.mxu0 0.0
  %1983 = vmatprep.subr.mxu0 0.0
  %1984 = vmatpush1.msra.mxu0 0.0
  %1985 = vmatprep.subr.mxu0 0.0
  %1986 = vmatpush1.msra.mxu0 0.0
  %1987 = vmatprep.subr.mxu0 0.0
  %1988 = vmatpush1.msra.mxu0 0.0
  %1989 = vmatprep.subr.mxu0 0.0
  %1990 = vmatpush1.msra.mxu0 0.0
  %1991 = vmatprep.subr.mxu0 0.0
  %1992 = vmatpush1.msra.mxu0 0.0
  %1993 = vmatprep.subr.mxu0 %v1955
  %1994 = vmatpush1.msra.mxu0 %v1953
  %1995 = vmatprep.subr.mxu0 %v1949
  %1996 = vmatpush1.msra.mxu0 %v1947
  %1997 = vmatprep.subr.mxu0 %v1943
  %1998 = vmatpush1.msra.mxu0 %v1941
  %1999 = vmatprep.subr.mxu0 %v1937
  %2000 = vmatpush1.msra.mxu0 %v1935
  %2001 = vmatprep.subr.mxu0 0.0
  %2002 = vmatpush2.msra.mxu0 0.0
  %2003 = vmatprep.subr.mxu0 0.0
  %2004 = vmatpush2.msra.mxu0 0.0
  %2005 = vmatprep.subr.mxu0 0.0
  %2006 = vmatpush2.msra.mxu0 0.0
  %2007 = vmatprep.subr.mxu0 0.0
  %2008 = vmatpush2.msra.mxu0 0.0
  %2009 = vmatprep.subr.mxu0 0.0
  %2010 = vmatpush2.msra.mxu0 0.0
  %2011 = vmatprep.subr.mxu0 0.0
  %2012 = vmatpush2.msra.mxu0 0.0
  %2013 = vmatprep.subr.mxu0 0.0
  %2014 = vmatpush2.msra.mxu0 0.0
  %2015 = vmatprep.subr.mxu0 0.0
  %2016 = vmatpush2.msra.mxu0 0.0
  %2017 = vmatprep.subr.mxu0 0.0
  %2018 = vmatpush2.msra.mxu0 0.0
  %2019 = vmatprep.subr.mxu0 0.0
  %2020 = vmatpush2.msra.mxu0 0.0
  %2021 = vmatprep.subr.mxu0 0.0
  %2022 = vmatpush2.msra.mxu0 0.0
  %2023 = vmatprep.subr.mxu0 0.0
  %2024 = vmatpush2.msra.mxu0 0.0
  %2025 = vmatprep.subr.mxu0 0.0
  %2026 = vmatpush2.msra.mxu0 0.0
  %2027 = vmatprep.subr.mxu0 0.0
  %2028 = vmatpush2.msra.mxu0 0.0
  %2029 = vmatprep.subr.mxu0 0.0
  %2030 = vmatpush2.msra.mxu0 0.0
  %2031 = vmatprep.subr.mxu0 0.0
  %2032 = vmatpush2.msra.mxu0 0.0
  %2033 = vmatprep.mubr.f32.mxu0 0.0
  %2034 = vmatmul.mubr.f32.gmra.mxu0 %v1958
  %v2035 = vpop.f32.mrf.mxu0
  %v2036 = vadd.f32 0.0, %v2035
  %v2037 = vpop.f32.mrf.mxu0
  %v2038 = vadd.f32 0.0, %v2037
  %2039 = vmatprep.mubr.f32.mxu0 0.0
  %2040 = vmatmul.mubr.f32.gmra.mxu0 %v1961
  %v2041 = vpop.f32.mrf.mxu0
  %v2042 = vadd.f32 0.0, %v2041
  %v2043 = vpop.f32.mrf.mxu0
  %v2044 = vadd.f32 0.0, %v2043
  %2045 = vmatprep.mubr.f32.mxu0 0.0
  %2046 = vmatmul.mubr.f32.gmra.mxu0 %v1964
  %v2047 = vpop.f32.mrf.mxu0
  %v2048 = vadd.f32 0.0, %v2047
  %v2049 = vpop.f32.mrf.mxu0
  %v2050 = vadd.f32 0.0, %v2049
  %2051 = vmatprep.mubr.f32.mxu0 0.0
  %2052 = vmatmul.mubr.f32.gmra.mxu0 %v1967
  %v2053 = vpop.f32.mrf.mxu0
  %v2054 = vadd.f32 0.0, %v2053
  %v2055 = vpop.f32.mrf.mxu0
  %v2056 = vadd.f32 0.0, %v2055
  %2057 = vdwg.mxu0
  %v2058 = vadd.f32 %v1855, %v2036
  %v2059 = vadd.f32 %v1856, %v2038
  %v2060 = vadd.f32 %v1857, %v2042
  %v2061 = vadd.f32 %v1858, %v2044
  %v2062 = vadd.f32 %v1859, %v2048
  %v2063 = vadd.f32 %v1860, %v2050
  %v2064 = vadd.f32 %v1861, %v2054
  %v2065 = vadd.f32 %v1862, %v2056
  %v2066 = vld [vmem:[%s4] sm:$0xff]
  %v2067 = vld [vmem:[%s4 + $0x8] sm:$0xff]
  %v2068 = vld [vmem:[%s4 + $0x10] sm:$0xff]
  %v2069 = vld [vmem:[%s4 + $0x18] sm:$0xff]
  %2071 = vset.pattern.permute.xlu0 0
  %2072 = vperm.xlu0 %2071, %v2066
  %v2073 = vpop.permute.xlu0 %2072
  %2076 = vset.pattern.permute.xlu0 0
  %2077 = vperm.xlu0 %2076, %v2067
  %v2078 = vpop.permute.xlu0 %2077
  %2081 = vset.pattern.permute.xlu0 0
  %2082 = vperm.xlu0 %2081, %v2068
  %v2083 = vpop.permute.xlu0 %2082
  %2086 = vset.pattern.permute.xlu0 0
  %2087 = vperm.xlu0 %2086, %v2069
  %v2088 = vpop.permute.xlu0 %2087
  %v2090 = vadd.f32 %v2058, %v2073
  %v2091 = vadd.f32 %v2059, %v2073
  %v2092 = vadd.f32 %v2060, %v2078
  %v2093 = vadd.f32 %v2061, %v2078
  %v2094 = vadd.f32 %v2062, %v2083
  %v2095 = vadd.f32 %v2063, %v2083
  %v2096 = vadd.f32 %v2064, %v2088
  %v2097 = vadd.f32 %v2065, %v2088
  %v2098 = vmax.f32 %v2090, 0.0
  %v2099 = vmax.f32 %v2091, 0.0
  %v2100 = vmax.f32 %v2092, 0.0
  %v2101 = vmax.f32 %v2093, 0.0
  %v2102 = vmax.f32 %v2094, 0.0
  %v2103 = vmax.f32 %v2095, 0.0
  %v2104 = vmax.f32 %v2096, 0.0
  %v2105 = vmax.f32 %v2097, 0.0
  %2106 = vst [vmem:[%s9] sm:$0xff] %v2098
  %2107 = vst [vmem:[%s9 + $0x8] sm:$0xff] %v2100
  %2108 = vst [vmem:[%s9 + $0x10] sm:$0xff] %v2102
  %2109 = vst [vmem:[%s9 + $0x18] sm:$0xff] %v2104
  %vm2110 = vcmp.lt.s32.totalorder %v70, 128
  %vm2111 = vcmp.lt.s32.totalorder %v71, 128
  %v2112 = vsel %vm2110, 1, 0
  %v2113 = vsel %vm2111, 1, 0
  %vm2114 = vcmp.eq.s32.totalorder %v2112, 1
  %vm2115 = vcmp.eq.s32.totalorder %v2113, 1
  %v2116 = vsel %vm2114, %v2098, 0.0
  %v2117 = vsel %vm2115, %v2099, 0.0
  %v2118 = vsel %vm2114, %v2100, 0.0
  %v2119 = vsel %vm2115, %v2101, 0.0
  %v2120 = vsel %vm2114, %v2102, 0.0
  %v2121 = vsel %vm2115, %v2103, 0.0
  %v2122 = vsel %vm2114, %v2104, 0.0
  %v2123 = vsel %vm2115, %v2105, 0.0
  %v2124 = vadd.s32 %v38, 16
  %v2125 = vadd.s32 %v39, 16
  %v2126 = vadd.s32 %v40, 16
  %v2127 = vadd.s32 %v41, 16
  %v2128 = vadd.s32 %v42, 16
  %v2129 = vadd.s32 %v43, 16
  %v2130 = vadd.s32 %v44, 16
  %v2131 = vadd.s32 %v45, 16
  %v2132 = vadd.s32 %v46, 16
  %v2133 = vadd.s32 %v47, 16
  %v2134 = vadd.s32 %v48, 16
  %v2135 = vadd.s32 %v49, 16
  %v2136 = vadd.s32 %v50, 16
  %v2137 = vadd.s32 %v51, 16
  %v2138 = vadd.s32 %v52, 16
  %v2139 = vadd.s32 %v53, 16
  %v2140 = vadd.s32 %v54, 16
  %v2141 = vadd.s32 %v55, 16
  %v2142 = vadd.s32 %v56, 16
  %v2143 = vadd.s32 %v57, 16
  %v2144 = vadd.s32 %v58, 16
  %v2145 = vadd.s32 %v59, 16
  %v2146 = vadd.s32 %v60, 16
  %v2147 = vadd.s32 %v61, 16
  %v2148 = vadd.s32 %v62, 16
  %v2149 = vadd.s32 %v63, 16
  %v2150 = vadd.s32 %v64, 16
  %v2151 = vadd.s32 %v65, 16
  %v2152 = vadd.s32 %v66, 16
  %v2153 = vadd.s32 %v67, 16
  %v2154 = vadd.s32 %v68, 16
  %vm2155 = vcmp.eq.s32.totalorder %v39, %v70
  %vm2156 = vcmp.eq.s32.totalorder %v39, %v71
  %vm2157 = vcmp.eq.s32.totalorder %v2124, %v70
  %vm2158 = vcmp.eq.s32.totalorder %v2124, %v71
  %vm2159 = vcmp.eq.s32.totalorder %v2125, %v70
  %vm2160 = vcmp.eq.s32.totalorder %v2125, %v71
  %vm2161 = vcmp.eq.s32.totalorder %v2126, %v70
  %vm2162 = vcmp.eq.s32.totalorder %v2126, %v71
  %vm2163 = vcmp.eq.s32.totalorder %v2127, %v70
  %vm2164 = vcmp.eq.s32.totalorder %v2127, %v71
  %vm2165 = vcmp.eq.s32.totalorder %v2128, %v70
  %vm2166 = vcmp.eq.s32.totalorder %v2128, %v71
  %vm2167 = vcmp.eq.s32.totalorder %v2129, %v70
  %vm2168 = vcmp.eq.s32.totalorder %v2129, %v71
  %vm2169 = vcmp.eq.s32.totalorder %v2130, %v70
  %vm2170 = vcmp.eq.s32.totalorder %v2130, %v71
  %vm2171 = vcmp.eq.s32.totalorder %v2131, %v70
  %vm2172 = vcmp.eq.s32.totalorder %v2131, %v71
  %vm2173 = vcmp.eq.s32.totalorder %v2132, %v70
  %vm2174 = vcmp.eq.s32.totalorder %v2132, %v71
  %vm2175 = vcmp.eq.s32.totalorder %v2133, %v70
  %vm2176 = vcmp.eq.s32.totalorder %v2133, %v71
  %vm2177 = vcmp.eq.s32.totalorder %v2134, %v70
  %vm2178 = vcmp.eq.s32.totalorder %v2134, %v71
  %vm2179 = vcmp.eq.s32.totalorder %v2135, %v70
  %vm2180 = vcmp.eq.s32.totalorder %v2135, %v71
  %vm2181 = vcmp.eq.s32.totalorder %v2136, %v70
  %vm2182 = vcmp.eq.s32.totalorder %v2136, %v71
  %vm2183 = vcmp.eq.s32.totalorder %v2137, %v70
  %vm2184 = vcmp.eq.s32.totalorder %v2137, %v71
  %vm2185 = vcmp.eq.s32.totalorder %v2138, %v70
  %vm2186 = vcmp.eq.s32.totalorder %v2138, %v71
  %vm2187 = vcmp.eq.s32.totalorder %v2139, %v70
  %vm2188 = vcmp.eq.s32.totalorder %v2139, %v71
  %vm2189 = vcmp.eq.s32.totalorder %v2140, %v70
  %vm2190 = vcmp.eq.s32.totalorder %v2140, %v71
  %vm2191 = vcmp.eq.s32.totalorder %v2141, %v70
  %vm2192 = vcmp.eq.s32.totalorder %v2141, %v71
  %vm2193 = vcmp.eq.s32.totalorder %v2142, %v70
  %vm2194 = vcmp.eq.s32.totalorder %v2142, %v71
  %vm2195 = vcmp.eq.s32.totalorder %v2143, %v70
  %vm2196 = vcmp.eq.s32.totalorder %v2143, %v71
  %vm2197 = vcmp.eq.s32.totalorder %v2144, %v70
  %vm2198 = vcmp.eq.s32.totalorder %v2144, %v71
  %vm2199 = vcmp.eq.s32.totalorder %v2145, %v70
  %vm2200 = vcmp.eq.s32.totalorder %v2145, %v71
  %vm2201 = vcmp.eq.s32.totalorder %v2146, %v70
  %vm2202 = vcmp.eq.s32.totalorder %v2146, %v71
  %vm2203 = vcmp.eq.s32.totalorder %v2147, %v70
  %vm2204 = vcmp.eq.s32.totalorder %v2147, %v71
  %vm2205 = vcmp.eq.s32.totalorder %v2148, %v70
  %vm2206 = vcmp.eq.s32.totalorder %v2148, %v71
  %vm2207 = vcmp.eq.s32.totalorder %v2149, %v70
  %vm2208 = vcmp.eq.s32.totalorder %v2149, %v71
  %vm2209 = vcmp.eq.s32.totalorder %v2150, %v70
  %vm2210 = vcmp.eq.s32.totalorder %v2150, %v71
  %vm2211 = vcmp.eq.s32.totalorder %v2151, %v70
  %vm2212 = vcmp.eq.s32.totalorder %v2151, %v71
  %vm2213 = vcmp.eq.s32.totalorder %v2152, %v70
  %vm2214 = vcmp.eq.s32.totalorder %v2152, %v71
  %vm2215 = vcmp.eq.s32.totalorder %v2153, %v70
  %vm2216 = vcmp.eq.s32.totalorder %v2153, %v71
  %vm2217 = vcmp.eq.s32.totalorder %v2154, %v70
  %vm2218 = vcmp.eq.s32.totalorder %v2154, %v71
  %v2219 = vsel %vm2155, 1.0, 0.0
  %v2220 = vsel %vm2156, 1.0, 0.0
  %v2221 = vsel %vm2157, 1.0, 0.0
  %v2222 = vsel %vm2158, 1.0, 0.0
  %v2223 = vsel %vm2159, 1.0, 0.0
  %v2224 = vsel %vm2160, 1.0, 0.0
  %v2225 = vsel %vm2161, 1.0, 0.0
  %v2226 = vsel %vm2162, 1.0, 0.0
  %v2227 = vsel %vm2163, 1.0, 0.0
  %v2228 = vsel %vm2164, 1.0, 0.0
  %v2229 = vsel %vm2165, 1.0, 0.0
  %v2230 = vsel %vm2166, 1.0, 0.0
  %v2231 = vsel %vm2167, 1.0, 0.0
  %v2232 = vsel %vm2168, 1.0, 0.0
  %v2233 = vsel %vm2169, 1.0, 0.0
  %v2234 = vsel %vm2170, 1.0, 0.0
  %v2235 = vsel %vm2171, 1.0, 0.0
  %v2236 = vsel %vm2172, 1.0, 0.0
  %v2237 = vsel %vm2173, 1.0, 0.0
  %v2238 = vsel %vm2174, 1.0, 0.0
  %v2239 = vsel %vm2175, 1.0, 0.0
  %v2240 = vsel %vm2176, 1.0, 0.0
  %v2241 = vsel %vm2177, 1.0, 0.0
  %v2242 = vsel %vm2178, 1.0, 0.0
  %v2243 = vsel %vm2179, 1.0, 0.0
  %v2244 = vsel %vm2180, 1.0, 0.0
  %v2245 = vsel %vm2181, 1.0, 0.0
  %v2246 = vsel %vm2182, 1.0, 0.0
  %v2247 = vsel %vm2183, 1.0, 0.0
  %v2248 = vsel %vm2184, 1.0, 0.0
  %v2249 = vsel %vm2185, 1.0, 0.0
  %v2250 = vsel %vm2186, 1.0, 0.0
  %v2251 = vsel %vm2187, 1.0, 0.0
  %v2252 = vsel %vm2188, 1.0, 0.0
  %v2253 = vsel %vm2189, 1.0, 0.0
  %v2254 = vsel %vm2190, 1.0, 0.0
  %v2255 = vsel %vm2191, 1.0, 0.0
  %v2256 = vsel %vm2192, 1.0, 0.0
  %v2257 = vsel %vm2193, 1.0, 0.0
  %v2258 = vsel %vm2194, 1.0, 0.0
  %v2259 = vsel %vm2195, 1.0, 0.0
  %v2260 = vsel %vm2196, 1.0, 0.0
  %v2261 = vsel %vm2197, 1.0, 0.0
  %v2262 = vsel %vm2198, 1.0, 0.0
  %v2263 = vsel %vm2199, 1.0, 0.0
  %v2264 = vsel %vm2200, 1.0, 0.0
  %v2265 = vsel %vm2201, 1.0, 0.0
  %v2266 = vsel %vm2202, 1.0, 0.0
  %v2267 = vsel %vm2203, 1.0, 0.0
  %v2268 = vsel %vm2204, 1.0, 0.0
  %v2269 = vsel %vm2205, 1.0, 0.0
  %v2270 = vsel %vm2206, 1.0, 0.0
  %v2271 = vsel %vm2207, 1.0, 0.0
  %v2272 = vsel %vm2208, 1.0, 0.0
  %v2273 = vsel %vm2209, 1.0, 0.0
  %v2274 = vsel %vm2210, 1.0, 0.0
  %v2275 = vsel %vm2211, 1.0, 0.0
  %v2276 = vsel %vm2212, 1.0, 0.0
  %v2277 = vsel %vm2213, 1.0, 0.0
  %v2278 = vsel %vm2214, 1.0, 0.0
  %v2279 = vsel %vm2215, 1.0, 0.0
  %v2280 = vsel %vm2216, 1.0, 0.0
  %v2281 = vsel %vm2217, 1.0, 0.0
  %v2282 = vsel %vm2218, 1.0, 0.0
  %v2283 = vadd.s32 %v38, 32
  %v2284 = vadd.s32 %v39, 32
  %v2285 = vadd.s32 %v40, 32
  %v2286 = vadd.s32 %v41, 32
  %v2287 = vadd.s32 %v42, 32
  %v2288 = vadd.s32 %v43, 32
  %v2289 = vadd.s32 %v44, 32
  %v2290 = vadd.s32 %v45, 32
  %v2291 = vadd.s32 %v46, 32
  %v2292 = vadd.s32 %v47, 32
  %v2293 = vadd.s32 %v48, 32
  %v2294 = vadd.s32 %v49, 32
  %v2295 = vadd.s32 %v50, 32
  %v2296 = vadd.s32 %v51, 32
  %v2297 = vadd.s32 %v52, 32
  %v2298 = vadd.s32 %v53, 32
  %v2299 = vadd.s32 %v54, 32
  %v2300 = vadd.s32 %v55, 32
  %v2301 = vadd.s32 %v56, 32
  %v2302 = vadd.s32 %v57, 32
  %v2303 = vadd.s32 %v58, 32
  %v2304 = vadd.s32 %v59, 32
  %v2305 = vadd.s32 %v60, 32
  %v2306 = vadd.s32 %v61, 32
  %v2307 = vadd.s32 %v62, 32
  %v2308 = vadd.s32 %v63, 32
  %v2309 = vadd.s32 %v64, 32
  %v2310 = vadd.s32 %v65, 32
  %v2311 = vadd.s32 %v66, 32
  %v2312 = vadd.s32 %v67, 32
  %v2313 = vadd.s32 %v68, 32
  %vm2314 = vcmp.eq.s32.totalorder %v41, %v70
  %vm2315 = vcmp.eq.s32.totalorder %v41, %v71
  %vm2316 = vcmp.eq.s32.totalorder %v2283, %v70
  %vm2317 = vcmp.eq.s32.totalorder %v2283, %v71
  %vm2318 = vcmp.eq.s32.totalorder %v2284, %v70
  %vm2319 = vcmp.eq.s32.totalorder %v2284, %v71
  %vm2320 = vcmp.eq.s32.totalorder %v2285, %v70
  %vm2321 = vcmp.eq.s32.totalorder %v2285, %v71
  %vm2322 = vcmp.eq.s32.totalorder %v2286, %v70
  %vm2323 = vcmp.eq.s32.totalorder %v2286, %v71
  %vm2324 = vcmp.eq.s32.totalorder %v2287, %v70
  %vm2325 = vcmp.eq.s32.totalorder %v2287, %v71
  %vm2326 = vcmp.eq.s32.totalorder %v2288, %v70
  %vm2327 = vcmp.eq.s32.totalorder %v2288, %v71
  %vm2328 = vcmp.eq.s32.totalorder %v2289, %v70
  %vm2329 = vcmp.eq.s32.totalorder %v2289, %v71
  %vm2330 = vcmp.eq.s32.totalorder %v2290, %v70
  %vm2331 = vcmp.eq.s32.totalorder %v2290, %v71
  %vm2332 = vcmp.eq.s32.totalorder %v2291, %v70
  %vm2333 = vcmp.eq.s32.totalorder %v2291, %v71
  %vm2334 = vcmp.eq.s32.totalorder %v2292, %v70
  %vm2335 = vcmp.eq.s32.totalorder %v2292, %v71
  %vm2336 = vcmp.eq.s32.totalorder %v2293, %v70
  %vm2337 = vcmp.eq.s32.totalorder %v2293, %v71
  %vm2338 = vcmp.eq.s32.totalorder %v2294, %v70
  %vm2339 = vcmp.eq.s32.totalorder %v2294, %v71
  %vm2340 = vcmp.eq.s32.totalorder %v2295, %v70
  %vm2341 = vcmp.eq.s32.totalorder %v2295, %v71
  %vm2342 = vcmp.eq.s32.totalorder %v2296, %v70
  %vm2343 = vcmp.eq.s32.totalorder %v2296, %v71
  %vm2344 = vcmp.eq.s32.totalorder %v2297, %v70
  %vm2345 = vcmp.eq.s32.totalorder %v2297, %v71
  %vm2346 = vcmp.eq.s32.totalorder %v2298, %v70
  %vm2347 = vcmp.eq.s32.totalorder %v2298, %v71
  %vm2348 = vcmp.eq.s32.totalorder %v2299, %v70
  %vm2349 = vcmp.eq.s32.totalorder %v2299, %v71
  %vm2350 = vcmp.eq.s32.totalorder %v2300, %v70
  %vm2351 = vcmp.eq.s32.totalorder %v2300, %v71
  %vm2352 = vcmp.eq.s32.totalorder %v2301, %v70
  %vm2353 = vcmp.eq.s32.totalorder %v2301, %v71
  %vm2354 = vcmp.eq.s32.totalorder %v2302, %v70
  %vm2355 = vcmp.eq.s32.totalorder %v2302, %v71
  %vm2356 = vcmp.eq.s32.totalorder %v2303, %v70
  %vm2357 = vcmp.eq.s32.totalorder %v2303, %v71
  %vm2358 = vcmp.eq.s32.totalorder %v2304, %v70
  %vm2359 = vcmp.eq.s32.totalorder %v2304, %v71
  %vm2360 = vcmp.eq.s32.totalorder %v2305, %v70
  %vm2361 = vcmp.eq.s32.totalorder %v2305, %v71
  %vm2362 = vcmp.eq.s32.totalorder %v2306, %v70
  %vm2363 = vcmp.eq.s32.totalorder %v2306, %v71
  %vm2364 = vcmp.eq.s32.totalorder %v2307, %v70
  %vm2365 = vcmp.eq.s32.totalorder %v2307, %v71
  %vm2366 = vcmp.eq.s32.totalorder %v2308, %v70
  %vm2367 = vcmp.eq.s32.totalorder %v2308, %v71
  %vm2368 = vcmp.eq.s32.totalorder %v2309, %v70
  %vm2369 = vcmp.eq.s32.totalorder %v2309, %v71
  %vm2370 = vcmp.eq.s32.totalorder %v2310, %v70
  %vm2371 = vcmp.eq.s32.totalorder %v2310, %v71
  %vm2372 = vcmp.eq.s32.totalorder %v2311, %v70
  %vm2373 = vcmp.eq.s32.totalorder %v2311, %v71
  %vm2374 = vcmp.eq.s32.totalorder %v2312, %v70
  %vm2375 = vcmp.eq.s32.totalorder %v2312, %v71
  %vm2376 = vcmp.eq.s32.totalorder %v2313, %v70
  %vm2377 = vcmp.eq.s32.totalorder %v2313, %v71
  %v2378 = vsel %vm2314, 1.0, 0.0
  %v2379 = vsel %vm2315, 1.0, 0.0
  %v2380 = vsel %vm2316, 1.0, 0.0
  %v2381 = vsel %vm2317, 1.0, 0.0
  %v2382 = vsel %vm2318, 1.0, 0.0
  %v2383 = vsel %vm2319, 1.0, 0.0
  %v2384 = vsel %vm2320, 1.0, 0.0
  %v2385 = vsel %vm2321, 1.0, 0.0
  %v2386 = vsel %vm2322, 1.0, 0.0
  %v2387 = vsel %vm2323, 1.0, 0.0
  %v2388 = vsel %vm2324, 1.0, 0.0
  %v2389 = vsel %vm2325, 1.0, 0.0
  %v2390 = vsel %vm2326, 1.0, 0.0
  %v2391 = vsel %vm2327, 1.0, 0.0
  %v2392 = vsel %vm2328, 1.0, 0.0
  %v2393 = vsel %vm2329, 1.0, 0.0
  %v2394 = vsel %vm2330, 1.0, 0.0
  %v2395 = vsel %vm2331, 1.0, 0.0
  %v2396 = vsel %vm2332, 1.0, 0.0
  %v2397 = vsel %vm2333, 1.0, 0.0
  %v2398 = vsel %vm2334, 1.0, 0.0
  %v2399 = vsel %vm2335, 1.0, 0.0
  %v2400 = vsel %vm2336, 1.0, 0.0
  %v2401 = vsel %vm2337, 1.0, 0.0
  %v2402 = vsel %vm2338, 1.0, 0.0
  %v2403 = vsel %vm2339, 1.0, 0.0
  %v2404 = vsel %vm2340, 1.0, 0.0
  %v2405 = vsel %vm2341, 1.0, 0.0
  %v2406 = vsel %vm2342, 1.0, 0.0
  %v2407 = vsel %vm2343, 1.0, 0.0
  %v2408 = vsel %vm2344, 1.0, 0.0
  %v2409 = vsel %vm2345, 1.0, 0.0
  %v2410 = vsel %vm2346, 1.0, 0.0
  %v2411 = vsel %vm2347, 1.0, 0.0
  %v2412 = vsel %vm2348, 1.0, 0.0
  %v2413 = vsel %vm2349, 1.0, 0.0
  %v2414 = vsel %vm2350, 1.0, 0.0
  %v2415 = vsel %vm2351, 1.0, 0.0
  %v2416 = vsel %vm2352, 1.0, 0.0
  %v2417 = vsel %vm2353, 1.0, 0.0
  %v2418 = vsel %vm2354, 1.0, 0.0
  %v2419 = vsel %vm2355, 1.0, 0.0
  %v2420 = vsel %vm2356, 1.0, 0.0
  %v2421 = vsel %vm2357, 1.0, 0.0
  %v2422 = vsel %vm2358, 1.0, 0.0
  %v2423 = vsel %vm2359, 1.0, 0.0
  %v2424 = vsel %vm2360, 1.0, 0.0
  %v2425 = vsel %vm2361, 1.0, 0.0
  %v2426 = vsel %vm2362, 1.0, 0.0
  %v2427 = vsel %vm2363, 1.0, 0.0
  %v2428 = vsel %vm2364, 1.0, 0.0
  %v2429 = vsel %vm2365, 1.0, 0.0
  %v2430 = vsel %vm2366, 1.0, 0.0
  %v2431 = vsel %vm2367, 1.0, 0.0
  %v2432 = vsel %vm2368, 1.0, 0.0
  %v2433 = vsel %vm2369, 1.0, 0.0
  %v2434 = vsel %vm2370, 1.0, 0.0
  %v2435 = vsel %vm2371, 1.0, 0.0
  %v2436 = vsel %vm2372, 1.0, 0.0
  %v2437 = vsel %vm2373, 1.0, 0.0
  %v2438 = vsel %vm2374, 1.0, 0.0
  %v2439 = vsel %vm2375, 1.0, 0.0
  %v2440 = vsel %vm2376, 1.0, 0.0
  %v2441 = vsel %vm2377, 1.0, 0.0
  %v2442 = vadd.s32 %v38, 48
  %v2443 = vadd.s32 %v39, 48
  %v2444 = vadd.s32 %v40, 48
  %v2445 = vadd.s32 %v41, 48
  %v2446 = vadd.s32 %v42, 48
  %v2447 = vadd.s32 %v43, 48
  %v2448 = vadd.s32 %v44, 48
  %v2449 = vadd.s32 %v45, 48
  %v2450 = vadd.s32 %v46, 48
  %v2451 = vadd.s32 %v47, 48
  %v2452 = vadd.s32 %v48, 48
  %v2453 = vadd.s32 %v49, 48
  %v2454 = vadd.s32 %v50, 48
  %v2455 = vadd.s32 %v51, 48
  %v2456 = vadd.s32 %v52, 48
  %v2457 = vadd.s32 %v53, 48
  %v2458 = vadd.s32 %v54, 48
  %v2459 = vadd.s32 %v55, 48
  %v2460 = vadd.s32 %v56, 48
  %v2461 = vadd.s32 %v57, 48
  %v2462 = vadd.s32 %v58, 48
  %v2463 = vadd.s32 %v59, 48
  %v2464 = vadd.s32 %v60, 48
  %v2465 = vadd.s32 %v61, 48
  %v2466 = vadd.s32 %v62, 48
  %v2467 = vadd.s32 %v63, 48
  %v2468 = vadd.s32 %v64, 48
  %v2469 = vadd.s32 %v65, 48
  %v2470 = vadd.s32 %v66, 48
  %v2471 = vadd.s32 %v67, 48
  %v2472 = vadd.s32 %v68, 48
  %vm2473 = vcmp.eq.s32.totalorder %v43, %v70
  %vm2474 = vcmp.eq.s32.totalorder %v43, %v71
  %vm2475 = vcmp.eq.s32.totalorder %v2442, %v70
  %vm2476 = vcmp.eq.s32.totalorder %v2442, %v71
  %vm2477 = vcmp.eq.s32.totalorder %v2443, %v70
  %vm2478 = vcmp.eq.s32.totalorder %v2443, %v71
  %vm2479 = vcmp.eq.s32.totalorder %v2444, %v70
  %vm2480 = vcmp.eq.s32.totalorder %v2444, %v71
  %vm2481 = vcmp.eq.s32.totalorder %v2445, %v70
  %vm2482 = vcmp.eq.s32.totalorder %v2445, %v71
  %vm2483 = vcmp.eq.s32.totalorder %v2446, %v70
  %vm2484 = vcmp.eq.s32.totalorder %v2446, %v71
  %vm2485 = vcmp.eq.s32.totalorder %v2447, %v70
  %vm2486 = vcmp.eq.s32.totalorder %v2447, %v71
  %vm2487 = vcmp.eq.s32.totalorder %v2448, %v70
  %vm2488 = vcmp.eq.s32.totalorder %v2448, %v71
  %vm2489 = vcmp.eq.s32.totalorder %v2449, %v70
  %vm2490 = vcmp.eq.s32.totalorder %v2449, %v71
  %vm2491 = vcmp.eq.s32.totalorder %v2450, %v70
  %vm2492 = vcmp.eq.s32.totalorder %v2450, %v71
  %vm2493 = vcmp.eq.s32.totalorder %v2451, %v70
  %vm2494 = vcmp.eq.s32.totalorder %v2451, %v71
  %vm2495 = vcmp.eq.s32.totalorder %v2452, %v70
  %vm2496 = vcmp.eq.s32.totalorder %v2452, %v71
  %vm2497 = vcmp.eq.s32.totalorder %v2453, %v70
  %vm2498 = vcmp.eq.s32.totalorder %v2453, %v71
  %vm2499 = vcmp.eq.s32.totalorder %v2454, %v70
  %vm2500 = vcmp.eq.s32.totalorder %v2454, %v71
  %vm2501 = vcmp.eq.s32.totalorder %v2455, %v70
  %vm2502 = vcmp.eq.s32.totalorder %v2455, %v71
  %vm2503 = vcmp.eq.s32.totalorder %v2456, %v70
  %vm2504 = vcmp.eq.s32.totalorder %v2456, %v71
  %vm2505 = vcmp.eq.s32.totalorder %v2457, %v70
  %vm2506 = vcmp.eq.s32.totalorder %v2457, %v71
  %vm2507 = vcmp.eq.s32.totalorder %v2458, %v70
  %vm2508 = vcmp.eq.s32.totalorder %v2458, %v71
  %vm2509 = vcmp.eq.s32.totalorder %v2459, %v70
  %vm2510 = vcmp.eq.s32.totalorder %v2459, %v71
  %vm2511 = vcmp.eq.s32.totalorder %v2460, %v70
  %vm2512 = vcmp.eq.s32.totalorder %v2460, %v71
  %vm2513 = vcmp.eq.s32.totalorder %v2461, %v70
  %vm2514 = vcmp.eq.s32.totalorder %v2461, %v71
  %vm2515 = vcmp.eq.s32.totalorder %v2462, %v70
  %vm2516 = vcmp.eq.s32.totalorder %v2462, %v71
  %vm2517 = vcmp.eq.s32.totalorder %v2463, %v70
  %vm2518 = vcmp.eq.s32.totalorder %v2463, %v71
  %vm2519 = vcmp.eq.s32.totalorder %v2464, %v70
  %vm2520 = vcmp.eq.s32.totalorder %v2464, %v71
  %vm2521 = vcmp.eq.s32.totalorder %v2465, %v70
  %vm2522 = vcmp.eq.s32.totalorder %v2465, %v71
  %vm2523 = vcmp.eq.s32.totalorder %v2466, %v70
  %vm2524 = vcmp.eq.s32.totalorder %v2466, %v71
  %vm2525 = vcmp.eq.s32.totalorder %v2467, %v70
  %vm2526 = vcmp.eq.s32.totalorder %v2467, %v71
  %vm2527 = vcmp.eq.s32.totalorder %v2468, %v70
  %vm2528 = vcmp.eq.s32.totalorder %v2468, %v71
  %vm2529 = vcmp.eq.s32.totalorder %v2469, %v70
  %vm2530 = vcmp.eq.s32.totalorder %v2469, %v71
  %vm2531 = vcmp.eq.s32.totalorder %v2470, %v70
  %vm2532 = vcmp.eq.s32.totalorder %v2470, %v71
  %vm2533 = vcmp.eq.s32.totalorder %v2471, %v70
  %vm2534 = vcmp.eq.s32.totalorder %v2471, %v71
  %vm2535 = vcmp.eq.s32.totalorder %v2472, %v70
  %vm2536 = vcmp.eq.s32.totalorder %v2472, %v71
  %v2537 = vsel %vm2473, 1.0, 0.0
  %v2538 = vsel %vm2474, 1.0, 0.0
  %v2539 = vsel %vm2475, 1.0, 0.0
  %v2540 = vsel %vm2476, 1.0, 0.0
  %v2541 = vsel %vm2477, 1.0, 0.0
  %v2542 = vsel %vm2478, 1.0, 0.0
  %v2543 = vsel %vm2479, 1.0, 0.0
  %v2544 = vsel %vm2480, 1.0, 0.0
  %v2545 = vsel %vm2481, 1.0, 0.0
  %v2546 = vsel %vm2482, 1.0, 0.0
  %v2547 = vsel %vm2483, 1.0, 0.0
  %v2548 = vsel %vm2484, 1.0, 0.0
  %v2549 = vsel %vm2485, 1.0, 0.0
  %v2550 = vsel %vm2486, 1.0, 0.0
  %v2551 = vsel %vm2487, 1.0, 0.0
  %v2552 = vsel %vm2488, 1.0, 0.0
  %v2553 = vsel %vm2489, 1.0, 0.0
  %v2554 = vsel %vm2490, 1.0, 0.0
  %v2555 = vsel %vm2491, 1.0, 0.0
  %v2556 = vsel %vm2492, 1.0, 0.0
  %v2557 = vsel %vm2493, 1.0, 0.0
  %v2558 = vsel %vm2494, 1.0, 0.0
  %v2559 = vsel %vm2495, 1.0, 0.0
  %v2560 = vsel %vm2496, 1.0, 0.0
  %v2561 = vsel %vm2497, 1.0, 0.0
  %v2562 = vsel %vm2498, 1.0, 0.0
  %v2563 = vsel %vm2499, 1.0, 0.0
  %v2564 = vsel %vm2500, 1.0, 0.0
  %v2565 = vsel %vm2501, 1.0, 0.0
  %v2566 = vsel %vm2502, 1.0, 0.0
  %v2567 = vsel %vm2503, 1.0, 0.0
  %v2568 = vsel %vm2504, 1.0, 0.0
  %v2569 = vsel %vm2505, 1.0, 0.0
  %v2570 = vsel %vm2506, 1.0, 0.0
  %v2571 = vsel %vm2507, 1.0, 0.0
  %v2572 = vsel %vm2508, 1.0, 0.0
  %v2573 = vsel %vm2509, 1.0, 0.0
  %v2574 = vsel %vm2510, 1.0, 0.0
  %v2575 = vsel %vm2511, 1.0, 0.0
  %v2576 = vsel %vm2512, 1.0, 0.0
  %v2577 = vsel %vm2513, 1.0, 0.0
  %v2578 = vsel %vm2514, 1.0, 0.0
  %v2579 = vsel %vm2515, 1.0, 0.0
  %v2580 = vsel %vm2516, 1.0, 0.0
  %v2581 = vsel %vm2517, 1.0, 0.0
  %v2582 = vsel %vm2518, 1.0, 0.0
  %v2583 = vsel %vm2519, 1.0, 0.0
  %v2584 = vsel %vm2520, 1.0, 0.0
  %v2585 = vsel %vm2521, 1.0, 0.0
  %v2586 = vsel %vm2522, 1.0, 0.0
  %v2587 = vsel %vm2523, 1.0, 0.0
  %v2588 = vsel %vm2524, 1.0, 0.0
  %v2589 = vsel %vm2525, 1.0, 0.0
  %v2590 = vsel %vm2526, 1.0, 0.0
  %v2591 = vsel %vm2527, 1.0, 0.0
  %v2592 = vsel %vm2528, 1.0, 0.0
  %v2593 = vsel %vm2529, 1.0, 0.0
  %v2594 = vsel %vm2530, 1.0, 0.0
  %v2595 = vsel %vm2531, 1.0, 0.0
  %v2596 = vsel %vm2532, 1.0, 0.0
  %v2597 = vsel %vm2533, 1.0, 0.0
  %v2598 = vsel %vm2534, 1.0, 0.0
  %v2599 = vsel %vm2535, 1.0, 0.0
  %v2600 = vsel %vm2536, 1.0, 0.0
  %v2601 = vadd.s32 %v38, 64
  %v2602 = vadd.s32 %v39, 64
  %v2603 = vadd.s32 %v40, 64
  %v2604 = vadd.s32 %v41, 64
  %v2605 = vadd.s32 %v42, 64
  %v2606 = vadd.s32 %v43, 64
  %v2607 = vadd.s32 %v44, 64
  %v2608 = vadd.s32 %v45, 64
  %v2609 = vadd.s32 %v46, 64
  %v2610 = vadd.s32 %v47, 64
  %v2611 = vadd.s32 %v48, 64
  %v2612 = vadd.s32 %v49, 64
  %v2613 = vadd.s32 %v50, 64
  %v2614 = vadd.s32 %v51, 64
  %v2615 = vadd.s32 %v52, 64
  %v2616 = vadd.s32 %v53, 64
  %v2617 = vadd.s32 %v54, 64
  %v2618 = vadd.s32 %v55, 64
  %v2619 = vadd.s32 %v56, 64
  %v2620 = vadd.s32 %v57, 64
  %v2621 = vadd.s32 %v58, 64
  %v2622 = vadd.s32 %v59, 64
  %v2623 = vadd.s32 %v60, 64
  %v2624 = vadd.s32 %v61, 64
  %v2625 = vadd.s32 %v62, 64
  %v2626 = vadd.s32 %v63, 64
  %v2627 = vadd.s32 %v64, 64
  %v2628 = vadd.s32 %v65, 64
  %v2629 = vadd.s32 %v66, 64
  %v2630 = vadd.s32 %v67, 64
  %v2631 = vadd.s32 %v68, 64
  %vm2632 = vcmp.eq.s32.totalorder %v45, %v70
  %vm2633 = vcmp.eq.s32.totalorder %v45, %v71
  %vm2634 = vcmp.eq.s32.totalorder %v2601, %v70
  %vm2635 = vcmp.eq.s32.totalorder %v2601, %v71
  %vm2636 = vcmp.eq.s32.totalorder %v2602, %v70
  %vm2637 = vcmp.eq.s32.totalorder %v2602, %v71
  %vm2638 = vcmp.eq.s32.totalorder %v2603, %v70
  %vm2639 = vcmp.eq.s32.totalorder %v2603, %v71
  %vm2640 = vcmp.eq.s32.totalorder %v2604, %v70
  %vm2641 = vcmp.eq.s32.totalorder %v2604, %v71
  %vm2642 = vcmp.eq.s32.totalorder %v2605, %v70
  %vm2643 = vcmp.eq.s32.totalorder %v2605, %v71
  %vm2644 = vcmp.eq.s32.totalorder %v2606, %v70
  %vm2645 = vcmp.eq.s32.totalorder %v2606, %v71
  %vm2646 = vcmp.eq.s32.totalorder %v2607, %v70
  %vm2647 = vcmp.eq.s32.totalorder %v2607, %v71
  %vm2648 = vcmp.eq.s32.totalorder %v2608, %v70
  %vm2649 = vcmp.eq.s32.totalorder %v2608, %v71
  %vm2650 = vcmp.eq.s32.totalorder %v2609, %v70
  %vm2651 = vcmp.eq.s32.totalorder %v2609, %v71
  %vm2652 = vcmp.eq.s32.totalorder %v2610, %v70
  %vm2653 = vcmp.eq.s32.totalorder %v2610, %v71
  %vm2654 = vcmp.eq.s32.totalorder %v2611, %v70
  %vm2655 = vcmp.eq.s32.totalorder %v2611, %v71
  %vm2656 = vcmp.eq.s32.totalorder %v2612, %v70
  %vm2657 = vcmp.eq.s32.totalorder %v2612, %v71
  %vm2658 = vcmp.eq.s32.totalorder %v2613, %v70
  %vm2659 = vcmp.eq.s32.totalorder %v2613, %v71
  %vm2660 = vcmp.eq.s32.totalorder %v2614, %v70
  %vm2661 = vcmp.eq.s32.totalorder %v2614, %v71
  %vm2662 = vcmp.eq.s32.totalorder %v2615, %v70
  %vm2663 = vcmp.eq.s32.totalorder %v2615, %v71
  %vm2664 = vcmp.eq.s32.totalorder %v2616, %v70
  %vm2665 = vcmp.eq.s32.totalorder %v2616, %v71
  %vm2666 = vcmp.eq.s32.totalorder %v2617, %v70
  %vm2667 = vcmp.eq.s32.totalorder %v2617, %v71
  %vm2668 = vcmp.eq.s32.totalorder %v2618, %v70
  %vm2669 = vcmp.eq.s32.totalorder %v2618, %v71
  %vm2670 = vcmp.eq.s32.totalorder %v2619, %v70
  %vm2671 = vcmp.eq.s32.totalorder %v2619, %v71
  %vm2672 = vcmp.eq.s32.totalorder %v2620, %v70
  %vm2673 = vcmp.eq.s32.totalorder %v2620, %v71
  %vm2674 = vcmp.eq.s32.totalorder %v2621, %v70
  %vm2675 = vcmp.eq.s32.totalorder %v2621, %v71
  %vm2676 = vcmp.eq.s32.totalorder %v2622, %v70
  %vm2677 = vcmp.eq.s32.totalorder %v2622, %v71
  %vm2678 = vcmp.eq.s32.totalorder %v2623, %v70
  %vm2679 = vcmp.eq.s32.totalorder %v2623, %v71
  %vm2680 = vcmp.eq.s32.totalorder %v2624, %v70
  %vm2681 = vcmp.eq.s32.totalorder %v2624, %v71
  %vm2682 = vcmp.eq.s32.totalorder %v2625, %v70
  %vm2683 = vcmp.eq.s32.totalorder %v2625, %v71
  %vm2684 = vcmp.eq.s32.totalorder %v2626, %v70
  %vm2685 = vcmp.eq.s32.totalorder %v2626, %v71
  %vm2686 = vcmp.eq.s32.totalorder %v2627, %v70
  %vm2687 = vcmp.eq.s32.totalorder %v2627, %v71
  %vm2688 = vcmp.eq.s32.totalorder %v2628, %v70
  %vm2689 = vcmp.eq.s32.totalorder %v2628, %v71
  %vm2690 = vcmp.eq.s32.totalorder %v2629, %v70
  %vm2691 = vcmp.eq.s32.totalorder %v2629, %v71
  %vm2692 = vcmp.eq.s32.totalorder %v2630, %v70
  %vm2693 = vcmp.eq.s32.totalorder %v2630, %v71
  %vm2694 = vcmp.eq.s32.totalorder %v2631, %v70
  %vm2695 = vcmp.eq.s32.totalorder %v2631, %v71
  %v2696 = vsel %vm2632, 1.0, 0.0
  %v2697 = vsel %vm2633, 1.0, 0.0
  %v2698 = vsel %vm2634, 1.0, 0.0
  %v2699 = vsel %vm2635, 1.0, 0.0
  %v2700 = vsel %vm2636, 1.0, 0.0
  %v2701 = vsel %vm2637, 1.0, 0.0
  %v2702 = vsel %vm2638, 1.0, 0.0
  %v2703 = vsel %vm2639, 1.0, 0.0
  %v2704 = vsel %vm2640, 1.0, 0.0
  %v2705 = vsel %vm2641, 1.0, 0.0
  %v2706 = vsel %vm2642, 1.0, 0.0
  %v2707 = vsel %vm2643, 1.0, 0.0
  %v2708 = vsel %vm2644, 1.0, 0.0
  %v2709 = vsel %vm2645, 1.0, 0.0
  %v2710 = vsel %vm2646, 1.0, 0.0
  %v2711 = vsel %vm2647, 1.0, 0.0
  %v2712 = vsel %vm2648, 1.0, 0.0
  %v2713 = vsel %vm2649, 1.0, 0.0
  %v2714 = vsel %vm2650, 1.0, 0.0
  %v2715 = vsel %vm2651, 1.0, 0.0
  %v2716 = vsel %vm2652, 1.0, 0.0
  %v2717 = vsel %vm2653, 1.0, 0.0
  %v2718 = vsel %vm2654, 1.0, 0.0
  %v2719 = vsel %vm2655, 1.0, 0.0
  %v2720 = vsel %vm2656, 1.0, 0.0
  %v2721 = vsel %vm2657, 1.0, 0.0
  %v2722 = vsel %vm2658, 1.0, 0.0
  %v2723 = vsel %vm2659, 1.0, 0.0
  %v2724 = vsel %vm2660, 1.0, 0.0
  %v2725 = vsel %vm2661, 1.0, 0.0
  %v2726 = vsel %vm2662, 1.0, 0.0
  %v2727 = vsel %vm2663, 1.0, 0.0
  %v2728 = vsel %vm2664, 1.0, 0.0
  %v2729 = vsel %vm2665, 1.0, 0.0
  %v2730 = vsel %vm2666, 1.0, 0.0
  %v2731 = vsel %vm2667, 1.0, 0.0
  %v2732 = vsel %vm2668, 1.0, 0.0
  %v2733 = vsel %vm2669, 1.0, 0.0
  %v2734 = vsel %vm2670, 1.0, 0.0
  %v2735 = vsel %vm2671, 1.0, 0.0
  %v2736 = vsel %vm2672, 1.0, 0.0
  %v2737 = vsel %vm2673, 1.0, 0.0
  %v2738 = vsel %vm2674, 1.0, 0.0
  %v2739 = vsel %vm2675, 1.0, 0.0
  %v2740 = vsel %vm2676, 1.0, 0.0
  %v2741 = vsel %vm2677, 1.0, 0.0
  %v2742 = vsel %vm2678, 1.0, 0.0
  %v2743 = vsel %vm2679, 1.0, 0.0
  %v2744 = vsel %vm2680, 1.0, 0.0
  %v2745 = vsel %vm2681, 1.0, 0.0
  %v2746 = vsel %vm2682, 1.0, 0.0
  %v2747 = vsel %vm2683, 1.0, 0.0
  %v2748 = vsel %vm2684, 1.0, 0.0
  %v2749 = vsel %vm2685, 1.0, 0.0
  %v2750 = vsel %vm2686, 1.0, 0.0
  %v2751 = vsel %vm2687, 1.0, 0.0
  %v2752 = vsel %vm2688, 1.0, 0.0
  %v2753 = vsel %vm2689, 1.0, 0.0
  %v2754 = vsel %vm2690, 1.0, 0.0
  %v2755 = vsel %vm2691, 1.0, 0.0
  %v2756 = vsel %vm2692, 1.0, 0.0
  %v2757 = vsel %vm2693, 1.0, 0.0
  %v2758 = vsel %vm2694, 1.0, 0.0
  %v2759 = vsel %vm2695, 1.0, 0.0
  %v2760 = vld [vmem:[%s5] sm:$0xff]
  %v2761 = vld [vmem:[%s5 + $0x8] sm:$0xff]
  %v2762 = vld [vmem:[%s5 + $0x10] sm:$0xff]
  %v2763 = vld [vmem:[%s5 + $0x18] sm:$0xff]
  %s2764 = scalar_lea.vmem %s5, 32
  %v2765 = vld [vmem:[%s2764] sm:$0xff]
  %v2766 = vld [vmem:[%s2764 + $0x8] sm:$0xff]
  %v2767 = vld [vmem:[%s2764 + $0x10] sm:$0xff]
  %v2768 = vld [vmem:[%s2764 + $0x18] sm:$0xff]
  %2769 = vmatprep.subr.mxu0 %v2250
  %2770 = vmatpush1.msra.mxu0 %v2249
  %2771 = vmatprep.subr.mxu0 %v2248
  %2772 = vmatpush1.msra.mxu0 %v2247
  %2773 = vmatprep.subr.mxu0 %v2246
  %2774 = vmatpush1.msra.mxu0 %v2245
  %2775 = vmatprep.subr.mxu0 %v2244
  %2776 = vmatpush1.msra.mxu0 %v2243
  %2777 = vmatprep.subr.mxu0 %v2242
  %2778 = vmatpush1.msra.mxu0 %v2241
  %2779 = vmatprep.subr.mxu0 %v2240
  %2780 = vmatpush1.msra.mxu0 %v2239
  %2781 = vmatprep.subr.mxu0 %v2238
  %2782 = vmatpush1.msra.mxu0 %v2237
  %2783 = vmatprep.subr.mxu0 %v2236
  %2784 = vmatpush1.msra.mxu0 %v2235
  %2785 = vmatprep.subr.mxu0 %v2234
  %2786 = vmatpush1.msra.mxu0 %v2233
  %2787 = vmatprep.subr.mxu0 %v2232
  %2788 = vmatpush1.msra.mxu0 %v2231
  %2789 = vmatprep.subr.mxu0 %v2230
  %2790 = vmatpush1.msra.mxu0 %v2229
  %2791 = vmatprep.subr.mxu0 %v2228
  %2792 = vmatpush1.msra.mxu0 %v2227
  %2793 = vmatprep.subr.mxu0 %v2226
  %2794 = vmatpush1.msra.mxu0 %v2225
  %2795 = vmatprep.subr.mxu0 %v2224
  %2796 = vmatpush1.msra.mxu0 %v2223
  %2797 = vmatprep.subr.mxu0 %v2222
  %2798 = vmatpush1.msra.mxu0 %v2221
  %2799 = vmatprep.subr.mxu0 %v2220
  %2800 = vmatpush1.msra.mxu0 %v2219
  %2801 = vmatprep.subr.mxu0 %v2282
  %2802 = vmatpush2.msra.mxu0 %v2281
  %2803 = vmatprep.subr.mxu0 %v2280
  %2804 = vmatpush2.msra.mxu0 %v2279
  %2805 = vmatprep.subr.mxu0 %v2278
  %2806 = vmatpush2.msra.mxu0 %v2277
  %2807 = vmatprep.subr.mxu0 %v2276
  %2808 = vmatpush2.msra.mxu0 %v2275
  %2809 = vmatprep.subr.mxu0 %v2274
  %2810 = vmatpush2.msra.mxu0 %v2273
  %2811 = vmatprep.subr.mxu0 %v2272
  %2812 = vmatpush2.msra.mxu0 %v2271
  %2813 = vmatprep.subr.mxu0 %v2270
  %2814 = vmatpush2.msra.mxu0 %v2269
  %2815 = vmatprep.subr.mxu0 %v2268
  %2816 = vmatpush2.msra.mxu0 %v2267
  %2817 = vmatprep.subr.mxu0 %v2266
  %2818 = vmatpush2.msra.mxu0 %v2265
  %2819 = vmatprep.subr.mxu0 %v2264
  %2820 = vmatpush2.msra.mxu0 %v2263
  %2821 = vmatprep.subr.mxu0 %v2262
  %2822 = vmatpush2.msra.mxu0 %v2261
  %2823 = vmatprep.subr.mxu0 %v2260
  %2824 = vmatpush2.msra.mxu0 %v2259
  %2825 = vmatprep.subr.mxu0 %v2258
  %2826 = vmatpush2.msra.mxu0 %v2257
  %2827 = vmatprep.subr.mxu0 %v2256
  %2828 = vmatpush2.msra.mxu0 %v2255
  %2829 = vmatprep.subr.mxu0 %v2254
  %2830 = vmatpush2.msra.mxu0 %v2253
  %2831 = vmatprep.subr.mxu0 %v2252
  %2832 = vmatpush2.msra.mxu0 %v2251
  %2833 = vmatprep.mubr.f32.mxu0 %v2117
  %2834 = vmatmul.mubr.f32.gmra.mxu0 %v2116
  %v2835 = vpop.f32.mrf.mxu0
  %v2836 = vadd.f32 0.0, %v2835
  %v2837 = vpop.f32.mrf.mxu0
  %v2838 = vadd.f32 0.0, %v2837
  %2839 = vmatprep.mubr.f32.mxu0 %v2119
  %2840 = vmatmul.mubr.f32.gmra.mxu0 %v2118
  %v2841 = vpop.f32.mrf.mxu0
  %v2842 = vadd.f32 0.0, %v2841
  %v2843 = vpop.f32.mrf.mxu0
  %v2844 = vadd.f32 0.0, %v2843
  %2845 = vmatprep.mubr.f32.mxu0 %v2121
  %2846 = vmatmul.mubr.f32.gmra.mxu0 %v2120
  %v2847 = vpop.f32.mrf.mxu0
  %v2848 = vadd.f32 0.0, %v2847
  %v2849 = vpop.f32.mrf.mxu0
  %v2850 = vadd.f32 0.0, %v2849
  %2851 = vmatprep.mubr.f32.mxu0 %v2123
  %2852 = vmatmul.mubr.f32.gmra.mxu0 %v2122
  %v2853 = vpop.f32.mrf.mxu0
  %v2854 = vadd.f32 0.0, %v2853
  %v2855 = vpop.f32.mrf.mxu0
  %v2856 = vadd.f32 0.0, %v2855
  %2857 = vdwg.mxu0
  %v2859 = vsel %vm1254, %v2765, 0
  %v2862 = vsel %vm1254, %v2766, 0
  %v2865 = vsel %vm1254, %v2767, 0
  %v2868 = vsel %vm1254, %v2768, 0
  %2870 = vmatprep.subr.mxu0 0.0
  %2871 = vmatpush1.msra.mxu0 0.0
  %2872 = vmatprep.subr.mxu0 0.0
  %2873 = vmatpush1.msra.mxu0 0.0
  %2874 = vmatprep.subr.mxu0 0.0
  %2875 = vmatpush1.msra.mxu0 0.0
  %2876 = vmatprep.subr.mxu0 0.0
  %2877 = vmatpush1.msra.mxu0 0.0
  %2878 = vmatprep.subr.mxu0 0.0
  %2879 = vmatpush1.msra.mxu0 0.0
  %2880 = vmatprep.subr.mxu0 0.0
  %2881 = vmatpush1.msra.mxu0 0.0
  %2882 = vmatprep.subr.mxu0 0.0
  %2883 = vmatpush1.msra.mxu0 0.0
  %2884 = vmatprep.subr.mxu0 0.0
  %2885 = vmatpush1.msra.mxu0 0.0
  %2886 = vmatprep.subr.mxu0 0.0
  %2887 = vmatpush1.msra.mxu0 0.0
  %2888 = vmatprep.subr.mxu0 0.0
  %2889 = vmatpush1.msra.mxu0 0.0
  %2890 = vmatprep.subr.mxu0 0.0
  %2891 = vmatpush1.msra.mxu0 0.0
  %2892 = vmatprep.subr.mxu0 0.0
  %2893 = vmatpush1.msra.mxu0 0.0
  %2894 = vmatprep.subr.mxu0 %v2856
  %2895 = vmatpush1.msra.mxu0 %v2854
  %2896 = vmatprep.subr.mxu0 %v2850
  %2897 = vmatpush1.msra.mxu0 %v2848
  %2898 = vmatprep.subr.mxu0 %v2844
  %2899 = vmatpush1.msra.mxu0 %v2842
  %2900 = vmatprep.subr.mxu0 %v2838
  %2901 = vmatpush1.msra.mxu0 %v2836
  %2902 = vmatprep.subr.mxu0 0.0
  %2903 = vmatpush2.msra.mxu0 0.0
  %2904 = vmatprep.subr.mxu0 0.0
  %2905 = vmatpush2.msra.mxu0 0.0
  %2906 = vmatprep.subr.mxu0 0.0
  %2907 = vmatpush2.msra.mxu0 0.0
  %2908 = vmatprep.subr.mxu0 0.0
  %2909 = vmatpush2.msra.mxu0 0.0
  %2910 = vmatprep.subr.mxu0 0.0
  %2911 = vmatpush2.msra.mxu0 0.0
  %2912 = vmatprep.subr.mxu0 0.0
  %2913 = vmatpush2.msra.mxu0 0.0
  %2914 = vmatprep.subr.mxu0 0.0
  %2915 = vmatpush2.msra.mxu0 0.0
  %2916 = vmatprep.subr.mxu0 0.0
  %2917 = vmatpush2.msra.mxu0 0.0
  %2918 = vmatprep.subr.mxu0 0.0
  %2919 = vmatpush2.msra.mxu0 0.0
  %2920 = vmatprep.subr.mxu0 0.0
  %2921 = vmatpush2.msra.mxu0 0.0
  %2922 = vmatprep.subr.mxu0 0.0
  %2923 = vmatpush2.msra.mxu0 0.0
  %2924 = vmatprep.subr.mxu0 0.0
  %2925 = vmatpush2.msra.mxu0 0.0
  %2926 = vmatprep.subr.mxu0 0.0
  %2927 = vmatpush2.msra.mxu0 0.0
  %2928 = vmatprep.subr.mxu0 0.0
  %2929 = vmatpush2.msra.mxu0 0.0
  %2930 = vmatprep.subr.mxu0 0.0
  %2931 = vmatpush2.msra.mxu0 0.0
  %2932 = vmatprep.subr.mxu0 0.0
  %2933 = vmatpush2.msra.mxu0 0.0
  %2934 = vmatprep.mubr.f32.mxu0 0.0
  %2935 = vmatmul.mubr.f32.gmra.mxu0 %v2859
  %v2936 = vpop.f32.mrf.mxu0
  %v2937 = vadd.f32 0.0, %v2936
  %v2938 = vpop.f32.mrf.mxu0
  %v2939 = vadd.f32 0.0, %v2938
  %2940 = vmatprep.mubr.f32.mxu0 0.0
  %2941 = vmatmul.mubr.f32.gmra.mxu0 %v2862
  %v2942 = vpop.f32.mrf.mxu0
  %v2943 = vadd.f32 0.0, %v2942
  %v2944 = vpop.f32.mrf.mxu0
  %v2945 = vadd.f32 0.0, %v2944
  %2946 = vmatprep.mubr.f32.mxu0 0.0
  %2947 = vmatmul.mubr.f32.gmra.mxu0 %v2865
  %v2948 = vpop.f32.mrf.mxu0
  %v2949 = vadd.f32 0.0, %v2948
  %v2950 = vpop.f32.mrf.mxu0
  %v2951 = vadd.f32 0.0, %v2950
  %2952 = vmatprep.mubr.f32.mxu0 0.0
  %2953 = vmatmul.mubr.f32.gmra.mxu0 %v2868
  %v2954 = vpop.f32.mrf.mxu0
  %v2955 = vadd.f32 0.0, %v2954
  %v2956 = vpop.f32.mrf.mxu0
  %v2957 = vadd.f32 0.0, %v2956
  %2958 = vdwg.mxu0
  %v2960 = vsel %vm1254, %v2760, 0
  %v2963 = vsel %vm1254, %v2761, 0
  %v2966 = vsel %vm1254, %v2762, 0
  %v2969 = vsel %vm1254, %v2763, 0
  %2971 = vmatprep.subr.mxu0 0.0
  %2972 = vmatpush1.msra.mxu0 0.0
  %2973 = vmatprep.subr.mxu0 0.0
  %2974 = vmatpush1.msra.mxu0 0.0
  %2975 = vmatprep.subr.mxu0 0.0
  %2976 = vmatpush1.msra.mxu0 0.0
  %2977 = vmatprep.subr.mxu0 0.0
  %2978 = vmatpush1.msra.mxu0 0.0
  %2979 = vmatprep.subr.mxu0 0.0
  %2980 = vmatpush1.msra.mxu0 0.0
  %2981 = vmatprep.subr.mxu0 0.0
  %2982 = vmatpush1.msra.mxu0 0.0
  %2983 = vmatprep.subr.mxu0 0.0
  %2984 = vmatpush1.msra.mxu0 0.0
  %2985 = vmatprep.subr.mxu0 0.0
  %2986 = vmatpush1.msra.mxu0 0.0
  %2987 = vmatprep.subr.mxu0 0.0
  %2988 = vmatpush1.msra.mxu0 0.0
  %2989 = vmatprep.subr.mxu0 0.0
  %2990 = vmatpush1.msra.mxu0 0.0
  %2991 = vmatprep.subr.mxu0 0.0
  %2992 = vmatpush1.msra.mxu0 0.0
  %2993 = vmatprep.subr.mxu0 0.0
  %2994 = vmatpush1.msra.mxu0 0.0
  %2995 = vmatprep.subr.mxu0 %v2123
  %2996 = vmatpush1.msra.mxu0 %v2122
  %2997 = vmatprep.subr.mxu0 %v2121
  %2998 = vmatpush1.msra.mxu0 %v2120
  %2999 = vmatprep.subr.mxu0 %v2119
  %3000 = vmatpush1.msra.mxu0 %v2118
  %3001 = vmatprep.subr.mxu0 %v2117
  %3002 = vmatpush1.msra.mxu0 %v2116
  %3003 = vmatprep.subr.mxu0 0.0
  %3004 = vmatpush2.msra.mxu0 0.0
  %3005 = vmatprep.subr.mxu0 0.0
  %3006 = vmatpush2.msra.mxu0 0.0
  %3007 = vmatprep.subr.mxu0 0.0
  %3008 = vmatpush2.msra.mxu0 0.0
  %3009 = vmatprep.subr.mxu0 0.0
  %3010 = vmatpush2.msra.mxu0 0.0
  %3011 = vmatprep.subr.mxu0 0.0
  %3012 = vmatpush2.msra.mxu0 0.0
  %3013 = vmatprep.subr.mxu0 0.0
  %3014 = vmatpush2.msra.mxu0 0.0
  %3015 = vmatprep.subr.mxu0 0.0
  %3016 = vmatpush2.msra.mxu0 0.0
  %3017 = vmatprep.subr.mxu0 0.0
  %3018 = vmatpush2.msra.mxu0 0.0
  %3019 = vmatprep.subr.mxu0 0.0
  %3020 = vmatpush2.msra.mxu0 0.0
  %3021 = vmatprep.subr.mxu0 0.0
  %3022 = vmatpush2.msra.mxu0 0.0
  %3023 = vmatprep.subr.mxu0 0.0
  %3024 = vmatpush2.msra.mxu0 0.0
  %3025 = vmatprep.subr.mxu0 0.0
  %3026 = vmatpush2.msra.mxu0 0.0
  %3027 = vmatprep.subr.mxu0 0.0
  %3028 = vmatpush2.msra.mxu0 0.0
  %3029 = vmatprep.subr.mxu0 0.0
  %3030 = vmatpush2.msra.mxu0 0.0
  %3031 = vmatprep.subr.mxu0 0.0
  %3032 = vmatpush2.msra.mxu0 0.0
  %3033 = vmatprep.subr.mxu0 0.0
  %3034 = vmatpush2.msra.mxu0 0.0
  %3035 = vmatprep.mubr.f32.mxu0 0.0
  %3036 = vmatmul.mubr.f32.gmra.mxu0 %v2960
  %v3037 = vpop.f32.mrf.mxu0
  %v3038 = vadd.f32 %v2937, %v3037
  %v3039 = vpop.f32.mrf.mxu0
  %v3040 = vadd.f32 %v2939, %v3039
  %3041 = vmatprep.mubr.f32.mxu0 0.0
  %3042 = vmatmul.mubr.f32.gmra.mxu0 %v2963
  %v3043 = vpop.f32.mrf.mxu0
  %v3044 = vadd.f32 %v2943, %v3043
  %v3045 = vpop.f32.mrf.mxu0
  %v3046 = vadd.f32 %v2945, %v3045
  %3047 = vmatprep.mubr.f32.mxu0 0.0
  %3048 = vmatmul.mubr.f32.gmra.mxu0 %v2966
  %v3049 = vpop.f32.mrf.mxu0
  %v3050 = vadd.f32 %v2949, %v3049
  %v3051 = vpop.f32.mrf.mxu0
  %v3052 = vadd.f32 %v2951, %v3051
  %3053 = vmatprep.mubr.f32.mxu0 0.0
  %3054 = vmatmul.mubr.f32.gmra.mxu0 %v2969
  %v3055 = vpop.f32.mrf.mxu0
  %v3056 = vadd.f32 %v2955, %v3055
  %v3057 = vpop.f32.mrf.mxu0
  %v3058 = vadd.f32 %v2957, %v3057
  %3059 = vdwg.mxu0
  %s3060 = scalar_lea.vmem %s5, 64
  %v3061 = vld [vmem:[%s3060] sm:$0xff]
  %v3062 = vld [vmem:[%s3060 + $0x8] sm:$0xff]
  %v3063 = vld [vmem:[%s3060 + $0x10] sm:$0xff]
  %v3064 = vld [vmem:[%s3060 + $0x18] sm:$0xff]
  %3065 = vmatprep.subr.mxu0 %v2409
  %3066 = vmatpush1.msra.mxu0 %v2408
  %3067 = vmatprep.subr.mxu0 %v2407
  %3068 = vmatpush1.msra.mxu0 %v2406
  %3069 = vmatprep.subr.mxu0 %v2405
  %3070 = vmatpush1.msra.mxu0 %v2404
  %3071 = vmatprep.subr.mxu0 %v2403
  %3072 = vmatpush1.msra.mxu0 %v2402
  %3073 = vmatprep.subr.mxu0 %v2401
  %3074 = vmatpush1.msra.mxu0 %v2400
  %3075 = vmatprep.subr.mxu0 %v2399
  %3076 = vmatpush1.msra.mxu0 %v2398
  %3077 = vmatprep.subr.mxu0 %v2397
  %3078 = vmatpush1.msra.mxu0 %v2396
  %3079 = vmatprep.subr.mxu0 %v2395
  %3080 = vmatpush1.msra.mxu0 %v2394
  %3081 = vmatprep.subr.mxu0 %v2393
  %3082 = vmatpush1.msra.mxu0 %v2392
  %3083 = vmatprep.subr.mxu0 %v2391
  %3084 = vmatpush1.msra.mxu0 %v2390
  %3085 = vmatprep.subr.mxu0 %v2389
  %3086 = vmatpush1.msra.mxu0 %v2388
  %3087 = vmatprep.subr.mxu0 %v2387
  %3088 = vmatpush1.msra.mxu0 %v2386
  %3089 = vmatprep.subr.mxu0 %v2385
  %3090 = vmatpush1.msra.mxu0 %v2384
  %3091 = vmatprep.subr.mxu0 %v2383
  %3092 = vmatpush1.msra.mxu0 %v2382
  %3093 = vmatprep.subr.mxu0 %v2381
  %3094 = vmatpush1.msra.mxu0 %v2380
  %3095 = vmatprep.subr.mxu0 %v2379
  %3096 = vmatpush1.msra.mxu0 %v2378
  %3097 = vmatprep.subr.mxu0 %v2441
  %3098 = vmatpush2.msra.mxu0 %v2440
  %3099 = vmatprep.subr.mxu0 %v2439
  %3100 = vmatpush2.msra.mxu0 %v2438
  %3101 = vmatprep.subr.mxu0 %v2437
  %3102 = vmatpush2.msra.mxu0 %v2436
  %3103 = vmatprep.subr.mxu0 %v2435
  %3104 = vmatpush2.msra.mxu0 %v2434
  %3105 = vmatprep.subr.mxu0 %v2433
  %3106 = vmatpush2.msra.mxu0 %v2432
  %3107 = vmatprep.subr.mxu0 %v2431
  %3108 = vmatpush2.msra.mxu0 %v2430
  %3109 = vmatprep.subr.mxu0 %v2429
  %3110 = vmatpush2.msra.mxu0 %v2428
  %3111 = vmatprep.subr.mxu0 %v2427
  %3112 = vmatpush2.msra.mxu0 %v2426
  %3113 = vmatprep.subr.mxu0 %v2425
  %3114 = vmatpush2.msra.mxu0 %v2424
  %3115 = vmatprep.subr.mxu0 %v2423
  %3116 = vmatpush2.msra.mxu0 %v2422
  %3117 = vmatprep.subr.mxu0 %v2421
  %3118 = vmatpush2.msra.mxu0 %v2420
  %3119 = vmatprep.subr.mxu0 %v2419
  %3120 = vmatpush2.msra.mxu0 %v2418
  %3121 = vmatprep.subr.mxu0 %v2417
  %3122 = vmatpush2.msra.mxu0 %v2416
  %3123 = vmatprep.subr.mxu0 %v2415
  %3124 = vmatpush2.msra.mxu0 %v2414
  %3125 = vmatprep.subr.mxu0 %v2413
  %3126 = vmatpush2.msra.mxu0 %v2412
  %3127 = vmatprep.subr.mxu0 %v2411
  %3128 = vmatpush2.msra.mxu0 %v2410
  %3129 = vmatprep.mubr.f32.mxu0 %v2117
  %3130 = vmatmul.mubr.f32.gmra.mxu0 %v2116
  %v3131 = vpop.f32.mrf.mxu0
  %v3132 = vadd.f32 0.0, %v3131
  %v3133 = vpop.f32.mrf.mxu0
  %v3134 = vadd.f32 0.0, %v3133
  %3135 = vmatprep.mubr.f32.mxu0 %v2119
  %3136 = vmatmul.mubr.f32.gmra.mxu0 %v2118
  %v3137 = vpop.f32.mrf.mxu0
  %v3138 = vadd.f32 0.0, %v3137
  %v3139 = vpop.f32.mrf.mxu0
  %v3140 = vadd.f32 0.0, %v3139
  %3141 = vmatprep.mubr.f32.mxu0 %v2121
  %3142 = vmatmul.mubr.f32.gmra.mxu0 %v2120
  %v3143 = vpop.f32.mrf.mxu0
  %v3144 = vadd.f32 0.0, %v3143
  %v3145 = vpop.f32.mrf.mxu0
  %v3146 = vadd.f32 0.0, %v3145
  %3147 = vmatprep.mubr.f32.mxu0 %v2123
  %3148 = vmatmul.mubr.f32.gmra.mxu0 %v2122
  %v3149 = vpop.f32.mrf.mxu0
  %v3150 = vadd.f32 0.0, %v3149
  %v3151 = vpop.f32.mrf.mxu0
  %v3152 = vadd.f32 0.0, %v3151
  %3153 = vdwg.mxu0
  %v3155 = vsel %vm1254, %v3061, 0
  %v3158 = vsel %vm1254, %v3062, 0
  %v3161 = vsel %vm1254, %v3063, 0
  %v3164 = vsel %vm1254, %v3064, 0
  %3166 = vmatprep.subr.mxu0 0.0
  %3167 = vmatpush1.msra.mxu0 0.0
  %3168 = vmatprep.subr.mxu0 0.0
  %3169 = vmatpush1.msra.mxu0 0.0
  %3170 = vmatprep.subr.mxu0 0.0
  %3171 = vmatpush1.msra.mxu0 0.0
  %3172 = vmatprep.subr.mxu0 0.0
  %3173 = vmatpush1.msra.mxu0 0.0
  %3174 = vmatprep.subr.mxu0 0.0
  %3175 = vmatpush1.msra.mxu0 0.0
  %3176 = vmatprep.subr.mxu0 0.0
  %3177 = vmatpush1.msra.mxu0 0.0
  %3178 = vmatprep.subr.mxu0 0.0
  %3179 = vmatpush1.msra.mxu0 0.0
  %3180 = vmatprep.subr.mxu0 0.0
  %3181 = vmatpush1.msra.mxu0 0.0
  %3182 = vmatprep.subr.mxu0 0.0
  %3183 = vmatpush1.msra.mxu0 0.0
  %3184 = vmatprep.subr.mxu0 0.0
  %3185 = vmatpush1.msra.mxu0 0.0
  %3186 = vmatprep.subr.mxu0 0.0
  %3187 = vmatpush1.msra.mxu0 0.0
  %3188 = vmatprep.subr.mxu0 0.0
  %3189 = vmatpush1.msra.mxu0 0.0
  %3190 = vmatprep.subr.mxu0 %v3152
  %3191 = vmatpush1.msra.mxu0 %v3150
  %3192 = vmatprep.subr.mxu0 %v3146
  %3193 = vmatpush1.msra.mxu0 %v3144
  %3194 = vmatprep.subr.mxu0 %v3140
  %3195 = vmatpush1.msra.mxu0 %v3138
  %3196 = vmatprep.subr.mxu0 %v3134
  %3197 = vmatpush1.msra.mxu0 %v3132
  %3198 = vmatprep.subr.mxu0 0.0
  %3199 = vmatpush2.msra.mxu0 0.0
  %3200 = vmatprep.subr.mxu0 0.0
  %3201 = vmatpush2.msra.mxu0 0.0
  %3202 = vmatprep.subr.mxu0 0.0
  %3203 = vmatpush2.msra.mxu0 0.0
  %3204 = vmatprep.subr.mxu0 0.0
  %3205 = vmatpush2.msra.mxu0 0.0
  %3206 = vmatprep.subr.mxu0 0.0
  %3207 = vmatpush2.msra.mxu0 0.0
  %3208 = vmatprep.subr.mxu0 0.0
  %3209 = vmatpush2.msra.mxu0 0.0
  %3210 = vmatprep.subr.mxu0 0.0
  %3211 = vmatpush2.msra.mxu0 0.0
  %3212 = vmatprep.subr.mxu0 0.0
  %3213 = vmatpush2.msra.mxu0 0.0
  %3214 = vmatprep.subr.mxu0 0.0
  %3215 = vmatpush2.msra.mxu0 0.0
  %3216 = vmatprep.subr.mxu0 0.0
  %3217 = vmatpush2.msra.mxu0 0.0
  %3218 = vmatprep.subr.mxu0 0.0
  %3219 = vmatpush2.msra.mxu0 0.0
  %3220 = vmatprep.subr.mxu0 0.0
  %3221 = vmatpush2.msra.mxu0 0.0
  %3222 = vmatprep.subr.mxu0 0.0
  %3223 = vmatpush2.msra.mxu0 0.0
  %3224 = vmatprep.subr.mxu0 0.0
  %3225 = vmatpush2.msra.mxu0 0.0
  %3226 = vmatprep.subr.mxu0 0.0
  %3227 = vmatpush2.msra.mxu0 0.0
  %3228 = vmatprep.subr.mxu0 0.0
  %3229 = vmatpush2.msra.mxu0 0.0
  %3230 = vmatprep.mubr.f32.mxu0 0.0
  %3231 = vmatmul.mubr.f32.gmra.mxu0 %v3155
  %v3232 = vpop.f32.mrf.mxu0
  %v3233 = vadd.f32 0.0, %v3232
  %v3234 = vpop.f32.mrf.mxu0
  %v3235 = vadd.f32 0.0, %v3234
  %3236 = vmatprep.mubr.f32.mxu0 0.0
  %3237 = vmatmul.mubr.f32.gmra.mxu0 %v3158
  %v3238 = vpop.f32.mrf.mxu0
  %v3239 = vadd.f32 0.0, %v3238
  %v3240 = vpop.f32.mrf.mxu0
  %v3241 = vadd.f32 0.0, %v3240
  %3242 = vmatprep.mubr.f32.mxu0 0.0
  %3243 = vmatmul.mubr.f32.gmra.mxu0 %v3161
  %v3244 = vpop.f32.mrf.mxu0
  %v3245 = vadd.f32 0.0, %v3244
  %v3246 = vpop.f32.mrf.mxu0
  %v3247 = vadd.f32 0.0, %v3246
  %3248 = vmatprep.mubr.f32.mxu0 0.0
  %3249 = vmatmul.mubr.f32.gmra.mxu0 %v3164
  %v3250 = vpop.f32.mrf.mxu0
  %v3251 = vadd.f32 0.0, %v3250
  %v3252 = vpop.f32.mrf.mxu0
  %v3253 = vadd.f32 0.0, %v3252
  %3254 = vdwg.mxu0
  %v3255 = vadd.f32 %v3038, %v3233
  %v3256 = vadd.f32 %v3040, %v3235
  %v3257 = vadd.f32 %v3044, %v3239
  %v3258 = vadd.f32 %v3046, %v3241
  %v3259 = vadd.f32 %v3050, %v3245
  %v3260 = vadd.f32 %v3052, %v3247
  %v3261 = vadd.f32 %v3056, %v3251
  %v3262 = vadd.f32 %v3058, %v3253
  %s3263 = scalar_lea.vmem %s5, 96
  %v3264 = vld [vmem:[%s3263] sm:$0xff]
  %v3265 = vld [vmem:[%s3263 + $0x8] sm:$0xff]
  %v3266 = vld [vmem:[%s3263 + $0x10] sm:$0xff]
  %v3267 = vld [vmem:[%s3263 + $0x18] sm:$0xff]
  %3268 = vmatprep.subr.mxu0 %v2568
  %3269 = vmatpush1.msra.mxu0 %v2567
  %3270 = vmatprep.subr.mxu0 %v2566
  %3271 = vmatpush1.msra.mxu0 %v2565
  %3272 = vmatprep.subr.mxu0 %v2564
  %3273 = vmatpush1.msra.mxu0 %v2563
  %3274 = vmatprep.subr.mxu0 %v2562
  %3275 = vmatpush1.msra.mxu0 %v2561
  %3276 = vmatprep.subr.mxu0 %v2560
  %3277 = vmatpush1.msra.mxu0 %v2559
  %3278 = vmatprep.subr.mxu0 %v2558
  %3279 = vmatpush1.msra.mxu0 %v2557
  %3280 = vmatprep.subr.mxu0 %v2556
  %3281 = vmatpush1.msra.mxu0 %v2555
  %3282 = vmatprep.subr.mxu0 %v2554
  %3283 = vmatpush1.msra.mxu0 %v2553
  %3284 = vmatprep.subr.mxu0 %v2552
  %3285 = vmatpush1.msra.mxu0 %v2551
  %3286 = vmatprep.subr.mxu0 %v2550
  %3287 = vmatpush1.msra.mxu0 %v2549
  %3288 = vmatprep.subr.mxu0 %v2548
  %3289 = vmatpush1.msra.mxu0 %v2547
  %3290 = vmatprep.subr.mxu0 %v2546
  %3291 = vmatpush1.msra.mxu0 %v2545
  %3292 = vmatprep.subr.mxu0 %v2544
  %3293 = vmatpush1.msra.mxu0 %v2543
  %3294 = vmatprep.subr.mxu0 %v2542
  %3295 = vmatpush1.msra.mxu0 %v2541
  %3296 = vmatprep.subr.mxu0 %v2540
  %3297 = vmatpush1.msra.mxu0 %v2539
  %3298 = vmatprep.subr.mxu0 %v2538
  %3299 = vmatpush1.msra.mxu0 %v2537
  %3300 = vmatprep.subr.mxu0 %v2600
  %3301 = vmatpush2.msra.mxu0 %v2599
  %3302 = vmatprep.subr.mxu0 %v2598
  %3303 = vmatpush2.msra.mxu0 %v2597
  %3304 = vmatprep.subr.mxu0 %v2596
  %3305 = vmatpush2.msra.mxu0 %v2595
  %3306 = vmatprep.subr.mxu0 %v2594
  %3307 = vmatpush2.msra.mxu0 %v2593
  %3308 = vmatprep.subr.mxu0 %v2592
  %3309 = vmatpush2.msra.mxu0 %v2591
  %3310 = vmatprep.subr.mxu0 %v2590
  %3311 = vmatpush2.msra.mxu0 %v2589
  %3312 = vmatprep.subr.mxu0 %v2588
  %3313 = vmatpush2.msra.mxu0 %v2587
  %3314 = vmatprep.subr.mxu0 %v2586
  %3315 = vmatpush2.msra.mxu0 %v2585
  %3316 = vmatprep.subr.mxu0 %v2584
  %3317 = vmatpush2.msra.mxu0 %v2583
  %3318 = vmatprep.subr.mxu0 %v2582
  %3319 = vmatpush2.msra.mxu0 %v2581
  %3320 = vmatprep.subr.mxu0 %v2580
  %3321 = vmatpush2.msra.mxu0 %v2579
  %3322 = vmatprep.subr.mxu0 %v2578
  %3323 = vmatpush2.msra.mxu0 %v2577
  %3324 = vmatprep.subr.mxu0 %v2576
  %3325 = vmatpush2.msra.mxu0 %v2575
  %3326 = vmatprep.subr.mxu0 %v2574
  %3327 = vmatpush2.msra.mxu0 %v2573
  %3328 = vmatprep.subr.mxu0 %v2572
  %3329 = vmatpush2.msra.mxu0 %v2571
  %3330 = vmatprep.subr.mxu0 %v2570
  %3331 = vmatpush2.msra.mxu0 %v2569
  %3332 = vmatprep.mubr.f32.mxu0 %v2117
  %3333 = vmatmul.mubr.f32.gmra.mxu0 %v2116
  %v3334 = vpop.f32.mrf.mxu0
  %v3335 = vadd.f32 0.0, %v3334
  %v3336 = vpop.f32.mrf.mxu0
  %v3337 = vadd.f32 0.0, %v3336
  %3338 = vmatprep.mubr.f32.mxu0 %v2119
  %3339 = vmatmul.mubr.f32.gmra.mxu0 %v2118
  %v3340 = vpop.f32.mrf.mxu0
  %v3341 = vadd.f32 0.0, %v3340
  %v3342 = vpop.f32.mrf.mxu0
  %v3343 = vadd.f32 0.0, %v3342
  %3344 = vmatprep.mubr.f32.mxu0 %v2121
  %3345 = vmatmul.mubr.f32.gmra.mxu0 %v2120
  %v3346 = vpop.f32.mrf.mxu0
  %v3347 = vadd.f32 0.0, %v3346
  %v3348 = vpop.f32.mrf.mxu0
  %v3349 = vadd.f32 0.0, %v3348
  %3350 = vmatprep.mubr.f32.mxu0 %v2123
  %3351 = vmatmul.mubr.f32.gmra.mxu0 %v2122
  %v3352 = vpop.f32.mrf.mxu0
  %v3353 = vadd.f32 0.0, %v3352
  %v3354 = vpop.f32.mrf.mxu0
  %v3355 = vadd.f32 0.0, %v3354
  %3356 = vdwg.mxu0
  %v3358 = vsel %vm1254, %v3264, 0
  %v3361 = vsel %vm1254, %v3265, 0
  %v3364 = vsel %vm1254, %v3266, 0
  %v3367 = vsel %vm1254, %v3267, 0
  %3369 = vmatprep.subr.mxu0 0.0
  %3370 = vmatpush1.msra.mxu0 0.0
  %3371 = vmatprep.subr.mxu0 0.0
  %3372 = vmatpush1.msra.mxu0 0.0
  %3373 = vmatprep.subr.mxu0 0.0
  %3374 = vmatpush1.msra.mxu0 0.0
  %3375 = vmatprep.subr.mxu0 0.0
  %3376 = vmatpush1.msra.mxu0 0.0
  %3377 = vmatprep.subr.mxu0 0.0
  %3378 = vmatpush1.msra.mxu0 0.0
  %3379 = vmatprep.subr.mxu0 0.0
  %3380 = vmatpush1.msra.mxu0 0.0
  %3381 = vmatprep.subr.mxu0 0.0
  %3382 = vmatpush1.msra.mxu0 0.0
  %3383 = vmatprep.subr.mxu0 0.0
  %3384 = vmatpush1.msra.mxu0 0.0
  %3385 = vmatprep.subr.mxu0 0.0
  %3386 = vmatpush1.msra.mxu0 0.0
  %3387 = vmatprep.subr.mxu0 0.0
  %3388 = vmatpush1.msra.mxu0 0.0
  %3389 = vmatprep.subr.mxu0 0.0
  %3390 = vmatpush1.msra.mxu0 0.0
  %3391 = vmatprep.subr.mxu0 0.0
  %3392 = vmatpush1.msra.mxu0 0.0
  %3393 = vmatprep.subr.mxu0 %v3355
  %3394 = vmatpush1.msra.mxu0 %v3353
  %3395 = vmatprep.subr.mxu0 %v3349
  %3396 = vmatpush1.msra.mxu0 %v3347
  %3397 = vmatprep.subr.mxu0 %v3343
  %3398 = vmatpush1.msra.mxu0 %v3341
  %3399 = vmatprep.subr.mxu0 %v3337
  %3400 = vmatpush1.msra.mxu0 %v3335
  %3401 = vmatprep.subr.mxu0 0.0
  %3402 = vmatpush2.msra.mxu0 0.0
  %3403 = vmatprep.subr.mxu0 0.0
  %3404 = vmatpush2.msra.mxu0 0.0
  %3405 = vmatprep.subr.mxu0 0.0
  %3406 = vmatpush2.msra.mxu0 0.0
  %3407 = vmatprep.subr.mxu0 0.0
  %3408 = vmatpush2.msra.mxu0 0.0
  %3409 = vmatprep.subr.mxu0 0.0
  %3410 = vmatpush2.msra.mxu0 0.0
  %3411 = vmatprep.subr.mxu0 0.0
  %3412 = vmatpush2.msra.mxu0 0.0
  %3413 = vmatprep.subr.mxu0 0.0
  %3414 = vmatpush2.msra.mxu0 0.0
  %3415 = vmatprep.subr.mxu0 0.0
  %3416 = vmatpush2.msra.mxu0 0.0
  %3417 = vmatprep.subr.mxu0 0.0
  %3418 = vmatpush2.msra.mxu0 0.0
  %3419 = vmatprep.subr.mxu0 0.0
  %3420 = vmatpush2.msra.mxu0 0.0
  %3421 = vmatprep.subr.mxu0 0.0
  %3422 = vmatpush2.msra.mxu0 0.0
  %3423 = vmatprep.subr.mxu0 0.0
  %3424 = vmatpush2.msra.mxu0 0.0
  %3425 = vmatprep.subr.mxu0 0.0
  %3426 = vmatpush2.msra.mxu0 0.0
  %3427 = vmatprep.subr.mxu0 0.0
  %3428 = vmatpush2.msra.mxu0 0.0
  %3429 = vmatprep.subr.mxu0 0.0
  %3430 = vmatpush2.msra.mxu0 0.0
  %3431 = vmatprep.subr.mxu0 0.0
  %3432 = vmatpush2.msra.mxu0 0.0
  %3433 = vmatprep.mubr.f32.mxu0 0.0
  %3434 = vmatmul.mubr.f32.gmra.mxu0 %v3358
  %v3435 = vpop.f32.mrf.mxu0
  %v3436 = vadd.f32 0.0, %v3435
  %v3437 = vpop.f32.mrf.mxu0
  %v3438 = vadd.f32 0.0, %v3437
  %3439 = vmatprep.mubr.f32.mxu0 0.0
  %3440 = vmatmul.mubr.f32.gmra.mxu0 %v3361
  %v3441 = vpop.f32.mrf.mxu0
  %v3442 = vadd.f32 0.0, %v3441
  %v3443 = vpop.f32.mrf.mxu0
  %v3444 = vadd.f32 0.0, %v3443
  %3445 = vmatprep.mubr.f32.mxu0 0.0
  %3446 = vmatmul.mubr.f32.gmra.mxu0 %v3364
  %v3447 = vpop.f32.mrf.mxu0
  %v3448 = vadd.f32 0.0, %v3447
  %v3449 = vpop.f32.mrf.mxu0
  %v3450 = vadd.f32 0.0, %v3449
  %3451 = vmatprep.mubr.f32.mxu0 0.0
  %3452 = vmatmul.mubr.f32.gmra.mxu0 %v3367
  %v3453 = vpop.f32.mrf.mxu0
  %v3454 = vadd.f32 0.0, %v3453
  %v3455 = vpop.f32.mrf.mxu0
  %v3456 = vadd.f32 0.0, %v3455
  %3457 = vdwg.mxu0
  %v3458 = vadd.f32 %v3255, %v3436
  %v3459 = vadd.f32 %v3256, %v3438
  %v3460 = vadd.f32 %v3257, %v3442
  %v3461 = vadd.f32 %v3258, %v3444
  %v3462 = vadd.f32 %v3259, %v3448
  %v3463 = vadd.f32 %v3260, %v3450
  %v3464 = vadd.f32 %v3261, %v3454
  %v3465 = vadd.f32 %v3262, %v3456
  %s3466 = scalar_lea.vmem %s5, 128
  %v3467 = vld [vmem:[%s3466] sm:$0xff]
  %v3468 = vld [vmem:[%s3466 + $0x8] sm:$0xff]
  %v3469 = vld [vmem:[%s3466 + $0x10] sm:$0xff]
  %v3470 = vld [vmem:[%s3466 + $0x18] sm:$0xff]
  %3471 = vmatprep.subr.mxu0 %v2727
  %3472 = vmatpush1.msra.mxu0 %v2726
  %3473 = vmatprep.subr.mxu0 %v2725
  %3474 = vmatpush1.msra.mxu0 %v2724
  %3475 = vmatprep.subr.mxu0 %v2723
  %3476 = vmatpush1.msra.mxu0 %v2722
  %3477 = vmatprep.subr.mxu0 %v2721
  %3478 = vmatpush1.msra.mxu0 %v2720
  %3479 = vmatprep.subr.mxu0 %v2719
  %3480 = vmatpush1.msra.mxu0 %v2718
  %3481 = vmatprep.subr.mxu0 %v2717
  %3482 = vmatpush1.msra.mxu0 %v2716
  %3483 = vmatprep.subr.mxu0 %v2715
  %3484 = vmatpush1.msra.mxu0 %v2714
  %3485 = vmatprep.subr.mxu0 %v2713
  %3486 = vmatpush1.msra.mxu0 %v2712
  %3487 = vmatprep.subr.mxu0 %v2711
  %3488 = vmatpush1.msra.mxu0 %v2710
  %3489 = vmatprep.subr.mxu0 %v2709
  %3490 = vmatpush1.msra.mxu0 %v2708
  %3491 = vmatprep.subr.mxu0 %v2707
  %3492 = vmatpush1.msra.mxu0 %v2706
  %3493 = vmatprep.subr.mxu0 %v2705
  %3494 = vmatpush1.msra.mxu0 %v2704
  %3495 = vmatprep.subr.mxu0 %v2703
  %3496 = vmatpush1.msra.mxu0 %v2702
  %3497 = vmatprep.subr.mxu0 %v2701
  %3498 = vmatpush1.msra.mxu0 %v2700
  %3499 = vmatprep.subr.mxu0 %v2699
  %3500 = vmatpush1.msra.mxu0 %v2698
  %3501 = vmatprep.subr.mxu0 %v2697
  %3502 = vmatpush1.msra.mxu0 %v2696
  %3503 = vmatprep.subr.mxu0 %v2759
  %3504 = vmatpush2.msra.mxu0 %v2758
  %3505 = vmatprep.subr.mxu0 %v2757
  %3506 = vmatpush2.msra.mxu0 %v2756
  %3507 = vmatprep.subr.mxu0 %v2755
  %3508 = vmatpush2.msra.mxu0 %v2754
  %3509 = vmatprep.subr.mxu0 %v2753
  %3510 = vmatpush2.msra.mxu0 %v2752
  %3511 = vmatprep.subr.mxu0 %v2751
  %3512 = vmatpush2.msra.mxu0 %v2750
  %3513 = vmatprep.subr.mxu0 %v2749
  %3514 = vmatpush2.msra.mxu0 %v2748
  %3515 = vmatprep.subr.mxu0 %v2747
  %3516 = vmatpush2.msra.mxu0 %v2746
  %3517 = vmatprep.subr.mxu0 %v2745
  %3518 = vmatpush2.msra.mxu0 %v2744
  %3519 = vmatprep.subr.mxu0 %v2743
  %3520 = vmatpush2.msra.mxu0 %v2742
  %3521 = vmatprep.subr.mxu0 %v2741
  %3522 = vmatpush2.msra.mxu0 %v2740
  %3523 = vmatprep.subr.mxu0 %v2739
  %3524 = vmatpush2.msra.mxu0 %v2738
  %3525 = vmatprep.subr.mxu0 %v2737
  %3526 = vmatpush2.msra.mxu0 %v2736
  %3527 = vmatprep.subr.mxu0 %v2735
  %3528 = vmatpush2.msra.mxu0 %v2734
  %3529 = vmatprep.subr.mxu0 %v2733
  %3530 = vmatpush2.msra.mxu0 %v2732
  %3531 = vmatprep.subr.mxu0 %v2731
  %3532 = vmatpush2.msra.mxu0 %v2730
  %3533 = vmatprep.subr.mxu0 %v2729
  %3534 = vmatpush2.msra.mxu0 %v2728
  %3535 = vmatprep.mubr.f32.mxu0 %v2117
  %3536 = vmatmul.mubr.f32.gmra.mxu0 %v2116
  %v3537 = vpop.f32.mrf.mxu0
  %v3538 = vadd.f32 0.0, %v3537
  %v3539 = vpop.f32.mrf.mxu0
  %v3540 = vadd.f32 0.0, %v3539
  %3541 = vmatprep.mubr.f32.mxu0 %v2119
  %3542 = vmatmul.mubr.f32.gmra.mxu0 %v2118
  %v3543 = vpop.f32.mrf.mxu0
  %v3544 = vadd.f32 0.0, %v3543
  %v3545 = vpop.f32.mrf.mxu0
  %v3546 = vadd.f32 0.0, %v3545
  %3547 = vmatprep.mubr.f32.mxu0 %v2121
  %3548 = vmatmul.mubr.f32.gmra.mxu0 %v2120
  %v3549 = vpop.f32.mrf.mxu0
  %v3550 = vadd.f32 0.0, %v3549
  %v3551 = vpop.f32.mrf.mxu0
  %v3552 = vadd.f32 0.0, %v3551
  %3553 = vmatprep.mubr.f32.mxu0 %v2123
  %3554 = vmatmul.mubr.f32.gmra.mxu0 %v2122
  %v3555 = vpop.f32.mrf.mxu0
  %v3556 = vadd.f32 0.0, %v3555
  %v3557 = vpop.f32.mrf.mxu0
  %v3558 = vadd.f32 0.0, %v3557
  %3559 = vdwg.mxu0
  %v3561 = vsel %vm1254, %v3467, 0
  %v3564 = vsel %vm1254, %v3468, 0
  %v3567 = vsel %vm1254, %v3469, 0
  %v3570 = vsel %vm1254, %v3470, 0
  %3572 = vmatprep.subr.mxu0 0.0
  %3573 = vmatpush1.msra.mxu0 0.0
  %3574 = vmatprep.subr.mxu0 0.0
  %3575 = vmatpush1.msra.mxu0 0.0
  %3576 = vmatprep.subr.mxu0 0.0
  %3577 = vmatpush1.msra.mxu0 0.0
  %3578 = vmatprep.subr.mxu0 0.0
  %3579 = vmatpush1.msra.mxu0 0.0
  %3580 = vmatprep.subr.mxu0 0.0
  %3581 = vmatpush1.msra.mxu0 0.0
  %3582 = vmatprep.subr.mxu0 0.0
  %3583 = vmatpush1.msra.mxu0 0.0
  %3584 = vmatprep.subr.mxu0 0.0
  %3585 = vmatpush1.msra.mxu0 0.0
  %3586 = vmatprep.subr.mxu0 0.0
  %3587 = vmatpush1.msra.mxu0 0.0
  %3588 = vmatprep.subr.mxu0 0.0
  %3589 = vmatpush1.msra.mxu0 0.0
  %3590 = vmatprep.subr.mxu0 0.0
  %3591 = vmatpush1.msra.mxu0 0.0
  %3592 = vmatprep.subr.mxu0 0.0
  %3593 = vmatpush1.msra.mxu0 0.0
  %3594 = vmatprep.subr.mxu0 0.0
  %3595 = vmatpush1.msra.mxu0 0.0
  %3596 = vmatprep.subr.mxu0 %v3558
  %3597 = vmatpush1.msra.mxu0 %v3556
  %3598 = vmatprep.subr.mxu0 %v3552
  %3599 = vmatpush1.msra.mxu0 %v3550
  %3600 = vmatprep.subr.mxu0 %v3546
  %3601 = vmatpush1.msra.mxu0 %v3544
  %3602 = vmatprep.subr.mxu0 %v3540
  %3603 = vmatpush1.msra.mxu0 %v3538
  %3604 = vmatprep.subr.mxu0 0.0
  %3605 = vmatpush2.msra.mxu0 0.0
  %3606 = vmatprep.subr.mxu0 0.0
  %3607 = vmatpush2.msra.mxu0 0.0
  %3608 = vmatprep.subr.mxu0 0.0
  %3609 = vmatpush2.msra.mxu0 0.0
  %3610 = vmatprep.subr.mxu0 0.0
  %3611 = vmatpush2.msra.mxu0 0.0
  %3612 = vmatprep.subr.mxu0 0.0
  %3613 = vmatpush2.msra.mxu0 0.0
  %3614 = vmatprep.subr.mxu0 0.0
  %3615 = vmatpush2.msra.mxu0 0.0
  %3616 = vmatprep.subr.mxu0 0.0
  %3617 = vmatpush2.msra.mxu0 0.0
  %3618 = vmatprep.subr.mxu0 0.0
  %3619 = vmatpush2.msra.mxu0 0.0
  %3620 = vmatprep.subr.mxu0 0.0
  %3621 = vmatpush2.msra.mxu0 0.0
  %3622 = vmatprep.subr.mxu0 0.0
  %3623 = vmatpush2.msra.mxu0 0.0
  %3624 = vmatprep.subr.mxu0 0.0
  %3625 = vmatpush2.msra.mxu0 0.0
  %3626 = vmatprep.subr.mxu0 0.0
  %3627 = vmatpush2.msra.mxu0 0.0
  %3628 = vmatprep.subr.mxu0 0.0
  %3629 = vmatpush2.msra.mxu0 0.0
  %3630 = vmatprep.subr.mxu0 0.0
  %3631 = vmatpush2.msra.mxu0 0.0
  %3632 = vmatprep.subr.mxu0 0.0
  %3633 = vmatpush2.msra.mxu0 0.0
  %3634 = vmatprep.subr.mxu0 0.0
  %3635 = vmatpush2.msra.mxu0 0.0
  %3636 = vmatprep.mubr.f32.mxu0 0.0
  %3637 = vmatmul.mubr.f32.gmra.mxu0 %v3561
  %v3638 = vpop.f32.mrf.mxu0
  %v3639 = vadd.f32 0.0, %v3638
  %v3640 = vpop.f32.mrf.mxu0
  %v3641 = vadd.f32 0.0, %v3640
  %3642 = vmatprep.mubr.f32.mxu0 0.0
  %3643 = vmatmul.mubr.f32.gmra.mxu0 %v3564
  %v3644 = vpop.f32.mrf.mxu0
  %v3645 = vadd.f32 0.0, %v3644
  %v3646 = vpop.f32.mrf.mxu0
  %v3647 = vadd.f32 0.0, %v3646
  %3648 = vmatprep.mubr.f32.mxu0 0.0
  %3649 = vmatmul.mubr.f32.gmra.mxu0 %v3567
  %v3650 = vpop.f32.mrf.mxu0
  %v3651 = vadd.f32 0.0, %v3650
  %v3652 = vpop.f32.mrf.mxu0
  %v3653 = vadd.f32 0.0, %v3652
  %3654 = vmatprep.mubr.f32.mxu0 0.0
  %3655 = vmatmul.mubr.f32.gmra.mxu0 %v3570
  %v3656 = vpop.f32.mrf.mxu0
  %v3657 = vadd.f32 0.0, %v3656
  %v3658 = vpop.f32.mrf.mxu0
  %v3659 = vadd.f32 0.0, %v3658
  %3660 = vdwg.mxu0
  %v3661 = vadd.f32 %v3458, %v3639
  %v3662 = vadd.f32 %v3459, %v3641
  %v3663 = vadd.f32 %v3460, %v3645
  %v3664 = vadd.f32 %v3461, %v3647
  %v3665 = vadd.f32 %v3462, %v3651
  %v3666 = vadd.f32 %v3463, %v3653
  %v3667 = vadd.f32 %v3464, %v3657
  %v3668 = vadd.f32 %v3465, %v3659
  %v3669 = vld [vmem:[%s6] sm:$0xff]
  %v3670 = vld [vmem:[%s6 + $0x8] sm:$0xff]
  %v3671 = vld [vmem:[%s6 + $0x10] sm:$0xff]
  %v3672 = vld [vmem:[%s6 + $0x18] sm:$0xff]
  %3674 = vset.pattern.permute.xlu0 0
  %3675 = vperm.xlu0 %3674, %v3669
  %v3676 = vpop.permute.xlu0 %3675
  %3679 = vset.pattern.permute.xlu0 0
  %3680 = vperm.xlu0 %3679, %v3670
  %v3681 = vpop.permute.xlu0 %3680
  %3684 = vset.pattern.permute.xlu0 0
  %3685 = vperm.xlu0 %3684, %v3671
  %v3686 = vpop.permute.xlu0 %3685
  %3689 = vset.pattern.permute.xlu0 0
  %3690 = vperm.xlu0 %3689, %v3672
  %v3691 = vpop.permute.xlu0 %3690
  %v3693 = vadd.f32 %v3661, %v3676
  %v3694 = vadd.f32 %v3662, %v3676
  %v3695 = vadd.f32 %v3663, %v3681
  %v3696 = vadd.f32 %v3664, %v3681
  %v3697 = vadd.f32 %v3665, %v3686
  %v3698 = vadd.f32 %v3666, %v3686
  %v3699 = vadd.f32 %v3667, %v3691
  %v3700 = vadd.f32 %v3668, %v3691
  %v3701 = vmax.f32 %v3693, 0.0
  %v3702 = vmax.f32 %v3694, 0.0
  %v3703 = vmax.f32 %v3695, 0.0
  %v3704 = vmax.f32 %v3696, 0.0
  %v3705 = vmax.f32 %v3697, 0.0
  %v3706 = vmax.f32 %v3698, 0.0
  %v3707 = vmax.f32 %v3699, 0.0
  %v3708 = vmax.f32 %v3700, 0.0
  %vm3709 = vcmp.lt.s32.totalorder %v70, 192
  %vm3710 = vcmp.lt.s32.totalorder %v71, 192
  %v3711 = vsel %vm3709, 1, 0
  %v3712 = vsel %vm3710, 1, 0
  %vm3713 = vcmp.eq.s32.totalorder %v3711, 1
  %vm3714 = vcmp.eq.s32.totalorder %v3712, 1
  %v3715 = vsel %vm3713, %v3701, 0.0
  %v3716 = vsel %vm3714, %v3702, 0.0
  %v3717 = vsel %vm3713, %v3703, 0.0
  %v3718 = vsel %vm3714, %v3704, 0.0
  %v3719 = vsel %vm3713, %v3705, 0.0
  %v3720 = vsel %vm3714, %v3706, 0.0
  %v3721 = vsel %vm3713, %v3707, 0.0
  %v3722 = vsel %vm3714, %v3708, 0.0
  %v3723 = vld [vmem:[%s7] sm:$0x1]
  %s3724 = scalar_lea.vmem %s7, 1
  %v3725 = vld [vmem:[%s3724] sm:$0x1]
  %3726 = vmatprep.subr.mxu0 %v2250
  %3727 = vmatpush1.msra.mxu0 %v2249
  %3728 = vmatprep.subr.mxu0 %v2248
  %3729 = vmatpush1.msra.mxu0 %v2247
  %3730 = vmatprep.subr.mxu0 %v2246
  %3731 = vmatpush1.msra.mxu0 %v2245
  %3732 = vmatprep.subr.mxu0 %v2244
  %3733 = vmatpush1.msra.mxu0 %v2243
  %3734 = vmatprep.subr.mxu0 %v2242
  %3735 = vmatpush1.msra.mxu0 %v2241
  %3736 = vmatprep.subr.mxu0 %v2240
  %3737 = vmatpush1.msra.mxu0 %v2239
  %3738 = vmatprep.subr.mxu0 %v2238
  %3739 = vmatpush1.msra.mxu0 %v2237
  %3740 = vmatprep.subr.mxu0 %v2236
  %3741 = vmatpush1.msra.mxu0 %v2235
  %3742 = vmatprep.subr.mxu0 %v2234
  %3743 = vmatpush1.msra.mxu0 %v2233
  %3744 = vmatprep.subr.mxu0 %v2232
  %3745 = vmatpush1.msra.mxu0 %v2231
  %3746 = vmatprep.subr.mxu0 %v2230
  %3747 = vmatpush1.msra.mxu0 %v2229
  %3748 = vmatprep.subr.mxu0 %v2228
  %3749 = vmatpush1.msra.mxu0 %v2227
  %3750 = vmatprep.subr.mxu0 %v2226
  %3751 = vmatpush1.msra.mxu0 %v2225
  %3752 = vmatprep.subr.mxu0 %v2224
  %3753 = vmatpush1.msra.mxu0 %v2223
  %3754 = vmatprep.subr.mxu0 %v2222
  %3755 = vmatpush1.msra.mxu0 %v2221
  %3756 = vmatprep.subr.mxu0 %v2220
  %3757 = vmatpush1.msra.mxu0 %v2219
  %3758 = vmatprep.subr.mxu0 %v2282
  %3759 = vmatpush2.msra.mxu0 %v2281
  %3760 = vmatprep.subr.mxu0 %v2280
  %3761 = vmatpush2.msra.mxu0 %v2279
  %3762 = vmatprep.subr.mxu0 %v2278
  %3763 = vmatpush2.msra.mxu0 %v2277
  %3764 = vmatprep.subr.mxu0 %v2276
  %3765 = vmatpush2.msra.mxu0 %v2275
  %3766 = vmatprep.subr.mxu0 %v2274
  %3767 = vmatpush2.msra.mxu0 %v2273
  %3768 = vmatprep.subr.mxu0 %v2272
  %3769 = vmatpush2.msra.mxu0 %v2271
  %3770 = vmatprep.subr.mxu0 %v2270
  %3771 = vmatpush2.msra.mxu0 %v2269
  %3772 = vmatprep.subr.mxu0 %v2268
  %3773 = vmatpush2.msra.mxu0 %v2267
  %3774 = vmatprep.subr.mxu0 %v2266
  %3775 = vmatpush2.msra.mxu0 %v2265
  %3776 = vmatprep.subr.mxu0 %v2264
  %3777 = vmatpush2.msra.mxu0 %v2263
  %3778 = vmatprep.subr.mxu0 %v2262
  %3779 = vmatpush2.msra.mxu0 %v2261
  %3780 = vmatprep.subr.mxu0 %v2260
  %3781 = vmatpush2.msra.mxu0 %v2259
  %3782 = vmatprep.subr.mxu0 %v2258
  %3783 = vmatpush2.msra.mxu0 %v2257
  %3784 = vmatprep.subr.mxu0 %v2256
  %3785 = vmatpush2.msra.mxu0 %v2255
  %3786 = vmatprep.subr.mxu0 %v2254
  %3787 = vmatpush2.msra.mxu0 %v2253
  %3788 = vmatprep.subr.mxu0 %v2252
  %3789 = vmatpush2.msra.mxu0 %v2251
  %3790 = vmatprep.mubr.f32.mxu0 %v3716
  %3791 = vmatmul.mubr.f32.gmra.mxu0 %v3715
  %v3792 = vpop.f32.mrf.mxu0
  %v3793 = vadd.f32 0.0, %v3792
  %v3794 = vpop.f32.mrf.mxu0
  %v3795 = vadd.f32 0.0, %v3794
  %3796 = vmatprep.mubr.f32.mxu0 %v3718
  %3797 = vmatmul.mubr.f32.gmra.mxu0 %v3717
  %v3798 = vpop.f32.mrf.mxu0
  %v3799 = vadd.f32 0.0, %v3798
  %v3800 = vpop.f32.mrf.mxu0
  %v3801 = vadd.f32 0.0, %v3800
  %3802 = vmatprep.mubr.f32.mxu0 %v3720
  %3803 = vmatmul.mubr.f32.gmra.mxu0 %v3719
  %v3804 = vpop.f32.mrf.mxu0
  %v3805 = vadd.f32 0.0, %v3804
  %v3806 = vpop.f32.mrf.mxu0
  %v3807 = vadd.f32 0.0, %v3806
  %3808 = vmatprep.mubr.f32.mxu0 %v3722
  %3809 = vmatmul.mubr.f32.gmra.mxu0 %v3721
  %v3810 = vpop.f32.mrf.mxu0
  %v3811 = vadd.f32 0.0, %v3810
  %v3812 = vpop.f32.mrf.mxu0
  %v3813 = vadd.f32 0.0, %v3812
  %3814 = vdwg.mxu0
  %v3816 = vsel %vm1254, %v3725, 0
  %3818 = vmatprep.subr.mxu0 0.0
  %3819 = vmatpush1.msra.mxu0 0.0
  %3820 = vmatprep.subr.mxu0 0.0
  %3821 = vmatpush1.msra.mxu0 0.0
  %3822 = vmatprep.subr.mxu0 0.0
  %3823 = vmatpush1.msra.mxu0 0.0
  %3824 = vmatprep.subr.mxu0 0.0
  %3825 = vmatpush1.msra.mxu0 0.0
  %3826 = vmatprep.subr.mxu0 0.0
  %3827 = vmatpush1.msra.mxu0 0.0
  %3828 = vmatprep.subr.mxu0 0.0
  %3829 = vmatpush1.msra.mxu0 0.0
  %3830 = vmatprep.subr.mxu0 0.0
  %3831 = vmatpush1.msra.mxu0 0.0
  %3832 = vmatprep.subr.mxu0 0.0
  %3833 = vmatpush1.msra.mxu0 0.0
  %3834 = vmatprep.subr.mxu0 0.0
  %3835 = vmatpush1.msra.mxu0 0.0
  %3836 = vmatprep.subr.mxu0 0.0
  %3837 = vmatpush1.msra.mxu0 0.0
  %3838 = vmatprep.subr.mxu0 0.0
  %3839 = vmatpush1.msra.mxu0 0.0
  %3840 = vmatprep.subr.mxu0 0.0
  %3841 = vmatpush1.msra.mxu0 0.0
  %3842 = vmatprep.subr.mxu0 %v3813
  %3843 = vmatpush1.msra.mxu0 %v3811
  %3844 = vmatprep.subr.mxu0 %v3807
  %3845 = vmatpush1.msra.mxu0 %v3805
  %3846 = vmatprep.subr.mxu0 %v3801
  %3847 = vmatpush1.msra.mxu0 %v3799
  %3848 = vmatprep.subr.mxu0 %v3795
  %3849 = vmatpush1.msra.mxu0 %v3793
  %3850 = vmatprep.subr.mxu0 0.0
  %3851 = vmatpush2.msra.mxu0 0.0
  %3852 = vmatprep.subr.mxu0 0.0
  %3853 = vmatpush2.msra.mxu0 0.0
  %3854 = vmatprep.subr.mxu0 0.0
  %3855 = vmatpush2.msra.mxu0 0.0
  %3856 = vmatprep.subr.mxu0 0.0
  %3857 = vmatpush2.msra.mxu0 0.0
  %3858 = vmatprep.subr.mxu0 0.0
  %3859 = vmatpush2.msra.mxu0 0.0
  %3860 = vmatprep.subr.mxu0 0.0
  %3861 = vmatpush2.msra.mxu0 0.0
  %3862 = vmatprep.subr.mxu0 0.0
  %3863 = vmatpush2.msra.mxu0 0.0
  %3864 = vmatprep.subr.mxu0 0.0
  %3865 = vmatpush2.msra.mxu0 0.0
  %3866 = vmatprep.subr.mxu0 0.0
  %3867 = vmatpush2.msra.mxu0 0.0
  %3868 = vmatprep.subr.mxu0 0.0
  %3869 = vmatpush2.msra.mxu0 0.0
  %3870 = vmatprep.subr.mxu0 0.0
  %3871 = vmatpush2.msra.mxu0 0.0
  %3872 = vmatprep.subr.mxu0 0.0
  %3873 = vmatpush2.msra.mxu0 0.0
  %3874 = vmatprep.subr.mxu0 0.0
  %3875 = vmatpush2.msra.mxu0 0.0
  %3876 = vmatprep.subr.mxu0 0.0
  %3877 = vmatpush2.msra.mxu0 0.0
  %3878 = vmatprep.subr.mxu0 0.0
  %3879 = vmatpush2.msra.mxu0 0.0
  %3880 = vmatprep.subr.mxu0 0.0
  %3881 = vmatpush2.msra.mxu0 0.0
  %3882 = vmatprep.mubr.f32.mxu0 0.0
  %3883 = vmatmul.mubr.f32.gmra.mxu0 %v3816
  %v3884 = vpop.f32.mrf.mxu0
  %v3885 = vadd.f32 0.0, %v3884
  %v3886 = vpop.f32.mrf.mxu0
  %v3887 = vadd.f32 0.0, %v3886
  %3888 = vdwg.mxu0
  %v3890 = vsel %vm1254, %v3723, 0
  %3892 = vmatprep.subr.mxu0 0.0
  %3893 = vmatpush1.msra.mxu0 0.0
  %3894 = vmatprep.subr.mxu0 0.0
  %3895 = vmatpush1.msra.mxu0 0.0
  %3896 = vmatprep.subr.mxu0 0.0
  %3897 = vmatpush1.msra.mxu0 0.0
  %3898 = vmatprep.subr.mxu0 0.0
  %3899 = vmatpush1.msra.mxu0 0.0
  %3900 = vmatprep.subr.mxu0 0.0
  %3901 = vmatpush1.msra.mxu0 0.0
  %3902 = vmatprep.subr.mxu0 0.0
  %3903 = vmatpush1.msra.mxu0 0.0
  %3904 = vmatprep.subr.mxu0 0.0
  %3905 = vmatpush1.msra.mxu0 0.0
  %3906 = vmatprep.subr.mxu0 0.0
  %3907 = vmatpush1.msra.mxu0 0.0
  %3908 = vmatprep.subr.mxu0 0.0
  %3909 = vmatpush1.msra.mxu0 0.0
  %3910 = vmatprep.subr.mxu0 0.0
  %3911 = vmatpush1.msra.mxu0 0.0
  %3912 = vmatprep.subr.mxu0 0.0
  %3913 = vmatpush1.msra.mxu0 0.0
  %3914 = vmatprep.subr.mxu0 0.0
  %3915 = vmatpush1.msra.mxu0 0.0
  %3916 = vmatprep.subr.mxu0 %v3722
  %3917 = vmatpush1.msra.mxu0 %v3721
  %3918 = vmatprep.subr.mxu0 %v3720
  %3919 = vmatpush1.msra.mxu0 %v3719
  %3920 = vmatprep.subr.mxu0 %v3718
  %3921 = vmatpush1.msra.mxu0 %v3717
  %3922 = vmatprep.subr.mxu0 %v3716
  %3923 = vmatpush1.msra.mxu0 %v3715
  %3924 = vmatprep.subr.mxu0 0.0
  %3925 = vmatpush2.msra.mxu0 0.0
  %3926 = vmatprep.subr.mxu0 0.0
  %3927 = vmatpush2.msra.mxu0 0.0
  %3928 = vmatprep.subr.mxu0 0.0
  %3929 = vmatpush2.msra.mxu0 0.0
  %3930 = vmatprep.subr.mxu0 0.0
  %3931 = vmatpush2.msra.mxu0 0.0
  %3932 = vmatprep.subr.mxu0 0.0
  %3933 = vmatpush2.msra.mxu0 0.0
  %3934 = vmatprep.subr.mxu0 0.0
  %3935 = vmatpush2.msra.mxu0 0.0
  %3936 = vmatprep.subr.mxu0 0.0
  %3937 = vmatpush2.msra.mxu0 0.0
  %3938 = vmatprep.subr.mxu0 0.0
  %3939 = vmatpush2.msra.mxu0 0.0
  %3940 = vmatprep.subr.mxu0 0.0
  %3941 = vmatpush2.msra.mxu0 0.0
  %3942 = vmatprep.subr.mxu0 0.0
  %3943 = vmatpush2.msra.mxu0 0.0
  %3944 = vmatprep.subr.mxu0 0.0
  %3945 = vmatpush2.msra.mxu0 0.0
  %3946 = vmatprep.subr.mxu0 0.0
  %3947 = vmatpush2.msra.mxu0 0.0
  %3948 = vmatprep.subr.mxu0 0.0
  %3949 = vmatpush2.msra.mxu0 0.0
  %3950 = vmatprep.subr.mxu0 0.0
  %3951 = vmatpush2.msra.mxu0 0.0
  %3952 = vmatprep.subr.mxu0 0.0
  %3953 = vmatpush2.msra.mxu0 0.0
  %3954 = vmatprep.subr.mxu0 0.0
  %3955 = vmatpush2.msra.mxu0 0.0
  %3956 = vmatprep.mubr.f32.mxu0 0.0
  %3957 = vmatmul.mubr.f32.gmra.mxu0 %v3890
  %v3958 = vpop.f32.mrf.mxu0
  %v3959 = vadd.f32 %v3885, %v3958
  %v3960 = vpop.f32.mrf.mxu0
  %v3961 = vadd.f32 %v3887, %v3960
  %3962 = vdwg.mxu0
  %s3963 = scalar_lea.vmem %s7, 2
  %v3964 = vld [vmem:[%s3963] sm:$0x1]
  %3965 = vmatprep.subr.mxu0 %v2409
  %3966 = vmatpush1.msra.mxu0 %v2408
  %3967 = vmatprep.subr.mxu0 %v2407
  %3968 = vmatpush1.msra.mxu0 %v2406
  %3969 = vmatprep.subr.mxu0 %v2405
  %3970 = vmatpush1.msra.mxu0 %v2404
  %3971 = vmatprep.subr.mxu0 %v2403
  %3972 = vmatpush1.msra.mxu0 %v2402
  %3973 = vmatprep.subr.mxu0 %v2401
  %3974 = vmatpush1.msra.mxu0 %v2400
  %3975 = vmatprep.subr.mxu0 %v2399
  %3976 = vmatpush1.msra.mxu0 %v2398
  %3977 = vmatprep.subr.mxu0 %v2397
  %3978 = vmatpush1.msra.mxu0 %v2396
  %3979 = vmatprep.subr.mxu0 %v2395
  %3980 = vmatpush1.msra.mxu0 %v2394
  %3981 = vmatprep.subr.mxu0 %v2393
  %3982 = vmatpush1.msra.mxu0 %v2392
  %3983 = vmatprep.subr.mxu0 %v2391
  %3984 = vmatpush1.msra.mxu0 %v2390
  %3985 = vmatprep.subr.mxu0 %v2389
  %3986 = vmatpush1.msra.mxu0 %v2388
  %3987 = vmatprep.subr.mxu0 %v2387
  %3988 = vmatpush1.msra.mxu0 %v2386
  %3989 = vmatprep.subr.mxu0 %v2385
  %3990 = vmatpush1.msra.mxu0 %v2384
  %3991 = vmatprep.subr.mxu0 %v2383
  %3992 = vmatpush1.msra.mxu0 %v2382
  %3993 = vmatprep.subr.mxu0 %v2381
  %3994 = vmatpush1.msra.mxu0 %v2380
  %3995 = vmatprep.subr.mxu0 %v2379
  %3996 = vmatpush1.msra.mxu0 %v2378
  %3997 = vmatprep.subr.mxu0 %v2441
  %3998 = vmatpush2.msra.mxu0 %v2440
  %3999 = vmatprep.subr.mxu0 %v2439
  %4000 = vmatpush2.msra.mxu0 %v2438
  %4001 = vmatprep.subr.mxu0 %v2437
  %4002 = vmatpush2.msra.mxu0 %v2436
  %4003 = vmatprep.subr.mxu0 %v2435
  %4004 = vmatpush2.msra.mxu0 %v2434
  %4005 = vmatprep.subr.mxu0 %v2433
  %4006 = vmatpush2.msra.mxu0 %v2432
  %4007 = vmatprep.subr.mxu0 %v2431
  %4008 = vmatpush2.msra.mxu0 %v2430
  %4009 = vmatprep.subr.mxu0 %v2429
  %4010 = vmatpush2.msra.mxu0 %v2428
  %4011 = vmatprep.subr.mxu0 %v2427
  %4012 = vmatpush2.msra.mxu0 %v2426
  %4013 = vmatprep.subr.mxu0 %v2425
  %4014 = vmatpush2.msra.mxu0 %v2424
  %4015 = vmatprep.subr.mxu0 %v2423
  %4016 = vmatpush2.msra.mxu0 %v2422
  %4017 = vmatprep.subr.mxu0 %v2421
  %4018 = vmatpush2.msra.mxu0 %v2420
  %4019 = vmatprep.subr.mxu0 %v2419
  %4020 = vmatpush2.msra.mxu0 %v2418
  %4021 = vmatprep.subr.mxu0 %v2417
  %4022 = vmatpush2.msra.mxu0 %v2416
  %4023 = vmatprep.subr.mxu0 %v2415
  %4024 = vmatpush2.msra.mxu0 %v2414
  %4025 = vmatprep.subr.mxu0 %v2413
  %4026 = vmatpush2.msra.mxu0 %v2412
  %4027 = vmatprep.subr.mxu0 %v2411
  %4028 = vmatpush2.msra.mxu0 %v2410
  %4029 = vmatprep.mubr.f32.mxu0 %v3716
  %4030 = vmatmul.mubr.f32.gmra.mxu0 %v3715
  %v4031 = vpop.f32.mrf.mxu0
  %v4032 = vadd.f32 0.0, %v4031
  %v4033 = vpop.f32.mrf.mxu0
  %v4034 = vadd.f32 0.0, %v4033
  %4035 = vmatprep.mubr.f32.mxu0 %v3718
  %4036 = vmatmul.mubr.f32.gmra.mxu0 %v3717
  %v4037 = vpop.f32.mrf.mxu0
  %v4038 = vadd.f32 0.0, %v4037
  %v4039 = vpop.f32.mrf.mxu0
  %v4040 = vadd.f32 0.0, %v4039
  %4041 = vmatprep.mubr.f32.mxu0 %v3720
  %4042 = vmatmul.mubr.f32.gmra.mxu0 %v3719
  %v4043 = vpop.f32.mrf.mxu0
  %v4044 = vadd.f32 0.0, %v4043
  %v4045 = vpop.f32.mrf.mxu0
  %v4046 = vadd.f32 0.0, %v4045
  %4047 = vmatprep.mubr.f32.mxu0 %v3722
  %4048 = vmatmul.mubr.f32.gmra.mxu0 %v3721
  %v4049 = vpop.f32.mrf.mxu0
  %v4050 = vadd.f32 0.0, %v4049
  %v4051 = vpop.f32.mrf.mxu0
  %v4052 = vadd.f32 0.0, %v4051
  %4053 = vdwg.mxu0
  %v4055 = vsel %vm1254, %v3964, 0
  %4057 = vmatprep.subr.mxu0 0.0
  %4058 = vmatpush1.msra.mxu0 0.0
  %4059 = vmatprep.subr.mxu0 0.0
  %4060 = vmatpush1.msra.mxu0 0.0
  %4061 = vmatprep.subr.mxu0 0.0
  %4062 = vmatpush1.msra.mxu0 0.0
  %4063 = vmatprep.subr.mxu0 0.0
  %4064 = vmatpush1.msra.mxu0 0.0
  %4065 = vmatprep.subr.mxu0 0.0
  %4066 = vmatpush1.msra.mxu0 0.0
  %4067 = vmatprep.subr.mxu0 0.0
  %4068 = vmatpush1.msra.mxu0 0.0
  %4069 = vmatprep.subr.mxu0 0.0
  %4070 = vmatpush1.msra.mxu0 0.0
  %4071 = vmatprep.subr.mxu0 0.0
  %4072 = vmatpush1.msra.mxu0 0.0
  %4073 = vmatprep.subr.mxu0 0.0
  %4074 = vmatpush1.msra.mxu0 0.0
  %4075 = vmatprep.subr.mxu0 0.0
  %4076 = vmatpush1.msra.mxu0 0.0
  %4077 = vmatprep.subr.mxu0 0.0
  %4078 = vmatpush1.msra.mxu0 0.0
  %4079 = vmatprep.subr.mxu0 0.0
  %4080 = vmatpush1.msra.mxu0 0.0
  %4081 = vmatprep.subr.mxu0 %v4052
  %4082 = vmatpush1.msra.mxu0 %v4050
  %4083 = vmatprep.subr.mxu0 %v4046
  %4084 = vmatpush1.msra.mxu0 %v4044
  %4085 = vmatprep.subr.mxu0 %v4040
  %4086 = vmatpush1.msra.mxu0 %v4038
  %4087 = vmatprep.subr.mxu0 %v4034
  %4088 = vmatpush1.msra.mxu0 %v4032
  %4089 = vmatprep.subr.mxu0 0.0
  %4090 = vmatpush2.msra.mxu0 0.0
  %4091 = vmatprep.subr.mxu0 0.0
  %4092 = vmatpush2.msra.mxu0 0.0
  %4093 = vmatprep.subr.mxu0 0.0
  %4094 = vmatpush2.msra.mxu0 0.0
  %4095 = vmatprep.subr.mxu0 0.0
  %4096 = vmatpush2.msra.mxu0 0.0
  %4097 = vmatprep.subr.mxu0 0.0
  %4098 = vmatpush2.msra.mxu0 0.0
  %4099 = vmatprep.subr.mxu0 0.0
  %4100 = vmatpush2.msra.mxu0 0.0
  %4101 = vmatprep.subr.mxu0 0.0
  %4102 = vmatpush2.msra.mxu0 0.0
  %4103 = vmatprep.subr.mxu0 0.0
  %4104 = vmatpush2.msra.mxu0 0.0
  %4105 = vmatprep.subr.mxu0 0.0
  %4106 = vmatpush2.msra.mxu0 0.0
  %4107 = vmatprep.subr.mxu0 0.0
  %4108 = vmatpush2.msra.mxu0 0.0
  %4109 = vmatprep.subr.mxu0 0.0
  %4110 = vmatpush2.msra.mxu0 0.0
  %4111 = vmatprep.subr.mxu0 0.0
  %4112 = vmatpush2.msra.mxu0 0.0
  %4113 = vmatprep.subr.mxu0 0.0
  %4114 = vmatpush2.msra.mxu0 0.0
  %4115 = vmatprep.subr.mxu0 0.0
  %4116 = vmatpush2.msra.mxu0 0.0
  %4117 = vmatprep.subr.mxu0 0.0
  %4118 = vmatpush2.msra.mxu0 0.0
  %4119 = vmatprep.subr.mxu0 0.0
  %4120 = vmatpush2.msra.mxu0 0.0
  %4121 = vmatprep.mubr.f32.mxu0 0.0
  %4122 = vmatmul.mubr.f32.gmra.mxu0 %v4055
  %v4123 = vpop.f32.mrf.mxu0
  %v4124 = vadd.f32 0.0, %v4123
  %v4125 = vpop.f32.mrf.mxu0
  %v4126 = vadd.f32 0.0, %v4125
  %4127 = vdwg.mxu0
  %v4128 = vadd.f32 %v3959, %v4124
  %v4129 = vadd.f32 %v3961, %v4126
  %s4130 = scalar_lea.vmem %s7, 3
  %v4131 = vld [vmem:[%s4130] sm:$0x1]
  %4132 = vmatprep.subr.mxu0 %v2568
  %4133 = vmatpush1.msra.mxu0 %v2567
  %4134 = vmatprep.subr.mxu0 %v2566
  %4135 = vmatpush1.msra.mxu0 %v2565
  %4136 = vmatprep.subr.mxu0 %v2564
  %4137 = vmatpush1.msra.mxu0 %v2563
  %4138 = vmatprep.subr.mxu0 %v2562
  %4139 = vmatpush1.msra.mxu0 %v2561
  %4140 = vmatprep.subr.mxu0 %v2560
  %4141 = vmatpush1.msra.mxu0 %v2559
  %4142 = vmatprep.subr.mxu0 %v2558
  %4143 = vmatpush1.msra.mxu0 %v2557
  %4144 = vmatprep.subr.mxu0 %v2556
  %4145 = vmatpush1.msra.mxu0 %v2555
  %4146 = vmatprep.subr.mxu0 %v2554
  %4147 = vmatpush1.msra.mxu0 %v2553
  %4148 = vmatprep.subr.mxu0 %v2552
  %4149 = vmatpush1.msra.mxu0 %v2551
  %4150 = vmatprep.subr.mxu0 %v2550
  %4151 = vmatpush1.msra.mxu0 %v2549
  %4152 = vmatprep.subr.mxu0 %v2548
  %4153 = vmatpush1.msra.mxu0 %v2547
  %4154 = vmatprep.subr.mxu0 %v2546
  %4155 = vmatpush1.msra.mxu0 %v2545
  %4156 = vmatprep.subr.mxu0 %v2544
  %4157 = vmatpush1.msra.mxu0 %v2543
  %4158 = vmatprep.subr.mxu0 %v2542
  %4159 = vmatpush1.msra.mxu0 %v2541
  %4160 = vmatprep.subr.mxu0 %v2540
  %4161 = vmatpush1.msra.mxu0 %v2539
  %4162 = vmatprep.subr.mxu0 %v2538
  %4163 = vmatpush1.msra.mxu0 %v2537
  %4164 = vmatprep.subr.mxu0 %v2600
  %4165 = vmatpush2.msra.mxu0 %v2599
  %4166 = vmatprep.subr.mxu0 %v2598
  %4167 = vmatpush2.msra.mxu0 %v2597
  %4168 = vmatprep.subr.mxu0 %v2596
  %4169 = vmatpush2.msra.mxu0 %v2595
  %4170 = vmatprep.subr.mxu0 %v2594
  %4171 = vmatpush2.msra.mxu0 %v2593
  %4172 = vmatprep.subr.mxu0 %v2592
  %4173 = vmatpush2.msra.mxu0 %v2591
  %4174 = vmatprep.subr.mxu0 %v2590
  %4175 = vmatpush2.msra.mxu0 %v2589
  %4176 = vmatprep.subr.mxu0 %v2588
  %4177 = vmatpush2.msra.mxu0 %v2587
  %4178 = vmatprep.subr.mxu0 %v2586
  %4179 = vmatpush2.msra.mxu0 %v2585
  %4180 = vmatprep.subr.mxu0 %v2584
  %4181 = vmatpush2.msra.mxu0 %v2583
  %4182 = vmatprep.subr.mxu0 %v2582
  %4183 = vmatpush2.msra.mxu0 %v2581
  %4184 = vmatprep.subr.mxu0 %v2580
  %4185 = vmatpush2.msra.mxu0 %v2579
  %4186 = vmatprep.subr.mxu0 %v2578
  %4187 = vmatpush2.msra.mxu0 %v2577
  %4188 = vmatprep.subr.mxu0 %v2576
  %4189 = vmatpush2.msra.mxu0 %v2575
  %4190 = vmatprep.subr.mxu0 %v2574
  %4191 = vmatpush2.msra.mxu0 %v2573
  %4192 = vmatprep.subr.mxu0 %v2572
  %4193 = vmatpush2.msra.mxu0 %v2571
  %4194 = vmatprep.subr.mxu0 %v2570
  %4195 = vmatpush2.msra.mxu0 %v2569
  %4196 = vmatprep.mubr.f32.mxu0 %v3716
  %4197 = vmatmul.mubr.f32.gmra.mxu0 %v3715
  %v4198 = vpop.f32.mrf.mxu0
  %v4199 = vadd.f32 0.0, %v4198
  %v4200 = vpop.f32.mrf.mxu0
  %v4201 = vadd.f32 0.0, %v4200
  %4202 = vmatprep.mubr.f32.mxu0 %v3718
  %4203 = vmatmul.mubr.f32.gmra.mxu0 %v3717
  %v4204 = vpop.f32.mrf.mxu0
  %v4205 = vadd.f32 0.0, %v4204
  %v4206 = vpop.f32.mrf.mxu0
  %v4207 = vadd.f32 0.0, %v4206
  %4208 = vmatprep.mubr.f32.mxu0 %v3720
  %4209 = vmatmul.mubr.f32.gmra.mxu0 %v3719
  %v4210 = vpop.f32.mrf.mxu0
  %v4211 = vadd.f32 0.0, %v4210
  %v4212 = vpop.f32.mrf.mxu0
  %v4213 = vadd.f32 0.0, %v4212
  %4214 = vmatprep.mubr.f32.mxu0 %v3722
  %4215 = vmatmul.mubr.f32.gmra.mxu0 %v3721
  %v4216 = vpop.f32.mrf.mxu0
  %v4217 = vadd.f32 0.0, %v4216
  %v4218 = vpop.f32.mrf.mxu0
  %v4219 = vadd.f32 0.0, %v4218
  %4220 = vdwg.mxu0
  %v4222 = vsel %vm1254, %v4131, 0
  %4224 = vmatprep.subr.mxu0 0.0
  %4225 = vmatpush1.msra.mxu0 0.0
  %4226 = vmatprep.subr.mxu0 0.0
  %4227 = vmatpush1.msra.mxu0 0.0
  %4228 = vmatprep.subr.mxu0 0.0
  %4229 = vmatpush1.msra.mxu0 0.0
  %4230 = vmatprep.subr.mxu0 0.0
  %4231 = vmatpush1.msra.mxu0 0.0
  %4232 = vmatprep.subr.mxu0 0.0
  %4233 = vmatpush1.msra.mxu0 0.0
  %4234 = vmatprep.subr.mxu0 0.0
  %4235 = vmatpush1.msra.mxu0 0.0
  %4236 = vmatprep.subr.mxu0 0.0
  %4237 = vmatpush1.msra.mxu0 0.0
  %4238 = vmatprep.subr.mxu0 0.0
  %4239 = vmatpush1.msra.mxu0 0.0
  %4240 = vmatprep.subr.mxu0 0.0
  %4241 = vmatpush1.msra.mxu0 0.0
  %4242 = vmatprep.subr.mxu0 0.0
  %4243 = vmatpush1.msra.mxu0 0.0
  %4244 = vmatprep.subr.mxu0 0.0
  %4245 = vmatpush1.msra.mxu0 0.0
  %4246 = vmatprep.subr.mxu0 0.0
  %4247 = vmatpush1.msra.mxu0 0.0
  %4248 = vmatprep.subr.mxu0 %v4219
  %4249 = vmatpush1.msra.mxu0 %v4217
  %4250 = vmatprep.subr.mxu0 %v4213
  %4251 = vmatpush1.msra.mxu0 %v4211
  %4252 = vmatprep.subr.mxu0 %v4207
  %4253 = vmatpush1.msra.mxu0 %v4205
  %4254 = vmatprep.subr.mxu0 %v4201
  %4255 = vmatpush1.msra.mxu0 %v4199
  %4256 = vmatprep.subr.mxu0 0.0
  %4257 = vmatpush2.msra.mxu0 0.0
  %4258 = vmatprep.subr.mxu0 0.0
  %4259 = vmatpush2.msra.mxu0 0.0
  %4260 = vmatprep.subr.mxu0 0.0
  %4261 = vmatpush2.msra.mxu0 0.0
  %4262 = vmatprep.subr.mxu0 0.0
  %4263 = vmatpush2.msra.mxu0 0.0
  %4264 = vmatprep.subr.mxu0 0.0
  %4265 = vmatpush2.msra.mxu0 0.0
  %4266 = vmatprep.subr.mxu0 0.0
  %4267 = vmatpush2.msra.mxu0 0.0
  %4268 = vmatprep.subr.mxu0 0.0
  %4269 = vmatpush2.msra.mxu0 0.0
  %4270 = vmatprep.subr.mxu0 0.0
  %4271 = vmatpush2.msra.mxu0 0.0
  %4272 = vmatprep.subr.mxu0 0.0
  %4273 = vmatpush2.msra.mxu0 0.0
  %4274 = vmatprep.subr.mxu0 0.0
  %4275 = vmatpush2.msra.mxu0 0.0
  %4276 = vmatprep.subr.mxu0 0.0
  %4277 = vmatpush2.msra.mxu0 0.0
  %4278 = vmatprep.subr.mxu0 0.0
  %4279 = vmatpush2.msra.mxu0 0.0
  %4280 = vmatprep.subr.mxu0 0.0
  %4281 = vmatpush2.msra.mxu0 0.0
  %4282 = vmatprep.subr.mxu0 0.0
  %4283 = vmatpush2.msra.mxu0 0.0
  %4284 = vmatprep.subr.mxu0 0.0
  %4285 = vmatpush2.msra.mxu0 0.0
  %4286 = vmatprep.subr.mxu0 0.0
  %4287 = vmatpush2.msra.mxu0 0.0
  %4288 = vmatprep.mubr.f32.mxu0 0.0
  %4289 = vmatmul.mubr.f32.gmra.mxu0 %v4222
  %v4290 = vpop.f32.mrf.mxu0
  %v4291 = vadd.f32 0.0, %v4290
  %v4292 = vpop.f32.mrf.mxu0
  %v4293 = vadd.f32 0.0, %v4292
  %4294 = vdwg.mxu0
  %v4295 = vadd.f32 %v4128, %v4291
  %v4296 = vadd.f32 %v4129, %v4293
  %s4297 = scalar_lea.vmem %s7, 4
  %v4298 = vld [vmem:[%s4297] sm:$0x1]
  %4299 = vmatprep.subr.mxu0 %v2727
  %4300 = vmatpush1.msra.mxu0 %v2726
  %4301 = vmatprep.subr.mxu0 %v2725
  %4302 = vmatpush1.msra.mxu0 %v2724
  %4303 = vmatprep.subr.mxu0 %v2723
  %4304 = vmatpush1.msra.mxu0 %v2722
  %4305 = vmatprep.subr.mxu0 %v2721
  %4306 = vmatpush1.msra.mxu0 %v2720
  %4307 = vmatprep.subr.mxu0 %v2719
  %4308 = vmatpush1.msra.mxu0 %v2718
  %4309 = vmatprep.subr.mxu0 %v2717
  %4310 = vmatpush1.msra.mxu0 %v2716
  %4311 = vmatprep.subr.mxu0 %v2715
  %4312 = vmatpush1.msra.mxu0 %v2714
  %4313 = vmatprep.subr.mxu0 %v2713
  %4314 = vmatpush1.msra.mxu0 %v2712
  %4315 = vmatprep.subr.mxu0 %v2711
  %4316 = vmatpush1.msra.mxu0 %v2710
  %4317 = vmatprep.subr.mxu0 %v2709
  %4318 = vmatpush1.msra.mxu0 %v2708
  %4319 = vmatprep.subr.mxu0 %v2707
  %4320 = vmatpush1.msra.mxu0 %v2706
  %4321 = vmatprep.subr.mxu0 %v2705
  %4322 = vmatpush1.msra.mxu0 %v2704
  %4323 = vmatprep.subr.mxu0 %v2703
  %4324 = vmatpush1.msra.mxu0 %v2702
  %4325 = vmatprep.subr.mxu0 %v2701
  %4326 = vmatpush1.msra.mxu0 %v2700
  %4327 = vmatprep.subr.mxu0 %v2699
  %4328 = vmatpush1.msra.mxu0 %v2698
  %4329 = vmatprep.subr.mxu0 %v2697
  %4330 = vmatpush1.msra.mxu0 %v2696
  %4331 = vmatprep.subr.mxu0 %v2759
  %4332 = vmatpush2.msra.mxu0 %v2758
  %4333 = vmatprep.subr.mxu0 %v2757
  %4334 = vmatpush2.msra.mxu0 %v2756
  %4335 = vmatprep.subr.mxu0 %v2755
  %4336 = vmatpush2.msra.mxu0 %v2754
  %4337 = vmatprep.subr.mxu0 %v2753
  %4338 = vmatpush2.msra.mxu0 %v2752
  %4339 = vmatprep.subr.mxu0 %v2751
  %4340 = vmatpush2.msra.mxu0 %v2750
  %4341 = vmatprep.subr.mxu0 %v2749
  %4342 = vmatpush2.msra.mxu0 %v2748
  %4343 = vmatprep.subr.mxu0 %v2747
  %4344 = vmatpush2.msra.mxu0 %v2746
  %4345 = vmatprep.subr.mxu0 %v2745
  %4346 = vmatpush2.msra.mxu0 %v2744
  %4347 = vmatprep.subr.mxu0 %v2743
  %4348 = vmatpush2.msra.mxu0 %v2742
  %4349 = vmatprep.subr.mxu0 %v2741
  %4350 = vmatpush2.msra.mxu0 %v2740
  %4351 = vmatprep.subr.mxu0 %v2739
  %4352 = vmatpush2.msra.mxu0 %v2738
  %4353 = vmatprep.subr.mxu0 %v2737
  %4354 = vmatpush2.msra.mxu0 %v2736
  %4355 = vmatprep.subr.mxu0 %v2735
  %4356 = vmatpush2.msra.mxu0 %v2734
  %4357 = vmatprep.subr.mxu0 %v2733
  %4358 = vmatpush2.msra.mxu0 %v2732
  %4359 = vmatprep.subr.mxu0 %v2731
  %4360 = vmatpush2.msra.mxu0 %v2730
  %4361 = vmatprep.subr.mxu0 %v2729
  %4362 = vmatpush2.msra.mxu0 %v2728
  %4363 = vmatprep.mubr.f32.mxu0 %v3716
  %4364 = vmatmul.mubr.f32.gmra.mxu0 %v3715
  %v4365 = vpop.f32.mrf.mxu0
  %v4366 = vadd.f32 0.0, %v4365
  %v4367 = vpop.f32.mrf.mxu0
  %v4368 = vadd.f32 0.0, %v4367
  %4369 = vmatprep.mubr.f32.mxu0 %v3718
  %4370 = vmatmul.mubr.f32.gmra.mxu0 %v3717
  %v4371 = vpop.f32.mrf.mxu0
  %v4372 = vadd.f32 0.0, %v4371
  %v4373 = vpop.f32.mrf.mxu0
  %v4374 = vadd.f32 0.0, %v4373
  %4375 = vmatprep.mubr.f32.mxu0 %v3720
  %4376 = vmatmul.mubr.f32.gmra.mxu0 %v3719
  %v4377 = vpop.f32.mrf.mxu0
  %v4378 = vadd.f32 0.0, %v4377
  %v4379 = vpop.f32.mrf.mxu0
  %v4380 = vadd.f32 0.0, %v4379
  %4381 = vmatprep.mubr.f32.mxu0 %v3722
  %4382 = vmatmul.mubr.f32.gmra.mxu0 %v3721
  %v4383 = vpop.f32.mrf.mxu0
  %v4384 = vadd.f32 0.0, %v4383
  %v4385 = vpop.f32.mrf.mxu0
  %v4386 = vadd.f32 0.0, %v4385
  %4387 = vdwg.mxu0
  %v4389 = vsel %vm1254, %v4298, 0
  %4391 = vmatprep.subr.mxu0 0.0
  %4392 = vmatpush1.msra.mxu0 0.0
  %4393 = vmatprep.subr.mxu0 0.0
  %4394 = vmatpush1.msra.mxu0 0.0
  %4395 = vmatprep.subr.mxu0 0.0
  %4396 = vmatpush1.msra.mxu0 0.0
  %4397 = vmatprep.subr.mxu0 0.0
  %4398 = vmatpush1.msra.mxu0 0.0
  %4399 = vmatprep.subr.mxu0 0.0
  %4400 = vmatpush1.msra.mxu0 0.0
  %4401 = vmatprep.subr.mxu0 0.0
  %4402 = vmatpush1.msra.mxu0 0.0
  %4403 = vmatprep.subr.mxu0 0.0
  %4404 = vmatpush1.msra.mxu0 0.0
  %4405 = vmatprep.subr.mxu0 0.0
  %4406 = vmatpush1.msra.mxu0 0.0
  %4407 = vmatprep.subr.mxu0 0.0
  %4408 = vmatpush1.msra.mxu0 0.0
  %4409 = vmatprep.subr.mxu0 0.0
  %4410 = vmatpush1.msra.mxu0 0.0
  %4411 = vmatprep.subr.mxu0 0.0
  %4412 = vmatpush1.msra.mxu0 0.0
  %4413 = vmatprep.subr.mxu0 0.0
  %4414 = vmatpush1.msra.mxu0 0.0
  %4415 = vmatprep.subr.mxu0 %v4386
  %4416 = vmatpush1.msra.mxu0 %v4384
  %4417 = vmatprep.subr.mxu0 %v4380
  %4418 = vmatpush1.msra.mxu0 %v4378
  %4419 = vmatprep.subr.mxu0 %v4374
  %4420 = vmatpush1.msra.mxu0 %v4372
  %4421 = vmatprep.subr.mxu0 %v4368
  %4422 = vmatpush1.msra.mxu0 %v4366
  %4423 = vmatprep.subr.mxu0 0.0
  %4424 = vmatpush2.msra.mxu0 0.0
  %4425 = vmatprep.subr.mxu0 0.0
  %4426 = vmatpush2.msra.mxu0 0.0
  %4427 = vmatprep.subr.mxu0 0.0
  %4428 = vmatpush2.msra.mxu0 0.0
  %4429 = vmatprep.subr.mxu0 0.0
  %4430 = vmatpush2.msra.mxu0 0.0
  %4431 = vmatprep.subr.mxu0 0.0
  %4432 = vmatpush2.msra.mxu0 0.0
  %4433 = vmatprep.subr.mxu0 0.0
  %4434 = vmatpush2.msra.mxu0 0.0
  %4435 = vmatprep.subr.mxu0 0.0
  %4436 = vmatpush2.msra.mxu0 0.0
  %4437 = vmatprep.subr.mxu0 0.0
  %4438 = vmatpush2.msra.mxu0 0.0
  %4439 = vmatprep.subr.mxu0 0.0
  %4440 = vmatpush2.msra.mxu0 0.0
  %4441 = vmatprep.subr.mxu0 0.0
  %4442 = vmatpush2.msra.mxu0 0.0
  %4443 = vmatprep.subr.mxu0 0.0
  %4444 = vmatpush2.msra.mxu0 0.0
  %4445 = vmatprep.subr.mxu0 0.0
  %4446 = vmatpush2.msra.mxu0 0.0
  %4447 = vmatprep.subr.mxu0 0.0
  %4448 = vmatpush2.msra.mxu0 0.0
  %4449 = vmatprep.subr.mxu0 0.0
  %4450 = vmatpush2.msra.mxu0 0.0
  %4451 = vmatprep.subr.mxu0 0.0
  %4452 = vmatpush2.msra.mxu0 0.0
  %4453 = vmatprep.subr.mxu0 0.0
  %4454 = vmatpush2.msra.mxu0 0.0
  %4455 = vmatprep.mubr.f32.mxu0 0.0
  %4456 = vmatmul.mubr.f32.gmra.mxu0 %v4389
  %v4457 = vpop.f32.mrf.mxu0
  %v4458 = vadd.f32 0.0, %v4457
  %v4459 = vpop.f32.mrf.mxu0
  %v4460 = vadd.f32 0.0, %v4459
  %4461 = vdwg.mxu0
  %v4462 = vadd.f32 %v4295, %v4458
  %v4463 = vadd.f32 %v4296, %v4460
  %v4464 = vld [vmem:[#allocation2] sm:$0x1]
  %4466 = vset.pattern.permute.xlu0 0
  %4467 = vperm.xlu0 %4466, %v4464
  %v4468 = vpop.permute.xlu0 %4467
  %v4470 = vlaneseq
  %v4471 = vshrl.u32 %v4470, 7
  %v4472 = vsub.s32 0, %v4471
  %v4473 = vrot.slane %v4468, %v4472
  %v4474 = vadd.f32 %v4462, %v4473
  %v4475 = vadd.f32 %v4463, %v4473
  %v4478 = vcombine.low %v4474, %v4475
  %v4480 = vunpack.c.l.s4 1966171168
  %v4481 = vunpack.c.0.s8 %v4480
  %v4482 = vlaneseq
  %v4483 = vshrl.u32 %v4482, 7
  %v4484 = vsub.s32 %v4481, %v4483
  %v4485 = vrot.slane %v4478, %v4484
  %v4487 = vunpack.c.l.s4 1966171168
  %v4488 = vunpack.c.0.s8 %v4487
  %v4489 = vlaneseq
  %v4490 = vshrl.u32 %v4489, 7
  %v4491 = vsub.s32 %v4488, %v4490
  %v4492 = vrot.slane %v4485, %v4491
  %v4494 = vlaneseq
  %vm4495 = vcmp.ge.s32.totalorder %v4494, 0
  %vm4496 = vcmp.lt.s32.totalorder %v4494, 256
  %vm4497 = vmand %vm4495, %vm4496
  %4498 = vst.msk [vmem:[%s10] sm:$0x3] %vm4497, %v4492
  // Predicated region
  $region38: #{tcnn_autoencoder_forward.1} parent=0 // pred_check
    _
  $region39: #{tcnn_autoencoder_forward.1} parent=0 // pred_check_branch
    %4500 = sbr.rel (0) target = $region41
  $region40: #{tcnn_autoencoder_forward.1} parent=0 // pred_region
    _
  $region41: #{tcnn_autoencoder_forward.1} parent=0 // pred_fallthru
    _
  // Predicated region
  $region42: #{tcnn_autoencoder_forward.1} parent=0 // pred_check
    _
  $region43: #{tcnn_autoencoder_forward.1} parent=0 // pred_check_branch
    %4502 = sbr.rel (0) target = $region45
  $region44: #{tcnn_autoencoder_forward.1} parent=0 // pred_region
    _
  $region45: #{tcnn_autoencoder_forward.1} parent=0 // pred_fallthru
    _
  // Predicated region
  $region46: #{tcnn_autoencoder_forward.1} parent=0 // pred_check
    _
  $region47: #{tcnn_autoencoder_forward.1} parent=0 // pred_check_branch
    %4504 = sbr.rel (0) target = $region49
  $region48: #{tcnn_autoencoder_forward.1} parent=0 // pred_region
    _
  $region49: #{tcnn_autoencoder_forward.1} parent=0 // pred_fallthru
    _
  // Predicated region
  $region50: #{tcnn_autoencoder_forward.1} parent=0 // pred_check
    _
  $region51: #{tcnn_autoencoder_forward.1} parent=0 // pred_check_branch
    %4506 = sbr.rel (0) target = $region53
  $region52: #{tcnn_autoencoder_forward.1} parent=0 // pred_region
    _
  $region53: #{tcnn_autoencoder_forward.1} parent=0 // pred_fallthru
    _

</llo_original>
